<compile_context>
chip_gen: v7x
topology: tpu7x:2x2x1
jax: 0.10.0
libtpu: 0.0.40
codegen_flags: <defaults>
</compile_context>

<pallas_src>
import functools

import jax
import jax.numpy as jnp
import numpy as np
from jax import lax
from jax.experimental import pallas as pl
from jax.experimental.pallas import tpu as pltpu


# ----------------------------------------------------------------------------
# Fused Pallas kernel: biLSTM layer 1 -> biLSTM layer 2 -> MLP head
# ----------------------------------------------------------------------------
def _fused_prompt_lstm_kernel(
    # inputs ------------------------------------------------------------------
    x_ref,        # (S*B, H)  bf16   rows ordered s*B + b (TIME-major)
    wih1_ref,     # (H, 8H)   bf16   layer-1 input proj, cols [fwd i,f,g,o | bwd i,f,g,o]
    whh1_ref,     # (H, 8H)   bf16   layer-1 recurrent proj, cols [fwd 4H | bwd 4H]
    b1_ref,       # (1, 8H)   f32    layer-1 (b_ih + b_hh), [fwd | bwd]
    wih2hf_ref,   # (H, 8H)   bf16   layer-2 input proj rows acting on h_fwd of layer 1
    wih2hb_ref,   # (H, 8H)   bf16   layer-2 input proj rows acting on h_bwd of layer 1
    whh2_ref,     # (H, 8H)   bf16   layer-2 recurrent proj, cols [fwd 4H | bwd 4H]
    b2_ref,       # (1, 8H)   f32
    mw1hf_ref,    # (H, H)    bf16   MLP Linear(2H->H) rows acting on h_fwd
    mw1hb_ref,    # (H, H)    bf16   MLP Linear(2H->H) rows acting on h_bwd
    mb1_ref,      # (1, H)    f32
    mw2_ref,      # (H, H)    bf16   MLP Linear(H->H)
    mb2_ref,      # (1, H)    f32
    # outputs -----------------------------------------------------------------
    out_ref,      # (S*B, H)  f32    time-major
    # scratch -----------------------------------------------------------------
    gx_ref,       # (S*B, 8H) f32    precomputed input-gate pre-activations (reused per layer)
    yf_ref,       # (S*B, H)  f32    per-position forward hidden states (reused per layer)
    yb_ref,       # (S*B, H)  f32    per-position backward hidden states (reused per layer)
    *, S, B, H,
):
    f32 = jnp.float32
    bf16 = jnp.bfloat16
    G = 4 * H   # gate width per direction
    B2 = 2 * B  # fused fwd+bwd state rows

    # Loop-invariant masks, hoisted once (JAX does not CSE broadcast_in_dim).
    row = lax.broadcasted_iota(jnp.int32, (B2, G), 0)
    is_fwd_row = row < B                                   # rows 0:B fwd, B:2B bwd
    col = lax.broadcasted_iota(jnp.int32, (B2, G), 1)
    is_g_col = jnp.logical_and(col >= 2 * H, col < 3 * H)  # the tanh ("g") gate columns
    pre_scale = jnp.where(is_g_col, 1.0, 0.5).astype(f32)  # sigmoid(x)=0.5*tanh(0.5x)+0.5

    def bidirectional_recurrence(whh_ref):
        w = whh_ref[...]                       # (H, 8H) bf16, hoisted out of the loop
        h = jnp.zeros((B2, H), f32)            # rows 0:B = fwd, rows B:2B = bwd
        c = jnp.zeros((B2, H), f32)
        # Fully unrolled static time loop (S is small). fwd consumes time t while
        # bwd consumes time S-1-t; both live in the same (2B, .) state matrix.
        for t in range(S):
            tr = S - 1 - t
            # Contiguous, time-major gathers of the precomputed x-gate pre-activations
            # (off the recurrent dependency chain).
            gxf = gx_ref[t * B:(t + 1) * B, 0:G]         # (B, 4H) fwd gates at time t
            gxb = gx_ref[tr * B:(tr + 1) * B, G:2 * G]   # (B, 4H) bwd gates at time S-1-t
            gx = jnp.concatenate([gxf, gxb], axis=0)     # (2B, 4H)

            # ONE MXU push for both directions, then pick each direction's block.
            g_all = jnp.dot(h.astype(bf16), w, preferred_element_type=f32)   # (2B, 8H)
            g_rec = jnp.where(is_fwd_row, g_all[:, 0:G], g_all[:, G:2 * G])  # (2B, 4H)

            gates = gx + g_rec                            # PyTorch gate order: i, f, g, o
            # Single full-vreg tanh for all gates: sigmoid via tanh for i/f/o,
            # plain tanh for g, selected by a lane mask.
            th = jnp.tanh(gates * pre_scale)
            act = jnp.where(is_g_col, th, 0.5 * th + 0.5)

            i_g = act[:, 0:H]
            f_g = act[:, H:2 * H]
            g_g = act[:, 2 * H:3 * H]
            o_g = act[:, 3 * H:4 * H]
            c = f_g * c + i_g * g_g
            h = o_g * jnp.tanh(c)

            # Contiguous (B, H) stores of per-position hidden states (off the chain).
            yf_ref[t * B:(t + 1) * B, :] = h[0:B, :]
            yb_ref[tr * B:(tr + 1) * B, :] = h[B:B2, :]

    # ---- layer 1: one big input-projection matmul, then the recurrence -------
    gx_ref[...] = (
        jnp.dot(x_ref[...], wih1_ref[...], preferred_element_type=f32) + b1_ref[...]
    )
    bidirectional_recurrence(whh1_ref)

    # ---- layer 2: input projection of [h_fwd | h_bwd] (split weights), then recurrence
    gx_ref[...] = (
        jnp.dot(yf_ref[...].astype(bf16), wih2hf_ref[...], preferred_element_type=f32)
        + jnp.dot(yb_ref[...].astype(bf16), wih2hb_ref[...], preferred_element_type=f32)
        + b2_ref[...]
    )
    bidirectional_recurrence(whh2_ref)

    # ---- MLP head: Linear(2H -> H) -> ReLU -> Linear(H -> H) -----------------
    hid = (
        jnp.dot(yf_ref[...].astype(bf16), mw1hf_ref[...], preferred_element_type=f32)
        + jnp.dot(yb_ref[...].astype(bf16), mw1hb_ref[...], preferred_element_type=f32)
        + mb1_ref[...]
    )
    hid = jnp.maximum(hid, 0.0)
    out_ref[...] = (
        jnp.dot(hid.astype(bf16), mw2_ref[...], preferred_element_type=f32) + mb2_ref[...]
    )


# ----------------------------------------------------------------------------
# Wrapper
# ----------------------------------------------------------------------------
def prompt_lstm_encoder(prompt_embeddings, kernel_params, hidden):
    """Equivalent of PromptLstmEncoder.forward: (B, S, H) -> (B, S, H).

    `kernel_params` is the flat list produced by `prepare_kernel_params`.
    The wrapper only does a tiny transpose (to time-major) + free reshapes and a
    dtype cast; the whole network runs in ONE pallas_call.
    """
    B, S, H = prompt_embeddings.shape
    assert H == hidden
    # Time-major rows (s*B + b) so each recurrent step touches contiguous row blocks.
    x2d = (
        jnp.transpose(prompt_embeddings, (1, 0, 2))
        .reshape(S * B, H)
        .astype(jnp.bfloat16)
    )

    vmem = pl.BlockSpec(memory_space=pltpu.MemorySpace.VMEM)
    kernel = functools.partial(_fused_prompt_lstm_kernel, S=S, B=B, H=H)
    out2d = pl.pallas_call(
        kernel,
        out_shape=jax.ShapeDtypeStruct((S * B, H), jnp.float32),
        in_specs=[vmem] * (1 + len(kernel_params)),
        out_specs=vmem,
        scratch_shapes=[
            pltpu.VMEM((S * B, 8 * H), jnp.float32),  # gate pre-activations (reused per layer)
            pltpu.VMEM((S * B, H), jnp.float32),      # forward hidden states (reused per layer)
            pltpu.VMEM((S * B, H), jnp.float32),      # backward hidden states (reused per layer)
        ],
    )(x2d, *kernel_params)
    return jnp.transpose(out2d.reshape(S, B, H), (1, 0, 2))  # back to batch-first


# ----------------------------------------------------------------------------
# Parameters: torch-layout init + conversion to kernel layout
# ----------------------------------------------------------------------------
def init_params(key, hidden):
    """Matches torch.nn.LSTM(H, H, num_layers=2, bidirectional=True) + MLP shapes/init."""
    H = hidden
    keys = iter(jax.random.split(key, 32))
    k_lstm = 1.0 / np.sqrt(H)

    def u(shape, bound):
        return jax.random.uniform(next(keys), shape, jnp.float32, -bound, bound)

    params = {"lstm": []}
    for layer_idx in range(2):
        in_size = H if layer_idx == 0 else 2 * H
        layer = {}
        for direction in ("fwd", "bwd"):
            w_ih = u((4 * H, in_size), k_lstm)   # torch weight_ih_l{k}[_reverse]
            w_hh = u((4 * H, H), k_lstm)         # torch weight_hh_l{k}[_reverse]
            b_ih = u((4 * H,), k_lstm)
            b_hh = u((4 * H,), k_lstm)
            layer[direction] = {"w_ih": w_ih, "w_hh": w_hh, "b": b_ih + b_hh}
        params["lstm"].append(layer)

    k1 = 1.0 / np.sqrt(2 * H)
    k2 = 1.0 / np.sqrt(H)
    params["mlp"] = {
        "w1": u((H, 2 * H), k1), "b1": u((H,), k1),   # torch Linear(2H, H)
        "w2": u((H, H), k2), "b2": u((H,), k2),        # torch Linear(H, H)
    }
    return params


def prepare_kernel_params(params, hidden):
    """Pre-transpose / concatenate / split / bf16-cast weights into kernel layout (done once)."""
    H = hidden
    bf16 = jnp.bfloat16
    flat = []
    for layer_idx, layer in enumerate(params["lstm"]):
        wih_cat = jnp.concatenate(
            [layer["fwd"]["w_ih"].T, layer["bwd"]["w_ih"].T], axis=1)              # (In, 8H)
        whh_cat = jnp.concatenate(
            [layer["fwd"]["w_hh"].T, layer["bwd"]["w_hh"].T], axis=1).astype(bf16)  # (H, 8H)
        bias_cat = jnp.concatenate(
            [layer["fwd"]["b"], layer["bwd"]["b"]]).reshape(1, 8 * H)               # (1, 8H) f32
        if layer_idx == 0:
            flat += [wih_cat.astype(bf16), whh_cat, bias_cat]
        else:
            # Split the (2H, 8H) projection by which half of the layer-1 output
            # it consumes (rows 0:H -> h_fwd, rows H:2H -> h_bwd).
            flat += [wih_cat[0:H, :].astype(bf16), wih_cat[H:2 * H, :].astype(bf16),
                     whh_cat, bias_cat]
    mlp = params["mlp"]
    w1t = mlp["w1"].T                                                               # (2H, H)
    flat += [
        w1t[0:H, :].astype(bf16), w1t[H:2 * H, :].astype(bf16),
        mlp["b1"].reshape(1, H),
        mlp["w2"].T.astype(bf16), mlp["b2"].reshape(1, H),
    ]
    return flat


# ----------------------------------------------------------------------------
# Pure-JAX reference (torch-layout params; mirrors the kernel's bf16 MXU operands).
# Note: vs a pure-fp32 PyTorch LSTM there is slight drift because the recurrent
# hidden state is cast to bf16 before h @ W_hh every step (inference-acceptable).
# ----------------------------------------------------------------------------
def reference_forward(x, params, hidden):
    H = hidden
    B, S, _ = x.shape
    bf16 = jnp.bfloat16

    def dot_bf16(a, b):
        return jnp.dot(a.astype(bf16), b.astype(bf16), preferred_element_type=jnp.float32)

    def lstm_dir(x_seq, w_ih, w_hh, b):
        w_ih_t, w_hh_t = w_ih.T, w_hh.T

        def step(carry, x_t):
            h, c = carry
            gates = dot_bf16(x_t, w_ih_t) + dot_bf16(h, w_hh_t) + b
            i = jax.nn.sigmoid(gates[:, 0:H])
            f = jax.nn.sigmoid(gates[:, H:2 * H])
            g = jnp.tanh(gates[:, 2 * H:3 * H])
            o = jax.nn.sigmoid(gates[:, 3 * H:4 * H])
            c = f * c + i * g
            h = o * jnp.tanh(c)
            return (h, c), h

        z = jnp.zeros((B, H), jnp.float32)
        _, hs = lax.scan(step, (z, z), x_seq)
        return hs  # (S, B, H)

    inp = jnp.transpose(x.astype(jnp.float32), (1, 0, 2))  # (S, B, H)
    for layer in params["lstm"]:
        fwd = lstm_dir(inp, layer["fwd"]["w_ih"], layer["fwd"]["w_hh"], layer["fwd"]["b"])
        bwd = jnp.flip(
            lstm_dir(jnp.flip(inp, 0), layer["bwd"]["w_ih"], layer["bwd"]["w_hh"],
                     layer["bwd"]["b"]), 0)
        inp = jnp.concatenate([fwd, bwd], axis=-1)  # (S, B, 2H)

    mlp = params["mlp"]
    hid = jnp.maximum(dot_bf16(inp, mlp["w1"].T) + mlp["b1"], 0.0)
    out = dot_bf16(hid, mlp["w2"].T) + mlp["b2"]
    return jnp.transpose(out, (1, 0, 2))  # (B, S, H)


# ----------------------------------------------------------------------------
if __name__ == "__main__":
    B, S, H = 2, 8, 32  # batch, prompt length, config.hidden_size
    root = jax.random.PRNGKey(0)
    k_x, k_p = jax.random.split(root)

    x = jax.random.normal(k_x, (B, S, H), dtype=jnp.float32)
    params = init_params(k_p, H)
    kernel_params = prepare_kernel_params(params, H)

    out = jax.block_until_ready(prompt_lstm_encoder(x, kernel_params, H))
    ref = jax.block_until_ready(reference_forward(x, params, H))

    assert out.shape == (B, S, H), out.shape
    assert np.all(np.isfinite(np.asarray(out)))
    np.testing.assert_allclose(np.asarray(out), np.asarray(ref), rtol=2e-3, atol=2e-3)

    print("KERNEL_OK")
</pallas_src>

<mosaic_0001>
module attributes {stable_mosaic.version = 11 : i64} {
  func.func @_fused_prompt_lstm_kernel(%arg0: memref<16x32xbf16, #tpu.memory_space<vmem>>, %arg1: memref<32x256xbf16, #tpu.memory_space<vmem>>, %arg2: memref<32x256xbf16, #tpu.memory_space<vmem>>, %arg3: memref<1x256xf32, #tpu.memory_space<vmem>>, %arg4: memref<32x256xbf16, #tpu.memory_space<vmem>>, %arg5: memref<32x256xbf16, #tpu.memory_space<vmem>>, %arg6: memref<32x256xbf16, #tpu.memory_space<vmem>>, %arg7: memref<1x256xf32, #tpu.memory_space<vmem>>, %arg8: memref<32x32xbf16, #tpu.memory_space<vmem>>, %arg9: memref<32x32xbf16, #tpu.memory_space<vmem>>, %arg10: memref<1x32xf32, #tpu.memory_space<vmem>>, %arg11: memref<32x32xbf16, #tpu.memory_space<vmem>>, %arg12: memref<1x32xf32, #tpu.memory_space<vmem>>, %arg13: memref<16x32xf32, #tpu.memory_space<vmem>>, %arg14: memref<16x256xf32, #tpu.memory_space<vmem>>, %arg15: memref<16x32xf32, #tpu.memory_space<vmem>>, %arg16: memref<16x32xf32, #tpu.memory_space<vmem>>) attributes {dimension_semantics = [], scalar_prefetch = 0 : i64, scratch_operands = 3 : i64, tpu.core_type = #tpu.core_type<tc>} {
    %0 = tpu.iota {dimensions = array<i32: 0>} : vector<4x128xi32>
    %c2_i32 = arith.constant 2 : i32
    %1 = vector.broadcast %c2_i32 : i32 to vector<4x128xi32>
    %2 = arith.cmpi slt, %0, %1 : vector<4x128xi32>
    %3 = tpu.iota {dimensions = array<i32: 1>} : vector<4x128xi32>
    %c64_i32 = arith.constant 64 : i32
    %4 = vector.broadcast %c64_i32 : i32 to vector<4x128xi32>
    %5 = arith.cmpi sge, %3, %4 : vector<4x128xi32>
    %c96_i32 = arith.constant 96 : i32
    %6 = vector.broadcast %c96_i32 : i32 to vector<4x128xi32>
    %7 = arith.cmpi slt, %3, %6 : vector<4x128xi32>
    %8 = arith.andi %5, %7 : vector<4x128xi1>
    %cst = arith.constant 1.000000e+00 : f32
    %cst_0 = arith.constant 5.000000e-01 : f32
    %9 = vector.broadcast %cst : f32 to vector<4x128xf32>
    %10 = vector.broadcast %cst_0 : f32 to vector<4x128xf32>
    %11 = arith.select %8, %9, %10 : vector<4x128xi1>, vector<4x128xf32>
    %c0 = arith.constant 0 : index
    %c0_1 = arith.constant 0 : index
    %12 = vector.load %arg0[%c0, %c0_1] : memref<16x32xbf16, #tpu.memory_space<vmem>>, vector<16x32xbf16>
    %c0_2 = arith.constant 0 : index
    %c0_3 = arith.constant 0 : index
    %13 = vector.load %arg1[%c0_2, %c0_3] : memref<32x256xbf16, #tpu.memory_space<vmem>>, vector<32x256xbf16>
    %cst_4 = arith.constant dense<0.000000e+00> : vector<16x256xf32>
    %14 = tpu.matmul %12, %13, %cst_4 {dimension_numbers = #tpu.dot_dimension_numbers<[1], [0], [0], [1], [0, 0, 1, 1], [], []>} : vector<16x32xbf16>, vector<32x256xbf16>, vector<16x256xf32> -> vector<16x256xf32>
    %c0_5 = arith.constant 0 : index
    %c0_6 = arith.constant 0 : index
    %15 = vector.load %arg3[%c0_5, %c0_6] : memref<1x256xf32, #tpu.memory_space<vmem>>, vector<1x256xf32>
    %16 = vector.broadcast %15 : vector<1x256xf32> to vector<16x256xf32>
    %17 = arith.addf %14, %16 : vector<16x256xf32>
    %c0_7 = arith.constant 0 : index
    %c0_8 = arith.constant 0 : index
    %18 = vector.load %arg14[%c0_7, %c0_8] : memref<16x256xf32, #tpu.memory_space<vmem>>, vector<16x256xf32>
    tpu.vector_store %arg14[%c0_7, %c0_8], %17 {strides = array<i32>} : memref<16x256xf32, #tpu.memory_space<vmem>>, vector<16x256xf32>,
    %c0_9 = arith.constant 0 : index
    %c0_10 = arith.constant 0 : index
    %19 = vector.load %arg2[%c0_9, %c0_10] : memref<32x256xbf16, #tpu.memory_space<vmem>>, vector<32x256xbf16>
    %cst_11 = arith.constant 0.000000e+00 : f32
    %20 = vector.broadcast %cst_11 : f32 to vector<4x32xf32>
    %cst_12 = arith.constant 0.000000e+00 : f32
    %21 = vector.broadcast %cst_12 : f32 to vector<4x32xf32>
    %c0_13 = arith.constant 0 : index
    %c0_14 = arith.constant 0 : index
    %22 = vector.load %arg14[%c0_13, %c0_14] : memref<16x256xf32, #tpu.memory_space<vmem>>, vector<2x128xf32>
    %c14 = arith.constant 14 : index
    %c128 = arith.constant 128 : index
    %23 = vector.load %arg14[%c14, %c128] : memref<16x256xf32, #tpu.memory_space<vmem>>, vector<2x128xf32>
    %24 = tpu.concatenate %22, %23 in 0 : vector<2x128xf32>, vector<2x128xf32> -> vector<4x128xf32>
    %25 = arith.truncf %20 : vector<4x32xf32> to vector<4x32xbf16>
    %cst_15 = arith.constant dense<0.000000e+00> : vector<4x256xf32>
    %26 = tpu.matmul %25, %19, %cst_15 {dimension_numbers = #tpu.dot_dimension_numbers<[1], [0], [0], [1], [0, 0, 1, 1], [], []>} : vector<4x32xbf16>, vector<32x256xbf16>, vector<4x256xf32> -> vector<4x256xf32>
    %27 = vector.extract_strided_slice %26 {offsets = [0, 0], sizes = [4, 128], strides = [1, 1]} : vector<4x256xf32> to vector<4x128xf32>
    %28 = vector.extract_strided_slice %26 {offsets = [0, 128], sizes = [4, 128], strides = [1, 1]} : vector<4x256xf32> to vector<4x128xf32>
    %29 = arith.select %2, %27, %28 : vector<4x128xi1>, vector<4x128xf32>
    %30 = arith.addf %24, %29 : vector<4x128xf32>
    %31 = arith.mulf %30, %11 : vector<4x128xf32>
    %32 = math.tanh %31 : vector<4x128xf32>
    %cst_16 = arith.constant 5.000000e-01 : f32
    %33 = vector.broadcast %cst_16 : f32 to vector<4x128xf32>
    %34 = arith.mulf %33, %32 : vector<4x128xf32>
    %cst_17 = arith.constant 5.000000e-01 : f32
    %35 = vector.broadcast %cst_17 : f32 to vector<4x128xf32>
    %36 = arith.addf %34, %35 : vector<4x128xf32>
    %37 = arith.select %8, %32, %36 : vector<4x128xi1>, vector<4x128xf32>
    %38 = vector.extract_strided_slice %37 {offsets = [0, 0], sizes = [4, 32], strides = [1, 1]} : vector<4x128xf32> to vector<4x32xf32>
    %39 = vector.extract_strided_slice %37 {offsets = [0, 32], sizes = [4, 32], strides = [1, 1]} : vector<4x128xf32> to vector<4x32xf32>
    %40 = vector.extract_strided_slice %37 {offsets = [0, 64], sizes = [4, 32], strides = [1, 1]} : vector<4x128xf32> to vector<4x32xf32>
    %41 = vector.extract_strided_slice %37 {offsets = [0, 96], sizes = [4, 32], strides = [1, 1]} : vector<4x128xf32> to vector<4x32xf32>
    %42 = arith.mulf %39, %21 : vector<4x32xf32>
    %43 = arith.mulf %38, %40 : vector<4x32xf32>
    %44 = arith.addf %42, %43 : vector<4x32xf32>
    %45 = math.tanh %44 : vector<4x32xf32>
    %46 = arith.mulf %41, %45 : vector<4x32xf32>
    %47 = vector.extract_strided_slice %46 {offsets = [0, 0], sizes = [2, 32], strides = [1, 1]} : vector<4x32xf32> to vector<2x32xf32>
    %c0_18 = arith.constant 0 : index
    %c0_19 = arith.constant 0 : index
    %48 = vector.load %arg15[%c0_18, %c0_19] : memref<16x32xf32, #tpu.memory_space<vmem>>, vector<2x32xf32>
    tpu.vector_store %arg15[%c0_18, %c0_19], %47 {strides = array<i32>} : memref<16x32xf32, #tpu.memory_space<vmem>>, vector<2x32xf32>,
    %49 = vector.extract_strided_slice %46 {offsets = [2, 0], sizes = [2, 32], strides = [1, 1]} : vector<4x32xf32> to vector<2x32xf32>
    %c14_20 = arith.constant 14 : index
    %c0_21 = arith.constant 0 : index
    %50 = vector.load %arg16[%c14_20, %c0_21] : memref<16x32xf32, #tpu.memory_space<vmem>>, vector<2x32xf32>
    tpu.vector_store %arg16[%c14_20, %c0_21], %49 {strides = array<i32>} : memref<16x32xf32, #tpu.memory_space<vmem>>, vector<2x32xf32>,
    %c2 = arith.constant 2 : index
    %c0_22 = arith.constant 0 : index
    %51 = vector.load %arg14[%c2, %c0_22] : memref<16x256xf32, #tpu.memory_space<vmem>>, vector<2x128xf32>
    %c12 = arith.constant 12 : index
    %c128_23 = arith.constant 128 : index
    %52 = vector.load %arg14[%c12, %c128_23] : memref<16x256xf32, #tpu.memory_space<vmem>>, vector<2x128xf32>
    %53 = tpu.concatenate %51, %52 in 0 : vector<2x128xf32>, vector<2x128xf32> -> vector<4x128xf32>
    %54 = arith.truncf %46 : vector<4x32xf32> to vector<4x32xbf16>
    %cst_24 = arith.constant dense<0.000000e+00> : vector<4x256xf32>
    %55 = tpu.matmul %54, %19, %cst_24 {dimension_numbers = #tpu.dot_dimension_numbers<[1], [0], [0], [1], [0, 0, 1, 1], [], []>} : vector<4x32xbf16>, vector<32x256xbf16>, vector<4x256xf32> -> vector<4x256xf32>
    %56 = vector.extract_strided_slice %55 {offsets = [0, 0], sizes = [4, 128], strides = [1, 1]} : vector<4x256xf32> to vector<4x128xf32>
    %57 = vector.extract_strided_slice %55 {offsets = [0, 128], sizes = [4, 128], strides = [1, 1]} : vector<4x256xf32> to vector<4x128xf32>
    %58 = arith.select %2, %56, %57 : vector<4x128xi1>, vector<4x128xf32>
    %59 = arith.addf %53, %58 : vector<4x128xf32>
    %60 = arith.mulf %59, %11 : vector<4x128xf32>
    %61 = math.tanh %60 : vector<4x128xf32>
    %cst_25 = arith.constant 5.000000e-01 : f32
    %62 = vector.broadcast %cst_25 : f32 to vector<4x128xf32>
    %63 = arith.mulf %62, %61 : vector<4x128xf32>
    %cst_26 = arith.constant 5.000000e-01 : f32
    %64 = vector.broadcast %cst_26 : f32 to vector<4x128xf32>
    %65 = arith.addf %63, %64 : vector<4x128xf32>
    %66 = arith.select %8, %61, %65 : vector<4x128xi1>, vector<4x128xf32>
    %67 = vector.extract_strided_slice %66 {offsets = [0, 0], sizes = [4, 32], strides = [1, 1]} : vector<4x128xf32> to vector<4x32xf32>
    %68 = vector.extract_strided_slice %66 {offsets = [0, 32], sizes = [4, 32], strides = [1, 1]} : vector<4x128xf32> to vector<4x32xf32>
    %69 = vector.extract_strided_slice %66 {offsets = [0, 64], sizes = [4, 32], strides = [1, 1]} : vector<4x128xf32> to vector<4x32xf32>
    %70 = vector.extract_strided_slice %66 {offsets = [0, 96], sizes = [4, 32], strides = [1, 1]} : vector<4x128xf32> to vector<4x32xf32>
    %71 = arith.mulf %68, %44 : vector<4x32xf32>
    %72 = arith.mulf %67, %69 : vector<4x32xf32>
    %73 = arith.addf %71, %72 : vector<4x32xf32>
    %74 = math.tanh %73 : vector<4x32xf32>
    %75 = arith.mulf %70, %74 : vector<4x32xf32>
    %76 = vector.extract_strided_slice %75 {offsets = [0, 0], sizes = [2, 32], strides = [1, 1]} : vector<4x32xf32> to vector<2x32xf32>
    %c2_27 = arith.constant 2 : index
    %c0_28 = arith.constant 0 : index
    %77 = vector.load %arg15[%c2_27, %c0_28] : memref<16x32xf32, #tpu.memory_space<vmem>>, vector<2x32xf32>
    tpu.vector_store %arg15[%c2_27, %c0_28], %76 {strides = array<i32>} : memref<16x32xf32, #tpu.memory_space<vmem>>, vector<2x32xf32>,
    %78 = vector.extract_strided_slice %75 {offsets = [2, 0], sizes = [2, 32], strides = [1, 1]} : vector<4x32xf32> to vector<2x32xf32>
    %c12_29 = arith.constant 12 : index
    %c0_30 = arith.constant 0 : index
    %79 = vector.load %arg16[%c12_29, %c0_30] : memref<16x32xf32, #tpu.memory_space<vmem>>, vector<2x32xf32>
    tpu.vector_store %arg16[%c12_29, %c0_30], %78 {strides = array<i32>} : memref<16x32xf32, #tpu.memory_space<vmem>>, vector<2x32xf32>,
    %c4 = arith.constant 4 : index
    %c0_31 = arith.constant 0 : index
    %80 = vector.load %arg14[%c4, %c0_31] : memref<16x256xf32, #tpu.memory_space<vmem>>, vector<2x128xf32>
    %c10 = arith.constant 10 : index
    %c128_32 = arith.constant 128 : index
    %81 = vector.load %arg14[%c10, %c128_32] : memref<16x256xf32, #tpu.memory_space<vmem>>, vector<2x128xf32>
    %82 = tpu.concatenate %80, %81 in 0 : vector<2x128xf32>, vector<2x128xf32> -> vector<4x128xf32>
    %83 = arith.truncf %75 : vector<4x32xf32> to vector<4x32xbf16>
    %cst_33 = arith.constant dense<0.000000e+00> : vector<4x256xf32>
    %84 = tpu.matmul %83, %19, %cst_33 {dimension_numbers = #tpu.dot_dimension_numbers<[1], [0], [0], [1], [0, 0, 1, 1], [], []>} : vector<4x32xbf16>, vector<32x256xbf16>, vector<4x256xf32> -> vector<4x256xf32>
    %85 = vector.extract_strided_slice %84 {offsets = [0, 0], sizes = [4, 128], strides = [1, 1]} : vector<4x256xf32> to vector<4x128xf32>
    %86 = vector.extract_strided_slice %84 {offsets = [0, 128], sizes = [4, 128], strides = [1, 1]} : vector<4x256xf32> to vector<4x128xf32>
    %87 = arith.select %2, %85, %86 : vector<4x128xi1>, vector<4x128xf32>
    %88 = arith.addf %82, %87 : vector<4x128xf32>
    %89 = arith.mulf %88, %11 : vector<4x128xf32>
    %90 = math.tanh %89 : vector<4x128xf32>
    %cst_34 = arith.constant 5.000000e-01 : f32
    %91 = vector.broadcast %cst_34 : f32 to vector<4x128xf32>
    %92 = arith.mulf %91, %90 : vector<4x128xf32>
    %cst_35 = arith.constant 5.000000e-01 : f32
    %93 = vector.broadcast %cst_35 : f32 to vector<4x128xf32>
    %94 = arith.addf %92, %93 : vector<4x128xf32>
    %95 = arith.select %8, %90, %94 : vector<4x128xi1>, vector<4x128xf32>
    %96 = vector.extract_strided_slice %95 {offsets = [0, 0], sizes = [4, 32], strides = [1, 1]} : vector<4x128xf32> to vector<4x32xf32>
    %97 = vector.extract_strided_slice %95 {offsets = [0, 32], sizes = [4, 32], strides = [1, 1]} : vector<4x128xf32> to vector<4x32xf32>
    %98 = vector.extract_strided_slice %95 {offsets = [0, 64], sizes = [4, 32], strides = [1, 1]} : vector<4x128xf32> to vector<4x32xf32>
    %99 = vector.extract_strided_slice %95 {offsets = [0, 96], sizes = [4, 32], strides = [1, 1]} : vector<4x128xf32> to vector<4x32xf32>
    %100 = arith.mulf %97, %73 : vector<4x32xf32>
    %101 = arith.mulf %96, %98 : vector<4x32xf32>
    %102 = arith.addf %100, %101 : vector<4x32xf32>
    %103 = math.tanh %102 : vector<4x32xf32>
    %104 = arith.mulf %99, %103 : vector<4x32xf32>
    %105 = vector.extract_strided_slice %104 {offsets = [0, 0], sizes = [2, 32], strides = [1, 1]} : vector<4x32xf32> to vector<2x32xf32>
    %c4_36 = arith.constant 4 : index
    %c0_37 = arith.constant 0 : index
    %106 = vector.load %arg15[%c4_36, %c0_37] : memref<16x32xf32, #tpu.memory_space<vmem>>, vector<2x32xf32>
    tpu.vector_store %arg15[%c4_36, %c0_37], %105 {strides = array<i32>} : memref<16x32xf32, #tpu.memory_space<vmem>>, vector<2x32xf32>,
    %107 = vector.extract_strided_slice %104 {offsets = [2, 0], sizes = [2, 32], strides = [1, 1]} : vector<4x32xf32> to vector<2x32xf32>
    %c10_38 = arith.constant 10 : index
    %c0_39 = arith.constant 0 : index
    %108 = vector.load %arg16[%c10_38, %c0_39] : memref<16x32xf32, #tpu.memory_space<vmem>>, vector<2x32xf32>
    tpu.vector_store %arg16[%c10_38, %c0_39], %107 {strides = array<i32>} : memref<16x32xf32, #tpu.memory_space<vmem>>, vector<2x32xf32>,
    %c6 = arith.constant 6 : index
    %c0_40 = arith.constant 0 : index
    %109 = vector.load %arg14[%c6, %c0_40] : memref<16x256xf32, #tpu.memory_space<vmem>>, vector<2x128xf32>
    %c8 = arith.constant 8 : index
    %c128_41 = arith.constant 128 : index
    %110 = vector.load %arg14[%c8, %c128_41] : memref<16x256xf32, #tpu.memory_space<vmem>>, vector<2x128xf32>
    %111 = tpu.concatenate %109, %110 in 0 : vector<2x128xf32>, vector<2x128xf32> -> vector<4x128xf32>
    %112 = arith.truncf %104 : vector<4x32xf32> to vector<4x32xbf16>
    %cst_42 = arith.constant dense<0.000000e+00> : vector<4x256xf32>
    %113 = tpu.matmul %112, %19, %cst_42 {dimension_numbers = #tpu.dot_dimension_numbers<[1], [0], [0], [1], [0, 0, 1, 1], [], []>} : vector<4x32xbf16>, vector<32x256xbf16>, vector<4x256xf32> -> vector<4x256xf32>
    %114 = vector.extract_strided_slice %113 {offsets = [0, 0], sizes = [4, 128], strides = [1, 1]} : vector<4x256xf32> to vector<4x128xf32>
    %115 = vector.extract_strided_slice %113 {offsets = [0, 128], sizes = [4, 128], strides = [1, 1]} : vector<4x256xf32> to vector<4x128xf32>
    %116 = arith.select %2, %114, %115 : vector<4x128xi1>, vector<4x128xf32>
    %117 = arith.addf %111, %116 : vector<4x128xf32>
    %118 = arith.mulf %117, %11 : vector<4x128xf32>
    %119 = math.tanh %118 : vector<4x128xf32>
    %cst_43 = arith.constant 5.000000e-01 : f32
    %120 = vector.broadcast %cst_43 : f32 to vector<4x128xf32>
    %121 = arith.mulf %120, %119 : vector<4x128xf32>
    %cst_44 = arith.constant 5.000000e-01 : f32
    %122 = vector.broadcast %cst_44 : f32 to vector<4x128xf32>
    %123 = arith.addf %121, %122 : vector<4x128xf32>
    %124 = arith.select %8, %119, %123 : vector<4x128xi1>, vector<4x128xf32>
    %125 = vector.extract_strided_slice %124 {offsets = [0, 0], sizes = [4, 32], strides = [1, 1]} : vector<4x128xf32> to vector<4x32xf32>
    %126 = vector.extract_strided_slice %124 {offsets = [0, 32], sizes = [4, 32], strides = [1, 1]} : vector<4x128xf32> to vector<4x32xf32>
    %127 = vector.extract_strided_slice %124 {offsets = [0, 64], sizes = [4, 32], strides = [1, 1]} : vector<4x128xf32> to vector<4x32xf32>
    %128 = vector.extract_strided_slice %124 {offsets = [0, 96], sizes = [4, 32], strides = [1, 1]} : vector<4x128xf32> to vector<4x32xf32>
    %129 = arith.mulf %126, %102 : vector<4x32xf32>
    %130 = arith.mulf %125, %127 : vector<4x32xf32>
    %131 = arith.addf %129, %130 : vector<4x32xf32>
    %132 = math.tanh %131 : vector<4x32xf32>
    %133 = arith.mulf %128, %132 : vector<4x32xf32>
    %134 = vector.extract_strided_slice %133 {offsets = [0, 0], sizes = [2, 32], strides = [1, 1]} : vector<4x32xf32> to vector<2x32xf32>
    %c6_45 = arith.constant 6 : index
    %c0_46 = arith.constant 0 : index
    %135 = vector.load %arg15[%c6_45, %c0_46] : memref<16x32xf32, #tpu.memory_space<vmem>>, vector<2x32xf32>
    tpu.vector_store %arg15[%c6_45, %c0_46], %134 {strides = array<i32>} : memref<16x32xf32, #tpu.memory_space<vmem>>, vector<2x32xf32>,
    %136 = vector.extract_strided_slice %133 {offsets = [2, 0], sizes = [2, 32], strides = [1, 1]} : vector<4x32xf32> to vector<2x32xf32>
    %c8_47 = arith.constant 8 : index
    %c0_48 = arith.constant 0 : index
    %137 = vector.load %arg16[%c8_47, %c0_48] : memref<16x32xf32, #tpu.memory_space<vmem>>, vector<2x32xf32>
    tpu.vector_store %arg16[%c8_47, %c0_48], %136 {strides = array<i32>} : memref<16x32xf32, #tpu.memory_space<vmem>>, vector<2x32xf32>,
    %c8_49 = arith.constant 8 : index
    %c0_50 = arith.constant 0 : index
    %138 = vector.load %arg14[%c8_49, %c0_50] : memref<16x256xf32, #tpu.memory_space<vmem>>, vector<2x128xf32>
    %c6_51 = arith.constant 6 : index
    %c128_52 = arith.constant 128 : index
    %139 = vector.load %arg14[%c6_51, %c128_52] : memref<16x256xf32, #tpu.memory_space<vmem>>, vector<2x128xf32>
    %140 = tpu.concatenate %138, %139 in 0 : vector<2x128xf32>, vector<2x128xf32> -> vector<4x128xf32>
    %141 = arith.truncf %133 : vector<4x32xf32> to vector<4x32xbf16>
    %cst_53 = arith.constant dense<0.000000e+00> : vector<4x256xf32>
    %142 = tpu.matmul %141, %19, %cst_53 {dimension_numbers = #tpu.dot_dimension_numbers<[1], [0], [0], [1], [0, 0, 1, 1], [], []>} : vector<4x32xbf16>, vector<32x256xbf16>, vector<4x256xf32> -> vector<4x256xf32>
    %143 = vector.extract_strided_slice %142 {offsets = [0, 0], sizes = [4, 128], strides = [1, 1]} : vector<4x256xf32> to vector<4x128xf32>
    %144 = vector.extract_strided_slice %142 {offsets = [0, 128], sizes = [4, 128], strides = [1, 1]} : vector<4x256xf32> to vector<4x128xf32>
    %145 = arith.select %2, %143, %144 : vector<4x128xi1>, vector<4x128xf32>
    %146 = arith.addf %140, %145 : vector<4x128xf32>
    %147 = arith.mulf %146, %11 : vector<4x128xf32>
    %148 = math.tanh %147 : vector<4x128xf32>
    %cst_54 = arith.constant 5.000000e-01 : f32
    %149 = vector.broadcast %cst_54 : f32 to vector<4x128xf32>
    %150 = arith.mulf %149, %148 : vector<4x128xf32>
    %cst_55 = arith.constant 5.000000e-01 : f32
    %151 = vector.broadcast %cst_55 : f32 to vector<4x128xf32>
    %152 = arith.addf %150, %151 : vector<4x128xf32>
    %153 = arith.select %8, %148, %152 : vector<4x128xi1>, vector<4x128xf32>
    %154 = vector.extract_strided_slice %153 {offsets = [0, 0], sizes = [4, 32], strides = [1, 1]} : vector<4x128xf32> to vector<4x32xf32>
    %155 = vector.extract_strided_slice %153 {offsets = [0, 32], sizes = [4, 32], strides = [1, 1]} : vector<4x128xf32> to vector<4x32xf32>
    %156 = vector.extract_strided_slice %153 {offsets = [0, 64], sizes = [4, 32], strides = [1, 1]} : vector<4x128xf32> to vector<4x32xf32>
    %157 = vector.extract_strided_slice %153 {offsets = [0, 96], sizes = [4, 32], strides = [1, 1]} : vector<4x128xf32> to vector<4x32xf32>
    %158 = arith.mulf %155, %131 : vector<4x32xf32>
    %159 = arith.mulf %154, %156 : vector<4x32xf32>
    %160 = arith.addf %158, %159 : vector<4x32xf32>
    %161 = math.tanh %160 : vector<4x32xf32>
    %162 = arith.mulf %157, %161 : vector<4x32xf32>
    %163 = vector.extract_strided_slice %162 {offsets = [0, 0], sizes = [2, 32], strides = [1, 1]} : vector<4x32xf32> to vector<2x32xf32>
    %c8_56 = arith.constant 8 : index
    %c0_57 = arith.constant 0 : index
    %164 = vector.load %arg15[%c8_56, %c0_57] : memref<16x32xf32, #tpu.memory_space<vmem>>, vector<2x32xf32>
    tpu.vector_store %arg15[%c8_56, %c0_57], %163 {strides = array<i32>} : memref<16x32xf32, #tpu.memory_space<vmem>>, vector<2x32xf32>,
    %165 = vector.extract_strided_slice %162 {offsets = [2, 0], sizes = [2, 32], strides = [1, 1]} : vector<4x32xf32> to vector<2x32xf32>
    %c6_58 = arith.constant 6 : index
    %c0_59 = arith.constant 0 : index
    %166 = vector.load %arg16[%c6_58, %c0_59] : memref<16x32xf32, #tpu.memory_space<vmem>>, vector<2x32xf32>
    tpu.vector_store %arg16[%c6_58, %c0_59], %165 {strides = array<i32>} : memref<16x32xf32, #tpu.memory_space<vmem>>, vector<2x32xf32>,
    %c10_60 = arith.constant 10 : index
    %c0_61 = arith.constant 0 : index
    %167 = vector.load %arg14[%c10_60, %c0_61] : memref<16x256xf32, #tpu.memory_space<vmem>>, vector<2x128xf32>
    %c4_62 = arith.constant 4 : index
    %c128_63 = arith.constant 128 : index
    %168 = vector.load %arg14[%c4_62, %c128_63] : memref<16x256xf32, #tpu.memory_space<vmem>>, vector<2x128xf32>
    %169 = tpu.concatenate %167, %168 in 0 : vector<2x128xf32>, vector<2x128xf32> -> vector<4x128xf32>
    %170 = arith.truncf %162 : vector<4x32xf32> to vector<4x32xbf16>
    %cst_64 = arith.constant dense<0.000000e+00> : vector<4x256xf32>
    %171 = tpu.matmul %170, %19, %cst_64 {dimension_numbers = #tpu.dot_dimension_numbers<[1], [0], [0], [1], [0, 0, 1, 1], [], []>} : vector<4x32xbf16>, vector<32x256xbf16>, vector<4x256xf32> -> vector<4x256xf32>
    %172 = vector.extract_strided_slice %171 {offsets = [0, 0], sizes = [4, 128], strides = [1, 1]} : vector<4x256xf32> to vector<4x128xf32>
    %173 = vector.extract_strided_slice %171 {offsets = [0, 128], sizes = [4, 128], strides = [1, 1]} : vector<4x256xf32> to vector<4x128xf32>
    %174 = arith.select %2, %172, %173 : vector<4x128xi1>, vector<4x128xf32>
    %175 = arith.addf %169, %174 : vector<4x128xf32>
    %176 = arith.mulf %175, %11 : vector<4x128xf32>
    %177 = math.tanh %176 : vector<4x128xf32>
    %cst_65 = arith.constant 5.000000e-01 : f32
    %178 = vector.broadcast %cst_65 : f32 to vector<4x128xf32>
    %179 = arith.mulf %178, %177 : vector<4x128xf32>
    %cst_66 = arith.constant 5.000000e-01 : f32
    %180 = vector.broadcast %cst_66 : f32 to vector<4x128xf32>
    %181 = arith.addf %179, %180 : vector<4x128xf32>
    %182 = arith.select %8, %177, %181 : vector<4x128xi1>, vector<4x128xf32>
    %183 = vector.extract_strided_slice %182 {offsets = [0, 0], sizes = [4, 32], strides = [1, 1]} : vector<4x128xf32> to vector<4x32xf32>
    %184 = vector.extract_strided_slice %182 {offsets = [0, 32], sizes = [4, 32], strides = [1, 1]} : vector<4x128xf32> to vector<4x32xf32>
    %185 = vector.extract_strided_slice %182 {offsets = [0, 64], sizes = [4, 32], strides = [1, 1]} : vector<4x128xf32> to vector<4x32xf32>
    %186 = vector.extract_strided_slice %182 {offsets = [0, 96], sizes = [4, 32], strides = [1, 1]} : vector<4x128xf32> to vector<4x32xf32>
    %187 = arith.mulf %184, %160 : vector<4x32xf32>
    %188 = arith.mulf %183, %185 : vector<4x32xf32>
    %189 = arith.addf %187, %188 : vector<4x32xf32>
    %190 = math.tanh %189 : vector<4x32xf32>
    %191 = arith.mulf %186, %190 : vector<4x32xf32>
    %192 = vector.extract_strided_slice %191 {offsets = [0, 0], sizes = [2, 32], strides = [1, 1]} : vector<4x32xf32> to vector<2x32xf32>
    %c10_67 = arith.constant 10 : index
    %c0_68 = arith.constant 0 : index
    %193 = vector.load %arg15[%c10_67, %c0_68] : memref<16x32xf32, #tpu.memory_space<vmem>>, vector<2x32xf32>
    tpu.vector_store %arg15[%c10_67, %c0_68], %192 {strides = array<i32>} : memref<16x32xf32, #tpu.memory_space<vmem>>, vector<2x32xf32>,
    %194 = vector.extract_strided_slice %191 {offsets = [2, 0], sizes = [2, 32], strides = [1, 1]} : vector<4x32xf32> to vector<2x32xf32>
    %c4_69 = arith.constant 4 : index
    %c0_70 = arith.constant 0 : index
    %195 = vector.load %arg16[%c4_69, %c0_70] : memref<16x32xf32, #tpu.memory_space<vmem>>, vector<2x32xf32>
    tpu.vector_store %arg16[%c4_69, %c0_70], %194 {strides = array<i32>} : memref<16x32xf32, #tpu.memory_space<vmem>>, vector<2x32xf32>,
    %c12_71 = arith.constant 12 : index
    %c0_72 = arith.constant 0 : index
    %196 = vector.load %arg14[%c12_71, %c0_72] : memref<16x256xf32, #tpu.memory_space<vmem>>, vector<2x128xf32>
    %c2_73 = arith.constant 2 : index
    %c128_74 = arith.constant 128 : index
    %197 = vector.load %arg14[%c2_73, %c128_74] : memref<16x256xf32, #tpu.memory_space<vmem>>, vector<2x128xf32>
    %198 = tpu.concatenate %196, %197 in 0 : vector<2x128xf32>, vector<2x128xf32> -> vector<4x128xf32>
    %199 = arith.truncf %191 : vector<4x32xf32> to vector<4x32xbf16>
    %cst_75 = arith.constant dense<0.000000e+00> : vector<4x256xf32>
    %200 = tpu.matmul %199, %19, %cst_75 {dimension_numbers = #tpu.dot_dimension_numbers<[1], [0], [0], [1], [0, 0, 1, 1], [], []>} : vector<4x32xbf16>, vector<32x256xbf16>, vector<4x256xf32> -> vector<4x256xf32>
    %201 = vector.extract_strided_slice %200 {offsets = [0, 0], sizes = [4, 128], strides = [1, 1]} : vector<4x256xf32> to vector<4x128xf32>
    %202 = vector.extract_strided_slice %200 {offsets = [0, 128], sizes = [4, 128], strides = [1, 1]} : vector<4x256xf32> to vector<4x128xf32>
    %203 = arith.select %2, %201, %202 : vector<4x128xi1>, vector<4x128xf32>
    %204 = arith.addf %198, %203 : vector<4x128xf32>
    %205 = arith.mulf %204, %11 : vector<4x128xf32>
    %206 = math.tanh %205 : vector<4x128xf32>
    %cst_76 = arith.constant 5.000000e-01 : f32
    %207 = vector.broadcast %cst_76 : f32 to vector<4x128xf32>
    %208 = arith.mulf %207, %206 : vector<4x128xf32>
    %cst_77 = arith.constant 5.000000e-01 : f32
    %209 = vector.broadcast %cst_77 : f32 to vector<4x128xf32>
    %210 = arith.addf %208, %209 : vector<4x128xf32>
    %211 = arith.select %8, %206, %210 : vector<4x128xi1>, vector<4x128xf32>
    %212 = vector.extract_strided_slice %211 {offsets = [0, 0], sizes = [4, 32], strides = [1, 1]} : vector<4x128xf32> to vector<4x32xf32>
    %213 = vector.extract_strided_slice %211 {offsets = [0, 32], sizes = [4, 32], strides = [1, 1]} : vector<4x128xf32> to vector<4x32xf32>
    %214 = vector.extract_strided_slice %211 {offsets = [0, 64], sizes = [4, 32], strides = [1, 1]} : vector<4x128xf32> to vector<4x32xf32>
    %215 = vector.extract_strided_slice %211 {offsets = [0, 96], sizes = [4, 32], strides = [1, 1]} : vector<4x128xf32> to vector<4x32xf32>
    %216 = arith.mulf %213, %189 : vector<4x32xf32>
    %217 = arith.mulf %212, %214 : vector<4x32xf32>
    %218 = arith.addf %216, %217 : vector<4x32xf32>
    %219 = math.tanh %218 : vector<4x32xf32>
    %220 = arith.mulf %215, %219 : vector<4x32xf32>
    %221 = vector.extract_strided_slice %220 {offsets = [0, 0], sizes = [2, 32], strides = [1, 1]} : vector<4x32xf32> to vector<2x32xf32>
    %c12_78 = arith.constant 12 : index
    %c0_79 = arith.constant 0 : index
    %222 = vector.load %arg15[%c12_78, %c0_79] : memref<16x32xf32, #tpu.memory_space<vmem>>, vector<2x32xf32>
    tpu.vector_store %arg15[%c12_78, %c0_79], %221 {strides = array<i32>} : memref<16x32xf32, #tpu.memory_space<vmem>>, vector<2x32xf32>,
    %223 = vector.extract_strided_slice %220 {offsets = [2, 0], sizes = [2, 32], strides = [1, 1]} : vector<4x32xf32> to vector<2x32xf32>
    %c2_80 = arith.constant 2 : index
    %c0_81 = arith.constant 0 : index
    %224 = vector.load %arg16[%c2_80, %c0_81] : memref<16x32xf32, #tpu.memory_space<vmem>>, vector<2x32xf32>
    tpu.vector_store %arg16[%c2_80, %c0_81], %223 {strides = array<i32>} : memref<16x32xf32, #tpu.memory_space<vmem>>, vector<2x32xf32>,
    %c14_82 = arith.constant 14 : index
    %c0_83 = arith.constant 0 : index
    %225 = vector.load %arg14[%c14_82, %c0_83] : memref<16x256xf32, #tpu.memory_space<vmem>>, vector<2x128xf32>
    %c0_84 = arith.constant 0 : index
    %c128_85 = arith.constant 128 : index
    %226 = vector.load %arg14[%c0_84, %c128_85] : memref<16x256xf32, #tpu.memory_space<vmem>>, vector<2x128xf32>
    %227 = tpu.concatenate %225, %226 in 0 : vector<2x128xf32>, vector<2x128xf32> -> vector<4x128xf32>
    %228 = arith.truncf %220 : vector<4x32xf32> to vector<4x32xbf16>
    %cst_86 = arith.constant dense<0.000000e+00> : vector<4x256xf32>
    %229 = tpu.matmul %228, %19, %cst_86 {dimension_numbers = #tpu.dot_dimension_numbers<[1], [0], [0], [1], [0, 0, 1, 1], [], []>} : vector<4x32xbf16>, vector<32x256xbf16>, vector<4x256xf32> -> vector<4x256xf32>
    %230 = vector.extract_strided_slice %229 {offsets = [0, 0], sizes = [4, 128], strides = [1, 1]} : vector<4x256xf32> to vector<4x128xf32>
    %231 = vector.extract_strided_slice %229 {offsets = [0, 128], sizes = [4, 128], strides = [1, 1]} : vector<4x256xf32> to vector<4x128xf32>
    %232 = arith.select %2, %230, %231 : vector<4x128xi1>, vector<4x128xf32>
    %233 = arith.addf %227, %232 : vector<4x128xf32>
    %234 = arith.mulf %233, %11 : vector<4x128xf32>
    %235 = math.tanh %234 : vector<4x128xf32>
    %cst_87 = arith.constant 5.000000e-01 : f32
    %236 = vector.broadcast %cst_87 : f32 to vector<4x128xf32>
    %237 = arith.mulf %236, %235 : vector<4x128xf32>
    %cst_88 = arith.constant 5.000000e-01 : f32
    %238 = vector.broadcast %cst_88 : f32 to vector<4x128xf32>
    %239 = arith.addf %237, %238 : vector<4x128xf32>
    %240 = arith.select %8, %235, %239 : vector<4x128xi1>, vector<4x128xf32>
    %241 = vector.extract_strided_slice %240 {offsets = [0, 0], sizes = [4, 32], strides = [1, 1]} : vector<4x128xf32> to vector<4x32xf32>
    %242 = vector.extract_strided_slice %240 {offsets = [0, 32], sizes = [4, 32], strides = [1, 1]} : vector<4x128xf32> to vector<4x32xf32>
    %243 = vector.extract_strided_slice %240 {offsets = [0, 64], sizes = [4, 32], strides = [1, 1]} : vector<4x128xf32> to vector<4x32xf32>
    %244 = vector.extract_strided_slice %240 {offsets = [0, 96], sizes = [4, 32], strides = [1, 1]} : vector<4x128xf32> to vector<4x32xf32>
    %245 = arith.mulf %242, %218 : vector<4x32xf32>
    %246 = arith.mulf %241, %243 : vector<4x32xf32>
    %247 = arith.addf %245, %246 : vector<4x32xf32>
    %248 = math.tanh %247 : vector<4x32xf32>
    %249 = arith.mulf %244, %248 : vector<4x32xf32>
    %250 = vector.extract_strided_slice %249 {offsets = [0, 0], sizes = [2, 32], strides = [1, 1]} : vector<4x32xf32> to vector<2x32xf32>
    %c14_89 = arith.constant 14 : index
    %c0_90 = arith.constant 0 : index
    %251 = vector.load %arg15[%c14_89, %c0_90] : memref<16x32xf32, #tpu.memory_space<vmem>>, vector<2x32xf32>
    tpu.vector_store %arg15[%c14_89, %c0_90], %250 {strides = array<i32>} : memref<16x32xf32, #tpu.memory_space<vmem>>, vector<2x32xf32>,
    %252 = vector.extract_strided_slice %249 {offsets = [2, 0], sizes = [2, 32], strides = [1, 1]} : vector<4x32xf32> to vector<2x32xf32>
    %c0_91 = arith.constant 0 : index
    %c0_92 = arith.constant 0 : index
    %253 = vector.load %arg16[%c0_91, %c0_92] : memref<16x32xf32, #tpu.memory_space<vmem>>, vector<2x32xf32>
    tpu.vector_store %arg16[%c0_91, %c0_92], %252 {strides = array<i32>} : memref<16x32xf32, #tpu.memory_space<vmem>>, vector<2x32xf32>,
    %c0_93 = arith.constant 0 : index
    %c0_94 = arith.constant 0 : index
    %254 = vector.load %arg15[%c0_93, %c0_94] : memref<16x32xf32, #tpu.memory_space<vmem>>, vector<16x32xf32>
    %255 = arith.truncf %254 : vector<16x32xf32> to vector<16x32xbf16>
    %c0_95 = arith.constant 0 : index
    %c0_96 = arith.constant 0 : index
    %256 = vector.load %arg4[%c0_95, %c0_96] : memref<32x256xbf16, #tpu.memory_space<vmem>>, vector<32x256xbf16>
    %cst_97 = arith.constant dense<0.000000e+00> : vector<16x256xf32>
    %257 = tpu.matmul %255, %256, %cst_97 {dimension_numbers = #tpu.dot_dimension_numbers<[1], [0], [0], [1], [0, 0, 1, 1], [], []>} : vector<16x32xbf16>, vector<32x256xbf16>, vector<16x256xf32> -> vector<16x256xf32>
    %c0_98 = arith.constant 0 : index
    %c0_99 = arith.constant 0 : index
    %258 = vector.load %arg16[%c0_98, %c0_99] : memref<16x32xf32, #tpu.memory_space<vmem>>, vector<16x32xf32>
    %259 = arith.truncf %258 : vector<16x32xf32> to vector<16x32xbf16>
    %c0_100 = arith.constant 0 : index
    %c0_101 = arith.constant 0 : index
    %260 = vector.load %arg5[%c0_100, %c0_101] : memref<32x256xbf16, #tpu.memory_space<vmem>>, vector<32x256xbf16>
    %cst_102 = arith.constant dense<0.000000e+00> : vector<16x256xf32>
    %261 = tpu.matmul %259, %260, %cst_102 {dimension_numbers = #tpu.dot_dimension_numbers<[1], [0], [0], [1], [0, 0, 1, 1], [], []>} : vector<16x32xbf16>, vector<32x256xbf16>, vector<16x256xf32> -> vector<16x256xf32>
    %262 = arith.addf %257, %261 : vector<16x256xf32>
    %c0_103 = arith.constant 0 : index
    %c0_104 = arith.constant 0 : index
    %263 = vector.load %arg7[%c0_103, %c0_104] : memref<1x256xf32, #tpu.memory_space<vmem>>, vector<1x256xf32>
    %264 = vector.broadcast %263 : vector<1x256xf32> to vector<16x256xf32>
    %265 = arith.addf %262, %264 : vector<16x256xf32>
    %c0_105 = arith.constant 0 : index
    %c0_106 = arith.constant 0 : index
    %266 = vector.load %arg14[%c0_105, %c0_106] : memref<16x256xf32, #tpu.memory_space<vmem>>, vector<16x256xf32>
    tpu.vector_store %arg14[%c0_105, %c0_106], %265 {strides = array<i32>} : memref<16x256xf32, #tpu.memory_space<vmem>>, vector<16x256xf32>,
    %c0_107 = arith.constant 0 : index
    %c0_108 = arith.constant 0 : index
    %267 = vector.load %arg6[%c0_107, %c0_108] : memref<32x256xbf16, #tpu.memory_space<vmem>>, vector<32x256xbf16>
    %cst_109 = arith.constant 0.000000e+00 : f32
    %268 = vector.broadcast %cst_109 : f32 to vector<4x32xf32>
    %cst_110 = arith.constant 0.000000e+00 : f32
    %269 = vector.broadcast %cst_110 : f32 to vector<4x32xf32>
    %c0_111 = arith.constant 0 : index
    %c0_112 = arith.constant 0 : index
    %270 = vector.load %arg14[%c0_111, %c0_112] : memref<16x256xf32, #tpu.memory_space<vmem>>, vector<2x128xf32>
    %c14_113 = arith.constant 14 : index
    %c128_114 = arith.constant 128 : index
    %271 = vector.load %arg14[%c14_113, %c128_114] : memref<16x256xf32, #tpu.memory_space<vmem>>, vector<2x128xf32>
    %272 = tpu.concatenate %270, %271 in 0 : vector<2x128xf32>, vector<2x128xf32> -> vector<4x128xf32>
    %273 = arith.truncf %268 : vector<4x32xf32> to vector<4x32xbf16>
    %cst_115 = arith.constant dense<0.000000e+00> : vector<4x256xf32>
    %274 = tpu.matmul %273, %267, %cst_115 {dimension_numbers = #tpu.dot_dimension_numbers<[1], [0], [0], [1], [0, 0, 1, 1], [], []>} : vector<4x32xbf16>, vector<32x256xbf16>, vector<4x256xf32> -> vector<4x256xf32>
    %275 = vector.extract_strided_slice %274 {offsets = [0, 0], sizes = [4, 128], strides = [1, 1]} : vector<4x256xf32> to vector<4x128xf32>
    %276 = vector.extract_strided_slice %274 {offsets = [0, 128], sizes = [4, 128], strides = [1, 1]} : vector<4x256xf32> to vector<4x128xf32>
    %277 = arith.select %2, %275, %276 : vector<4x128xi1>, vector<4x128xf32>
    %278 = arith.addf %272, %277 : vector<4x128xf32>
    %279 = arith.mulf %278, %11 : vector<4x128xf32>
    %280 = math.tanh %279 : vector<4x128xf32>
    %cst_116 = arith.constant 5.000000e-01 : f32
    %281 = vector.broadcast %cst_116 : f32 to vector<4x128xf32>
    %282 = arith.mulf %281, %280 : vector<4x128xf32>
    %cst_117 = arith.constant 5.000000e-01 : f32
    %283 = vector.broadcast %cst_117 : f32 to vector<4x128xf32>
    %284 = arith.addf %282, %283 : vector<4x128xf32>
    %285 = arith.select %8, %280, %284 : vector<4x128xi1>, vector<4x128xf32>
    %286 = vector.extract_strided_slice %285 {offsets = [0, 0], sizes = [4, 32], strides = [1, 1]} : vector<4x128xf32> to vector<4x32xf32>
    %287 = vector.extract_strided_slice %285 {offsets = [0, 32], sizes = [4, 32], strides = [1, 1]} : vector<4x128xf32> to vector<4x32xf32>
    %288 = vector.extract_strided_slice %285 {offsets = [0, 64], sizes = [4, 32], strides = [1, 1]} : vector<4x128xf32> to vector<4x32xf32>
    %289 = vector.extract_strided_slice %285 {offsets = [0, 96], sizes = [4, 32], strides = [1, 1]} : vector<4x128xf32> to vector<4x32xf32>
    %290 = arith.mulf %287, %269 : vector<4x32xf32>
    %291 = arith.mulf %286, %288 : vector<4x32xf32>
    %292 = arith.addf %290, %291 : vector<4x32xf32>
    %293 = math.tanh %292 : vector<4x32xf32>
    %294 = arith.mulf %289, %293 : vector<4x32xf32>
    %295 = vector.extract_strided_slice %294 {offsets = [0, 0], sizes = [2, 32], strides = [1, 1]} : vector<4x32xf32> to vector<2x32xf32>
    %c0_118 = arith.constant 0 : index
    %c0_119 = arith.constant 0 : index
    %296 = vector.load %arg15[%c0_118, %c0_119] : memref<16x32xf32, #tpu.memory_space<vmem>>, vector<2x32xf32>
    tpu.vector_store %arg15[%c0_118, %c0_119], %295 {strides = array<i32>} : memref<16x32xf32, #tpu.memory_space<vmem>>, vector<2x32xf32>,
    %297 = vector.extract_strided_slice %294 {offsets = [2, 0], sizes = [2, 32], strides = [1, 1]} : vector<4x32xf32> to vector<2x32xf32>
    %c14_120 = arith.constant 14 : index
    %c0_121 = arith.constant 0 : index
    %298 = vector.load %arg16[%c14_120, %c0_121] : memref<16x32xf32, #tpu.memory_space<vmem>>, vector<2x32xf32>
    tpu.vector_store %arg16[%c14_120, %c0_121], %297 {strides = array<i32>} : memref<16x32xf32, #tpu.memory_space<vmem>>, vector<2x32xf32>,
    %c2_122 = arith.constant 2 : index
    %c0_123 = arith.constant 0 : index
    %299 = vector.load %arg14[%c2_122, %c0_123] : memref<16x256xf32, #tpu.memory_space<vmem>>, vector<2x128xf32>
    %c12_124 = arith.constant 12 : index
    %c128_125 = arith.constant 128 : index
    %300 = vector.load %arg14[%c12_124, %c128_125] : memref<16x256xf32, #tpu.memory_space<vmem>>, vector<2x128xf32>
    %301 = tpu.concatenate %299, %300 in 0 : vector<2x128xf32>, vector<2x128xf32> -> vector<4x128xf32>
    %302 = arith.truncf %294 : vector<4x32xf32> to vector<4x32xbf16>
    %cst_126 = arith.constant dense<0.000000e+00> : vector<4x256xf32>
    %303 = tpu.matmul %302, %267, %cst_126 {dimension_numbers = #tpu.dot_dimension_numbers<[1], [0], [0], [1], [0, 0, 1, 1], [], []>} : vector<4x32xbf16>, vector<32x256xbf16>, vector<4x256xf32> -> vector<4x256xf32>
    %304 = vector.extract_strided_slice %303 {offsets = [0, 0], sizes = [4, 128], strides = [1, 1]} : vector<4x256xf32> to vector<4x128xf32>
    %305 = vector.extract_strided_slice %303 {offsets = [0, 128], sizes = [4, 128], strides = [1, 1]} : vector<4x256xf32> to vector<4x128xf32>
    %306 = arith.select %2, %304, %305 : vector<4x128xi1>, vector<4x128xf32>
    %307 = arith.addf %301, %306 : vector<4x128xf32>
    %308 = arith.mulf %307, %11 : vector<4x128xf32>
    %309 = math.tanh %308 : vector<4x128xf32>
    %cst_127 = arith.constant 5.000000e-01 : f32
    %310 = vector.broadcast %cst_127 : f32 to vector<4x128xf32>
    %311 = arith.mulf %310, %309 : vector<4x128xf32>
    %cst_128 = arith.constant 5.000000e-01 : f32
    %312 = vector.broadcast %cst_128 : f32 to vector<4x128xf32>
    %313 = arith.addf %311, %312 : vector<4x128xf32>
    %314 = arith.select %8, %309, %313 : vector<4x128xi1>, vector<4x128xf32>
    %315 = vector.extract_strided_slice %314 {offsets = [0, 0], sizes = [4, 32], strides = [1, 1]} : vector<4x128xf32> to vector<4x32xf32>
    %316 = vector.extract_strided_slice %314 {offsets = [0, 32], sizes = [4, 32], strides = [1, 1]} : vector<4x128xf32> to vector<4x32xf32>
    %317 = vector.extract_strided_slice %314 {offsets = [0, 64], sizes = [4, 32], strides = [1, 1]} : vector<4x128xf32> to vector<4x32xf32>
    %318 = vector.extract_strided_slice %314 {offsets = [0, 96], sizes = [4, 32], strides = [1, 1]} : vector<4x128xf32> to vector<4x32xf32>
    %319 = arith.mulf %316, %292 : vector<4x32xf32>
    %320 = arith.mulf %315, %317 : vector<4x32xf32>
    %321 = arith.addf %319, %320 : vector<4x32xf32>
    %322 = math.tanh %321 : vector<4x32xf32>
    %323 = arith.mulf %318, %322 : vector<4x32xf32>
    %324 = vector.extract_strided_slice %323 {offsets = [0, 0], sizes = [2, 32], strides = [1, 1]} : vector<4x32xf32> to vector<2x32xf32>
    %c2_129 = arith.constant 2 : index
    %c0_130 = arith.constant 0 : index
    %325 = vector.load %arg15[%c2_129, %c0_130] : memref<16x32xf32, #tpu.memory_space<vmem>>, vector<2x32xf32>
    tpu.vector_store %arg15[%c2_129, %c0_130], %324 {strides = array<i32>} : memref<16x32xf32, #tpu.memory_space<vmem>>, vector<2x32xf32>,
    %326 = vector.extract_strided_slice %323 {offsets = [2, 0], sizes = [2, 32], strides = [1, 1]} : vector<4x32xf32> to vector<2x32xf32>
    %c12_131 = arith.constant 12 : index
    %c0_132 = arith.constant 0 : index
    %327 = vector.load %arg16[%c12_131, %c0_132] : memref<16x32xf32, #tpu.memory_space<vmem>>, vector<2x32xf32>
    tpu.vector_store %arg16[%c12_131, %c0_132], %326 {strides = array<i32>} : memref<16x32xf32, #tpu.memory_space<vmem>>, vector<2x32xf32>,
    %c4_133 = arith.constant 4 : index
    %c0_134 = arith.constant 0 : index
    %328 = vector.load %arg14[%c4_133, %c0_134] : memref<16x256xf32, #tpu.memory_space<vmem>>, vector<2x128xf32>
    %c10_135 = arith.constant 10 : index
    %c128_136 = arith.constant 128 : index
    %329 = vector.load %arg14[%c10_135, %c128_136] : memref<16x256xf32, #tpu.memory_space<vmem>>, vector<2x128xf32>
    %330 = tpu.concatenate %328, %329 in 0 : vector<2x128xf32>, vector<2x128xf32> -> vector<4x128xf32>
    %331 = arith.truncf %323 : vector<4x32xf32> to vector<4x32xbf16>
    %cst_137 = arith.constant dense<0.000000e+00> : vector<4x256xf32>
    %332 = tpu.matmul %331, %267, %cst_137 {dimension_numbers = #tpu.dot_dimension_numbers<[1], [0], [0], [1], [0, 0, 1, 1], [], []>} : vector<4x32xbf16>, vector<32x256xbf16>, vector<4x256xf32> -> vector<4x256xf32>
    %333 = vector.extract_strided_slice %332 {offsets = [0, 0], sizes = [4, 128], strides = [1, 1]} : vector<4x256xf32> to vector<4x128xf32>
    %334 = vector.extract_strided_slice %332 {offsets = [0, 128], sizes = [4, 128], strides = [1, 1]} : vector<4x256xf32> to vector<4x128xf32>
    %335 = arith.select %2, %333, %334 : vector<4x128xi1>, vector<4x128xf32>
    %336 = arith.addf %330, %335 : vector<4x128xf32>
    %337 = arith.mulf %336, %11 : vector<4x128xf32>
    %338 = math.tanh %337 : vector<4x128xf32>
    %cst_138 = arith.constant 5.000000e-01 : f32
    %339 = vector.broadcast %cst_138 : f32 to vector<4x128xf32>
    %340 = arith.mulf %339, %338 : vector<4x128xf32>
    %cst_139 = arith.constant 5.000000e-01 : f32
    %341 = vector.broadcast %cst_139 : f32 to vector<4x128xf32>
    %342 = arith.addf %340, %341 : vector<4x128xf32>
    %343 = arith.select %8, %338, %342 : vector<4x128xi1>, vector<4x128xf32>
    %344 = vector.extract_strided_slice %343 {offsets = [0, 0], sizes = [4, 32], strides = [1, 1]} : vector<4x128xf32> to vector<4x32xf32>
    %345 = vector.extract_strided_slice %343 {offsets = [0, 32], sizes = [4, 32], strides = [1, 1]} : vector<4x128xf32> to vector<4x32xf32>
    %346 = vector.extract_strided_slice %343 {offsets = [0, 64], sizes = [4, 32], strides = [1, 1]} : vector<4x128xf32> to vector<4x32xf32>
    %347 = vector.extract_strided_slice %343 {offsets = [0, 96], sizes = [4, 32], strides = [1, 1]} : vector<4x128xf32> to vector<4x32xf32>
    %348 = arith.mulf %345, %321 : vector<4x32xf32>
    %349 = arith.mulf %344, %346 : vector<4x32xf32>
    %350 = arith.addf %348, %349 : vector<4x32xf32>
    %351 = math.tanh %350 : vector<4x32xf32>
    %352 = arith.mulf %347, %351 : vector<4x32xf32>
    %353 = vector.extract_strided_slice %352 {offsets = [0, 0], sizes = [2, 32], strides = [1, 1]} : vector<4x32xf32> to vector<2x32xf32>
    %c4_140 = arith.constant 4 : index
    %c0_141 = arith.constant 0 : index
    %354 = vector.load %arg15[%c4_140, %c0_141] : memref<16x32xf32, #tpu.memory_space<vmem>>, vector<2x32xf32>
    tpu.vector_store %arg15[%c4_140, %c0_141], %353 {strides = array<i32>} : memref<16x32xf32, #tpu.memory_space<vmem>>, vector<2x32xf32>,
    %355 = vector.extract_strided_slice %352 {offsets = [2, 0], sizes = [2, 32], strides = [1, 1]} : vector<4x32xf32> to vector<2x32xf32>
    %c10_142 = arith.constant 10 : index
    %c0_143 = arith.constant 0 : index
    %356 = vector.load %arg16[%c10_142, %c0_143] : memref<16x32xf32, #tpu.memory_space<vmem>>, vector<2x32xf32>
    tpu.vector_store %arg16[%c10_142, %c0_143], %355 {strides = array<i32>} : memref<16x32xf32, #tpu.memory_space<vmem>>, vector<2x32xf32>,
    %c6_144 = arith.constant 6 : index
    %c0_145 = arith.constant 0 : index
    %357 = vector.load %arg14[%c6_144, %c0_145] : memref<16x256xf32, #tpu.memory_space<vmem>>, vector<2x128xf32>
    %c8_146 = arith.constant 8 : index
    %c128_147 = arith.constant 128 : index
    %358 = vector.load %arg14[%c8_146, %c128_147] : memref<16x256xf32, #tpu.memory_space<vmem>>, vector<2x128xf32>
    %359 = tpu.concatenate %357, %358 in 0 : vector<2x128xf32>, vector<2x128xf32> -> vector<4x128xf32>
    %360 = arith.truncf %352 : vector<4x32xf32> to vector<4x32xbf16>
    %cst_148 = arith.constant dense<0.000000e+00> : vector<4x256xf32>
    %361 = tpu.matmul %360, %267, %cst_148 {dimension_numbers = #tpu.dot_dimension_numbers<[1], [0], [0], [1], [0, 0, 1, 1], [], []>} : vector<4x32xbf16>, vector<32x256xbf16>, vector<4x256xf32> -> vector<4x256xf32>
    %362 = vector.extract_strided_slice %361 {offsets = [0, 0], sizes = [4, 128], strides = [1, 1]} : vector<4x256xf32> to vector<4x128xf32>
    %363 = vector.extract_strided_slice %361 {offsets = [0, 128], sizes = [4, 128], strides = [1, 1]} : vector<4x256xf32> to vector<4x128xf32>
    %364 = arith.select %2, %362, %363 : vector<4x128xi1>, vector<4x128xf32>
    %365 = arith.addf %359, %364 : vector<4x128xf32>
    %366 = arith.mulf %365, %11 : vector<4x128xf32>
    %367 = math.tanh %366 : vector<4x128xf32>
    %cst_149 = arith.constant 5.000000e-01 : f32
    %368 = vector.broadcast %cst_149 : f32 to vector<4x128xf32>
    %369 = arith.mulf %368, %367 : vector<4x128xf32>
    %cst_150 = arith.constant 5.000000e-01 : f32
    %370 = vector.broadcast %cst_150 : f32 to vector<4x128xf32>
    %371 = arith.addf %369, %370 : vector<4x128xf32>
    %372 = arith.select %8, %367, %371 : vector<4x128xi1>, vector<4x128xf32>
    %373 = vector.extract_strided_slice %372 {offsets = [0, 0], sizes = [4, 32], strides = [1, 1]} : vector<4x128xf32> to vector<4x32xf32>
    %374 = vector.extract_strided_slice %372 {offsets = [0, 32], sizes = [4, 32], strides = [1, 1]} : vector<4x128xf32> to vector<4x32xf32>
    %375 = vector.extract_strided_slice %372 {offsets = [0, 64], sizes = [4, 32], strides = [1, 1]} : vector<4x128xf32> to vector<4x32xf32>
    %376 = vector.extract_strided_slice %372 {offsets = [0, 96], sizes = [4, 32], strides = [1, 1]} : vector<4x128xf32> to vector<4x32xf32>
    %377 = arith.mulf %374, %350 : vector<4x32xf32>
    %378 = arith.mulf %373, %375 : vector<4x32xf32>
    %379 = arith.addf %377, %378 : vector<4x32xf32>
    %380 = math.tanh %379 : vector<4x32xf32>
    %381 = arith.mulf %376, %380 : vector<4x32xf32>
    %382 = vector.extract_strided_slice %381 {offsets = [0, 0], sizes = [2, 32], strides = [1, 1]} : vector<4x32xf32> to vector<2x32xf32>
    %c6_151 = arith.constant 6 : index
    %c0_152 = arith.constant 0 : index
    %383 = vector.load %arg15[%c6_151, %c0_152] : memref<16x32xf32, #tpu.memory_space<vmem>>, vector<2x32xf32>
    tpu.vector_store %arg15[%c6_151, %c0_152], %382 {strides = array<i32>} : memref<16x32xf32, #tpu.memory_space<vmem>>, vector<2x32xf32>,
    %384 = vector.extract_strided_slice %381 {offsets = [2, 0], sizes = [2, 32], strides = [1, 1]} : vector<4x32xf32> to vector<2x32xf32>
    %c8_153 = arith.constant 8 : index
    %c0_154 = arith.constant 0 : index
    %385 = vector.load %arg16[%c8_153, %c0_154] : memref<16x32xf32, #tpu.memory_space<vmem>>, vector<2x32xf32>
    tpu.vector_store %arg16[%c8_153, %c0_154], %384 {strides = array<i32>} : memref<16x32xf32, #tpu.memory_space<vmem>>, vector<2x32xf32>,
    %c8_155 = arith.constant 8 : index
    %c0_156 = arith.constant 0 : index
    %386 = vector.load %arg14[%c8_155, %c0_156] : memref<16x256xf32, #tpu.memory_space<vmem>>, vector<2x128xf32>
    %c6_157 = arith.constant 6 : index
    %c128_158 = arith.constant 128 : index
    %387 = vector.load %arg14[%c6_157, %c128_158] : memref<16x256xf32, #tpu.memory_space<vmem>>, vector<2x128xf32>
    %388 = tpu.concatenate %386, %387 in 0 : vector<2x128xf32>, vector<2x128xf32> -> vector<4x128xf32>
    %389 = arith.truncf %381 : vector<4x32xf32> to vector<4x32xbf16>
    %cst_159 = arith.constant dense<0.000000e+00> : vector<4x256xf32>
    %390 = tpu.matmul %389, %267, %cst_159 {dimension_numbers = #tpu.dot_dimension_numbers<[1], [0], [0], [1], [0, 0, 1, 1], [], []>} : vector<4x32xbf16>, vector<32x256xbf16>, vector<4x256xf32> -> vector<4x256xf32>
    %391 = vector.extract_strided_slice %390 {offsets = [0, 0], sizes = [4, 128], strides = [1, 1]} : vector<4x256xf32> to vector<4x128xf32>
    %392 = vector.extract_strided_slice %390 {offsets = [0, 128], sizes = [4, 128], strides = [1, 1]} : vector<4x256xf32> to vector<4x128xf32>
    %393 = arith.select %2, %391, %392 : vector<4x128xi1>, vector<4x128xf32>
    %394 = arith.addf %388, %393 : vector<4x128xf32>
    %395 = arith.mulf %394, %11 : vector<4x128xf32>
    %396 = math.tanh %395 : vector<4x128xf32>
    %cst_160 = arith.constant 5.000000e-01 : f32
    %397 = vector.broadcast %cst_160 : f32 to vector<4x128xf32>
    %398 = arith.mulf %397, %396 : vector<4x128xf32>
    %cst_161 = arith.constant 5.000000e-01 : f32
    %399 = vector.broadcast %cst_161 : f32 to vector<4x128xf32>
    %400 = arith.addf %398, %399 : vector<4x128xf32>
    %401 = arith.select %8, %396, %400 : vector<4x128xi1>, vector<4x128xf32>
    %402 = vector.extract_strided_slice %401 {offsets = [0, 0], sizes = [4, 32], strides = [1, 1]} : vector<4x128xf32> to vector<4x32xf32>
    %403 = vector.extract_strided_slice %401 {offsets = [0, 32], sizes = [4, 32], strides = [1, 1]} : vector<4x128xf32> to vector<4x32xf32>
    %404 = vector.extract_strided_slice %401 {offsets = [0, 64], sizes = [4, 32], strides = [1, 1]} : vector<4x128xf32> to vector<4x32xf32>
    %405 = vector.extract_strided_slice %401 {offsets = [0, 96], sizes = [4, 32], strides = [1, 1]} : vector<4x128xf32> to vector<4x32xf32>
    %406 = arith.mulf %403, %379 : vector<4x32xf32>
    %407 = arith.mulf %402, %404 : vector<4x32xf32>
    %408 = arith.addf %406, %407 : vector<4x32xf32>
    %409 = math.tanh %408 : vector<4x32xf32>
    %410 = arith.mulf %405, %409 : vector<4x32xf32>
    %411 = vector.extract_strided_slice %410 {offsets = [0, 0], sizes = [2, 32], strides = [1, 1]} : vector<4x32xf32> to vector<2x32xf32>
    %c8_162 = arith.constant 8 : index
    %c0_163 = arith.constant 0 : index
    %412 = vector.load %arg15[%c8_162, %c0_163] : memref<16x32xf32, #tpu.memory_space<vmem>>, vector<2x32xf32>
    tpu.vector_store %arg15[%c8_162, %c0_163], %411 {strides = array<i32>} : memref<16x32xf32, #tpu.memory_space<vmem>>, vector<2x32xf32>,
    %413 = vector.extract_strided_slice %410 {offsets = [2, 0], sizes = [2, 32], strides = [1, 1]} : vector<4x32xf32> to vector<2x32xf32>
    %c6_164 = arith.constant 6 : index
    %c0_165 = arith.constant 0 : index
    %414 = vector.load %arg16[%c6_164, %c0_165] : memref<16x32xf32, #tpu.memory_space<vmem>>, vector<2x32xf32>
    tpu.vector_store %arg16[%c6_164, %c0_165], %413 {strides = array<i32>} : memref<16x32xf32, #tpu.memory_space<vmem>>, vector<2x32xf32>,
    %c10_166 = arith.constant 10 : index
    %c0_167 = arith.constant 0 : index
    %415 = vector.load %arg14[%c10_166, %c0_167] : memref<16x256xf32, #tpu.memory_space<vmem>>, vector<2x128xf32>
    %c4_168 = arith.constant 4 : index
    %c128_169 = arith.constant 128 : index
    %416 = vector.load %arg14[%c4_168, %c128_169] : memref<16x256xf32, #tpu.memory_space<vmem>>, vector<2x128xf32>
    %417 = tpu.concatenate %415, %416 in 0 : vector<2x128xf32>, vector<2x128xf32> -> vector<4x128xf32>
    %418 = arith.truncf %410 : vector<4x32xf32> to vector<4x32xbf16>
    %cst_170 = arith.constant dense<0.000000e+00> : vector<4x256xf32>
    %419 = tpu.matmul %418, %267, %cst_170 {dimension_numbers = #tpu.dot_dimension_numbers<[1], [0], [0], [1], [0, 0, 1, 1], [], []>} : vector<4x32xbf16>, vector<32x256xbf16>, vector<4x256xf32> -> vector<4x256xf32>
    %420 = vector.extract_strided_slice %419 {offsets = [0, 0], sizes = [4, 128], strides = [1, 1]} : vector<4x256xf32> to vector<4x128xf32>
    %421 = vector.extract_strided_slice %419 {offsets = [0, 128], sizes = [4, 128], strides = [1, 1]} : vector<4x256xf32> to vector<4x128xf32>
    %422 = arith.select %2, %420, %421 : vector<4x128xi1>, vector<4x128xf32>
    %423 = arith.addf %417, %422 : vector<4x128xf32>
    %424 = arith.mulf %423, %11 : vector<4x128xf32>
    %425 = math.tanh %424 : vector<4x128xf32>
    %cst_171 = arith.constant 5.000000e-01 : f32
    %426 = vector.broadcast %cst_171 : f32 to vector<4x128xf32>
    %427 = arith.mulf %426, %425 : vector<4x128xf32>
    %cst_172 = arith.constant 5.000000e-01 : f32
    %428 = vector.broadcast %cst_172 : f32 to vector<4x128xf32>
    %429 = arith.addf %427, %428 : vector<4x128xf32>
    %430 = arith.select %8, %425, %429 : vector<4x128xi1>, vector<4x128xf32>
    %431 = vector.extract_strided_slice %430 {offsets = [0, 0], sizes = [4, 32], strides = [1, 1]} : vector<4x128xf32> to vector<4x32xf32>
    %432 = vector.extract_strided_slice %430 {offsets = [0, 32], sizes = [4, 32], strides = [1, 1]} : vector<4x128xf32> to vector<4x32xf32>
    %433 = vector.extract_strided_slice %430 {offsets = [0, 64], sizes = [4, 32], strides = [1, 1]} : vector<4x128xf32> to vector<4x32xf32>
    %434 = vector.extract_strided_slice %430 {offsets = [0, 96], sizes = [4, 32], strides = [1, 1]} : vector<4x128xf32> to vector<4x32xf32>
    %435 = arith.mulf %432, %408 : vector<4x32xf32>
    %436 = arith.mulf %431, %433 : vector<4x32xf32>
    %437 = arith.addf %435, %436 : vector<4x32xf32>
    %438 = math.tanh %437 : vector<4x32xf32>
    %439 = arith.mulf %434, %438 : vector<4x32xf32>
    %440 = vector.extract_strided_slice %439 {offsets = [0, 0], sizes = [2, 32], strides = [1, 1]} : vector<4x32xf32> to vector<2x32xf32>
    %c10_173 = arith.constant 10 : index
    %c0_174 = arith.constant 0 : index
    %441 = vector.load %arg15[%c10_173, %c0_174] : memref<16x32xf32, #tpu.memory_space<vmem>>, vector<2x32xf32>
    tpu.vector_store %arg15[%c10_173, %c0_174], %440 {strides = array<i32>} : memref<16x32xf32, #tpu.memory_space<vmem>>, vector<2x32xf32>,
    %442 = vector.extract_strided_slice %439 {offsets = [2, 0], sizes = [2, 32], strides = [1, 1]} : vector<4x32xf32> to vector<2x32xf32>
    %c4_175 = arith.constant 4 : index
    %c0_176 = arith.constant 0 : index
    %443 = vector.load %arg16[%c4_175, %c0_176] : memref<16x32xf32, #tpu.memory_space<vmem>>, vector<2x32xf32>
    tpu.vector_store %arg16[%c4_175, %c0_176], %442 {strides = array<i32>} : memref<16x32xf32, #tpu.memory_space<vmem>>, vector<2x32xf32>,
    %c12_177 = arith.constant 12 : index
    %c0_178 = arith.constant 0 : index
    %444 = vector.load %arg14[%c12_177, %c0_178] : memref<16x256xf32, #tpu.memory_space<vmem>>, vector<2x128xf32>
    %c2_179 = arith.constant 2 : index
    %c128_180 = arith.constant 128 : index
    %445 = vector.load %arg14[%c2_179, %c128_180] : memref<16x256xf32, #tpu.memory_space<vmem>>, vector<2x128xf32>
    %446 = tpu.concatenate %444, %445 in 0 : vector<2x128xf32>, vector<2x128xf32> -> vector<4x128xf32>
    %447 = arith.truncf %439 : vector<4x32xf32> to vector<4x32xbf16>
    %cst_181 = arith.constant dense<0.000000e+00> : vector<4x256xf32>
    %448 = tpu.matmul %447, %267, %cst_181 {dimension_numbers = #tpu.dot_dimension_numbers<[1], [0], [0], [1], [0, 0, 1, 1], [], []>} : vector<4x32xbf16>, vector<32x256xbf16>, vector<4x256xf32> -> vector<4x256xf32>
    %449 = vector.extract_strided_slice %448 {offsets = [0, 0], sizes = [4, 128], strides = [1, 1]} : vector<4x256xf32> to vector<4x128xf32>
    %450 = vector.extract_strided_slice %448 {offsets = [0, 128], sizes = [4, 128], strides = [1, 1]} : vector<4x256xf32> to vector<4x128xf32>
    %451 = arith.select %2, %449, %450 : vector<4x128xi1>, vector<4x128xf32>
    %452 = arith.addf %446, %451 : vector<4x128xf32>
    %453 = arith.mulf %452, %11 : vector<4x128xf32>
    %454 = math.tanh %453 : vector<4x128xf32>
    %cst_182 = arith.constant 5.000000e-01 : f32
    %455 = vector.broadcast %cst_182 : f32 to vector<4x128xf32>
    %456 = arith.mulf %455, %454 : vector<4x128xf32>
    %cst_183 = arith.constant 5.000000e-01 : f32
    %457 = vector.broadcast %cst_183 : f32 to vector<4x128xf32>
    %458 = arith.addf %456, %457 : vector<4x128xf32>
    %459 = arith.select %8, %454, %458 : vector<4x128xi1>, vector<4x128xf32>
    %460 = vector.extract_strided_slice %459 {offsets = [0, 0], sizes = [4, 32], strides = [1, 1]} : vector<4x128xf32> to vector<4x32xf32>
    %461 = vector.extract_strided_slice %459 {offsets = [0, 32], sizes = [4, 32], strides = [1, 1]} : vector<4x128xf32> to vector<4x32xf32>
    %462 = vector.extract_strided_slice %459 {offsets = [0, 64], sizes = [4, 32], strides = [1, 1]} : vector<4x128xf32> to vector<4x32xf32>
    %463 = vector.extract_strided_slice %459 {offsets = [0, 96], sizes = [4, 32], strides = [1, 1]} : vector<4x128xf32> to vector<4x32xf32>
    %464 = arith.mulf %461, %437 : vector<4x32xf32>
    %465 = arith.mulf %460, %462 : vector<4x32xf32>
    %466 = arith.addf %464, %465 : vector<4x32xf32>
    %467 = math.tanh %466 : vector<4x32xf32>
    %468 = arith.mulf %463, %467 : vector<4x32xf32>
    %469 = vector.extract_strided_slice %468 {offsets = [0, 0], sizes = [2, 32], strides = [1, 1]} : vector<4x32xf32> to vector<2x32xf32>
    %c12_184 = arith.constant 12 : index
    %c0_185 = arith.constant 0 : index
    %470 = vector.load %arg15[%c12_184, %c0_185] : memref<16x32xf32, #tpu.memory_space<vmem>>, vector<2x32xf32>
    tpu.vector_store %arg15[%c12_184, %c0_185], %469 {strides = array<i32>} : memref<16x32xf32, #tpu.memory_space<vmem>>, vector<2x32xf32>,
    %471 = vector.extract_strided_slice %468 {offsets = [2, 0], sizes = [2, 32], strides = [1, 1]} : vector<4x32xf32> to vector<2x32xf32>
    %c2_186 = arith.constant 2 : index
    %c0_187 = arith.constant 0 : index
    %472 = vector.load %arg16[%c2_186, %c0_187] : memref<16x32xf32, #tpu.memory_space<vmem>>, vector<2x32xf32>
    tpu.vector_store %arg16[%c2_186, %c0_187], %471 {strides = array<i32>} : memref<16x32xf32, #tpu.memory_space<vmem>>, vector<2x32xf32>,
    %c14_188 = arith.constant 14 : index
    %c0_189 = arith.constant 0 : index
    %473 = vector.load %arg14[%c14_188, %c0_189] : memref<16x256xf32, #tpu.memory_space<vmem>>, vector<2x128xf32>
    %c0_190 = arith.constant 0 : index
    %c128_191 = arith.constant 128 : index
    %474 = vector.load %arg14[%c0_190, %c128_191] : memref<16x256xf32, #tpu.memory_space<vmem>>, vector<2x128xf32>
    %475 = tpu.concatenate %473, %474 in 0 : vector<2x128xf32>, vector<2x128xf32> -> vector<4x128xf32>
    %476 = arith.truncf %468 : vector<4x32xf32> to vector<4x32xbf16>
    %cst_192 = arith.constant dense<0.000000e+00> : vector<4x256xf32>
    %477 = tpu.matmul %476, %267, %cst_192 {dimension_numbers = #tpu.dot_dimension_numbers<[1], [0], [0], [1], [0, 0, 1, 1], [], []>} : vector<4x32xbf16>, vector<32x256xbf16>, vector<4x256xf32> -> vector<4x256xf32>
    %478 = vector.extract_strided_slice %477 {offsets = [0, 0], sizes = [4, 128], strides = [1, 1]} : vector<4x256xf32> to vector<4x128xf32>
    %479 = vector.extract_strided_slice %477 {offsets = [0, 128], sizes = [4, 128], strides = [1, 1]} : vector<4x256xf32> to vector<4x128xf32>
    %480 = arith.select %2, %478, %479 : vector<4x128xi1>, vector<4x128xf32>
    %481 = arith.addf %475, %480 : vector<4x128xf32>
    %482 = arith.mulf %481, %11 : vector<4x128xf32>
    %483 = math.tanh %482 : vector<4x128xf32>
    %cst_193 = arith.constant 5.000000e-01 : f32
    %484 = vector.broadcast %cst_193 : f32 to vector<4x128xf32>
    %485 = arith.mulf %484, %483 : vector<4x128xf32>
    %cst_194 = arith.constant 5.000000e-01 : f32
    %486 = vector.broadcast %cst_194 : f32 to vector<4x128xf32>
    %487 = arith.addf %485, %486 : vector<4x128xf32>
    %488 = arith.select %8, %483, %487 : vector<4x128xi1>, vector<4x128xf32>
    %489 = vector.extract_strided_slice %488 {offsets = [0, 0], sizes = [4, 32], strides = [1, 1]} : vector<4x128xf32> to vector<4x32xf32>
    %490 = vector.extract_strided_slice %488 {offsets = [0, 32], sizes = [4, 32], strides = [1, 1]} : vector<4x128xf32> to vector<4x32xf32>
    %491 = vector.extract_strided_slice %488 {offsets = [0, 64], sizes = [4, 32], strides = [1, 1]} : vector<4x128xf32> to vector<4x32xf32>
    %492 = vector.extract_strided_slice %488 {offsets = [0, 96], sizes = [4, 32], strides = [1, 1]} : vector<4x128xf32> to vector<4x32xf32>
    %493 = arith.mulf %490, %466 : vector<4x32xf32>
    %494 = arith.mulf %489, %491 : vector<4x32xf32>
    %495 = arith.addf %493, %494 : vector<4x32xf32>
    %496 = math.tanh %495 : vector<4x32xf32>
    %497 = arith.mulf %492, %496 : vector<4x32xf32>
    %498 = vector.extract_strided_slice %497 {offsets = [0, 0], sizes = [2, 32], strides = [1, 1]} : vector<4x32xf32> to vector<2x32xf32>
    %c14_195 = arith.constant 14 : index
    %c0_196 = arith.constant 0 : index
    %499 = vector.load %arg15[%c14_195, %c0_196] : memref<16x32xf32, #tpu.memory_space<vmem>>, vector<2x32xf32>
    tpu.vector_store %arg15[%c14_195, %c0_196], %498 {strides = array<i32>} : memref<16x32xf32, #tpu.memory_space<vmem>>, vector<2x32xf32>,
    %500 = vector.extract_strided_slice %497 {offsets = [2, 0], sizes = [2, 32], strides = [1, 1]} : vector<4x32xf32> to vector<2x32xf32>
    %c0_197 = arith.constant 0 : index
    %c0_198 = arith.constant 0 : index
    %501 = vector.load %arg16[%c0_197, %c0_198] : memref<16x32xf32, #tpu.memory_space<vmem>>, vector<2x32xf32>
    tpu.vector_store %arg16[%c0_197, %c0_198], %500 {strides = array<i32>} : memref<16x32xf32, #tpu.memory_space<vmem>>, vector<2x32xf32>,
    %c0_199 = arith.constant 0 : index
    %c0_200 = arith.constant 0 : index
    %502 = vector.load %arg15[%c0_199, %c0_200] : memref<16x32xf32, #tpu.memory_space<vmem>>, vector<16x32xf32>
    %503 = arith.truncf %502 : vector<16x32xf32> to vector<16x32xbf16>
    %c0_201 = arith.constant 0 : index
    %c0_202 = arith.constant 0 : index
    %504 = vector.load %arg8[%c0_201, %c0_202] : memref<32x32xbf16, #tpu.memory_space<vmem>>, vector<32x32xbf16>
    %cst_203 = arith.constant dense<0.000000e+00> : vector<16x32xf32>
    %505 = tpu.matmul %503, %504, %cst_203 {dimension_numbers = #tpu.dot_dimension_numbers<[1], [0], [0], [1], [0, 0, 1, 1], [], []>} : vector<16x32xbf16>, vector<32x32xbf16>, vector<16x32xf32> -> vector<16x32xf32>
    %c0_204 = arith.constant 0 : index
    %c0_205 = arith.constant 0 : index
    %506 = vector.load %arg16[%c0_204, %c0_205] : memref<16x32xf32, #tpu.memory_space<vmem>>, vector<16x32xf32>
    %507 = arith.truncf %506 : vector<16x32xf32> to vector<16x32xbf16>
    %c0_206 = arith.constant 0 : index
    %c0_207 = arith.constant 0 : index
    %508 = vector.load %arg9[%c0_206, %c0_207] : memref<32x32xbf16, #tpu.memory_space<vmem>>, vector<32x32xbf16>
    %cst_208 = arith.constant dense<0.000000e+00> : vector<16x32xf32>
    %509 = tpu.matmul %507, %508, %cst_208 {dimension_numbers = #tpu.dot_dimension_numbers<[1], [0], [0], [1], [0, 0, 1, 1], [], []>} : vector<16x32xbf16>, vector<32x32xbf16>, vector<16x32xf32> -> vector<16x32xf32>
    %510 = arith.addf %505, %509 : vector<16x32xf32>
    %c0_209 = arith.constant 0 : index
    %c0_210 = arith.constant 0 : index
    %511 = vector.load %arg10[%c0_209, %c0_210] : memref<1x32xf32, #tpu.memory_space<vmem>>, vector<1x32xf32>
    %512 = vector.broadcast %511 : vector<1x32xf32> to vector<16x32xf32>
    %513 = arith.addf %510, %512 : vector<16x32xf32>
    %cst_211 = arith.constant 0.000000e+00 : f32
    %514 = vector.broadcast %cst_211 : f32 to vector<16x32xf32>
    %515 = arith.maximumf %513, %514 : vector<16x32xf32>
    %516 = arith.truncf %515 : vector<16x32xf32> to vector<16x32xbf16>
    %c0_212 = arith.constant 0 : index
    %c0_213 = arith.constant 0 : index
    %517 = vector.load %arg11[%c0_212, %c0_213] : memref<32x32xbf16, #tpu.memory_space<vmem>>, vector<32x32xbf16>
    %cst_214 = arith.constant dense<0.000000e+00> : vector<16x32xf32>
    %518 = tpu.matmul %516, %517, %cst_214 {dimension_numbers = #tpu.dot_dimension_numbers<[1], [0], [0], [1], [0, 0, 1, 1], [], []>} : vector<16x32xbf16>, vector<32x32xbf16>, vector<16x32xf32> -> vector<16x32xf32>
    %c0_215 = arith.constant 0 : index
    %c0_216 = arith.constant 0 : index
    %519 = vector.load %arg12[%c0_215, %c0_216] : memref<1x32xf32, #tpu.memory_space<vmem>>, vector<1x32xf32>
    %520 = vector.broadcast %519 : vector<1x32xf32> to vector<16x32xf32>
    %521 = arith.addf %518, %520 : vector<16x32xf32>
    %c0_217 = arith.constant 0 : index
    %c0_218 = arith.constant 0 : index
    %522 = vector.load %arg13[%c0_217, %c0_218] : memref<16x32xf32, #tpu.memory_space<vmem>>, vector<16x32xf32>
    tpu.vector_store %arg13[%c0_217, %c0_218], %521 {strides = array<i32>} : memref<16x32xf32, #tpu.memory_space<vmem>>, vector<16x32xf32>,
    return
  }
}

</mosaic_0001>

<llo_original>
// kernel: tpu_custom_call.1
$region0: #{tpu_custom_call.1}
  #allocation0 [shape = 'u32[]', space=smem, size = 0x4, offset = 0x4, fixed_abs, tag = 'smem constant byte address 0x4 - core index']
  #allocation1 [shape = 'u32[144,128]{1,0:T(1,128)}', space=vmem, size = 0x12000, scoped, tag = 'internal scratch']
  #allocation2 [shape = 'f32[16,256]{1,0:T(8,128)}', space=vmem, size = 0x4000, scoped, tag = 'scratch operand']
  #allocation3 [shape = 'f32[16,32]{1,0:T(8,128)}', space=vmem, size = 0x2000, scoped, tag = 'scratch operand']
  #allocation4 [shape = 'f32[16,32]{1,0:T(8,128)}', space=vmem, size = 0x2000, scoped, tag = 'scratch operand']
  %s0 = inlined_call_operand.hbm [shape: bf16[16,32], index: 0, kind: input, shape index: {}]
  %s1 = inlined_call_operand.hbm [shape: bf16[32,256], index: 1, kind: input, shape index: {}]
  %s2 = inlined_call_operand.hbm [shape: bf16[32,256], index: 2, kind: input, shape index: {}]
  %s3 = inlined_call_operand.vmem [shape: f32[1,256], index: 3, kind: input, shape index: {}]
  %s4 = inlined_call_operand.hbm [shape: bf16[32,256], index: 4, kind: input, shape index: {}]
  %s5 = inlined_call_operand.hbm [shape: bf16[32,256], index: 5, kind: input, shape index: {}]
  %s6 = inlined_call_operand.hbm [shape: bf16[32,256], index: 6, kind: input, shape index: {}]
  %s7 = inlined_call_operand.hbm [shape: f32[1,256], index: 7, kind: input, shape index: {}]
  %s8 = inlined_call_operand.vmem [shape: bf16[32,32], index: 8, kind: input, shape index: {}]
  %s9 = inlined_call_operand.vmem [shape: bf16[32,32], index: 9, kind: input, shape index: {}]
  %s10 = inlined_call_operand.vmem [shape: f32[1,32], index: 10, kind: input, shape index: {}]
  %s11 = inlined_call_operand.hbm [shape: bf16[32,32], index: 11, kind: input, shape index: {}]
  %s12 = inlined_call_operand.vmem [shape: f32[1,32], index: 12, kind: input, shape index: {}]
  %s13 = inlined_call_operand.hbm [shape: f32[16,32], index: 13, kind: output, shape index: {}]
  %s14 = sld [smem:[#allocation0]]
  $region94: #{tpu_custom_call.1} parent=0
    _
  %s16 = ssub.s32 1, %s14
  %s17 = scalar_select 0, %s16, %s14
  $region1: #{tpu_custom_call.1} parent=0
    #allocation5 [shape = 'u8[4096]{0}', space=vmem, size = 0x1000, scoped, tag = 'input window, operand 0, single buffered']
    #allocation6 [shape = 's32[1]{0}', space=sflag, size = 0x4, scoped, tag = 'scoped memory for tpu_custom_call.1']
    #allocation7 [shape = 's32[1]{0}', space=sflag, size = 0x4, scoped, tag = 'scoped memory for tpu_custom_call.1']
    #allocation8 [shape = 'u8[16384]{0}', space=vmem, size = 0x4000, scoped, tag = 'input window, operand 1, single buffered']
    #allocation9 [shape = 's32[1]{0}', space=sflag, size = 0x4, scoped, tag = 'scoped memory for tpu_custom_call.1']
    #allocation10 [shape = 'u8[16384]{0}', space=vmem, size = 0x4000, scoped, tag = 'input window, operand 2, single buffered']
    #allocation11 [shape = 'u8[16384]{0}', space=vmem, size = 0x4000, scoped, tag = 'input window, operand 4, single buffered']
    #allocation12 [shape = 's32[1]{0}', space=sflag, size = 0x4, scoped, tag = 'scoped memory for tpu_custom_call.1']
    #allocation13 [shape = 'u8[16384]{0}', space=vmem, size = 0x4000, scoped, tag = 'input window, operand 5, single buffered']
    #allocation14 [shape = 'u8[16384]{0}', space=vmem, size = 0x4000, scoped, tag = 'input window, operand 6, single buffered']
    #allocation15 [shape = 's32[1]{0}', space=sflag, size = 0x4, scoped, tag = 'scoped memory for tpu_custom_call.1']
    #allocation16 [shape = 'u8[1024]{0}', space=vmem, size = 0x400, scoped, tag = 'input window, operand 7, single buffered']
    #allocation17 [shape = 'u8[8192]{0}', space=vmem, size = 0x2000, scoped, tag = 'input window, operand 11, single buffered']
    #allocation18 [shape = 's32[1]{0}', space=sflag, size = 0x4, scoped, tag = 'scoped memory for tpu_custom_call.1']
    #allocation19 [shape = 'u8[8192]{0}', space=vmem, size = 0x2000, scoped, tag = 'output window, operand 0, single buffered']
    %18 = vsyncpa [#allocation6], 0
    %19 = vsyncpa [#allocation9], 0
    %20 = vsyncpa [#allocation12], 0
    %21 = vsyncpa [#allocation15], 0
    %22 = vsyncpa [#allocation18], 0
    %23 = vsyncpa [#allocation7], 0
    // Predicated region
    $region2: #{tpu_custom_call.1} parent=1 // pred_check
      _
    $region3: #{tpu_custom_call.1} parent=1 // pred_check_branch
      %25 = sbr.rel (0) target = $region5
    $region4: #{tpu_custom_call.1} parent=1 // pred_region
      %s27 = ssub.s32 128, 128
      %28 = vsyncadd [#allocation6], %s27
      %s29 = sshll.u32 [#allocation5], 4
      %s30 = int_to_ptr.vmem [resolvable:$true] %s29
      %35 = dma.hbm_to_vmem [thread:$0]  %s0, 128, %s30, [#allocation6], 64, 64, 4
    $region5: #{tpu_custom_call.1} parent=1 // pred_fallthru
      _
    // Predicated region
    $region6: #{tpu_custom_call.1} parent=1 // pred_check
      _
    $region7: #{tpu_custom_call.1} parent=1 // pred_check_branch
      %37 = sbr.rel (0) target = $region9
    $region8: #{tpu_custom_call.1} parent=1 // pred_region
      %s39 = ssub.s32 512, 512
      %40 = vsyncadd [#allocation9], %s39
      %s41 = sshll.u32 [#allocation8], 4
      %s42 = int_to_ptr.vmem [resolvable:$true] %s41
      %47 = dma.hbm_to_vmem [thread:$0]  %s1, 512, %s42, [#allocation9], 128, 128, 8
    $region9: #{tpu_custom_call.1} parent=1 // pred_fallthru
      _
    // Predicated region
    $region10: #{tpu_custom_call.1} parent=1 // pred_check
      _
    $region11: #{tpu_custom_call.1} parent=1 // pred_check_branch
      %49 = sbr.rel (0) target = $region13
    $region12: #{tpu_custom_call.1} parent=1 // pred_region
      %s51 = ssub.s32 512, 512
      %52 = vsyncadd [#allocation9], %s51
      %s53 = sshll.u32 [#allocation10], 4
      %s54 = int_to_ptr.vmem [resolvable:$true] %s53
      %59 = dma.hbm_to_vmem [thread:$0]  %s2, 512, %s54, [#allocation9], 128, 128, 8
    $region13: #{tpu_custom_call.1} parent=1 // pred_fallthru
      _
    // Predicated region
    $region14: #{tpu_custom_call.1} parent=1 // pred_check
      _
    $region15: #{tpu_custom_call.1} parent=1 // pred_check_branch
      %61 = sbr.rel (0) target = $region17
    $region16: #{tpu_custom_call.1} parent=1 // pred_region
      _
    $region17: #{tpu_custom_call.1} parent=1 // pred_fallthru
      _
    // Predicated region
    $region18: #{tpu_custom_call.1} parent=1 // pred_check
      _
    $region19: #{tpu_custom_call.1} parent=1 // pred_check_branch
      %63 = sbr.rel (0) target = $region21
    $region20: #{tpu_custom_call.1} parent=1 // pred_region
      %s65 = ssub.s32 512, 512
      %66 = vsyncadd [#allocation12], %s65
      %s67 = sshll.u32 [#allocation11], 4
      %s68 = int_to_ptr.vmem [resolvable:$true] %s67
      %73 = dma.hbm_to_vmem [thread:$0]  %s4, 512, %s68, [#allocation12], 128, 128, 8
    $region21: #{tpu_custom_call.1} parent=1 // pred_fallthru
      _
    // Predicated region
    $region22: #{tpu_custom_call.1} parent=1 // pred_check
      _
    $region23: #{tpu_custom_call.1} parent=1 // pred_check_branch
      %75 = sbr.rel (0) target = $region25
    $region24: #{tpu_custom_call.1} parent=1 // pred_region
      %s77 = ssub.s32 512, 512
      %78 = vsyncadd [#allocation12], %s77
      %s79 = sshll.u32 [#allocation13], 4
      %s80 = int_to_ptr.vmem [resolvable:$true] %s79
      %85 = dma.hbm_to_vmem [thread:$0]  %s5, 512, %s80, [#allocation12], 128, 128, 8
    $region25: #{tpu_custom_call.1} parent=1 // pred_fallthru
      _
    // Predicated region
    $region26: #{tpu_custom_call.1} parent=1 // pred_check
      _
    $region27: #{tpu_custom_call.1} parent=1 // pred_check_branch
      %87 = sbr.rel (0) target = $region29
    $region28: #{tpu_custom_call.1} parent=1 // pred_region
      %s89 = ssub.s32 512, 512
      %90 = vsyncadd [#allocation15], %s89
      %s91 = sshll.u32 [#allocation14], 4
      %s92 = int_to_ptr.vmem [resolvable:$true] %s91
      %97 = dma.hbm_to_vmem [thread:$0]  %s6, 512, %s92, [#allocation15], 128, 128, 8
    $region29: #{tpu_custom_call.1} parent=1 // pred_fallthru
      _
    // Predicated region
    $region30: #{tpu_custom_call.1} parent=1 // pred_check
      _
    $region31: #{tpu_custom_call.1} parent=1 // pred_check_branch
      %99 = sbr.rel (0) target = $region33
    $region32: #{tpu_custom_call.1} parent=1 // pred_region
      %s101 = ssub.s32 32, 32
      %102 = vsyncadd [#allocation15], %s101
      %s104 = sshll.u32 [#allocation16], 4
      %s105 = int_to_ptr.vmem [resolvable:$true] %s104
      %107 = dma.hbm_to_vmem [thread:$0]  %s7, 32, %s105, [#allocation15]
    $region33: #{tpu_custom_call.1} parent=1 // pred_fallthru
      _
    // Predicated region
    $region34: #{tpu_custom_call.1} parent=1 // pred_check
      _
    $region35: #{tpu_custom_call.1} parent=1 // pred_check_branch
      %109 = sbr.rel (0) target = $region37
    $region36: #{tpu_custom_call.1} parent=1 // pred_region
      _
    $region37: #{tpu_custom_call.1} parent=1 // pred_fallthru
      _
    // Predicated region
    $region38: #{tpu_custom_call.1} parent=1 // pred_check
      _
    $region39: #{tpu_custom_call.1} parent=1 // pred_check_branch
      %111 = sbr.rel (0) target = $region41
    $region40: #{tpu_custom_call.1} parent=1 // pred_region
      _
    $region41: #{tpu_custom_call.1} parent=1 // pred_fallthru
      _
    // Predicated region
    $region42: #{tpu_custom_call.1} parent=1 // pred_check
      _
    $region43: #{tpu_custom_call.1} parent=1 // pred_check_branch
      %113 = sbr.rel (0) target = $region45
    $region44: #{tpu_custom_call.1} parent=1 // pred_region
      _
    $region45: #{tpu_custom_call.1} parent=1 // pred_fallthru
      _
    // Predicated region
    $region46: #{tpu_custom_call.1} parent=1 // pred_check
      _
    $region47: #{tpu_custom_call.1} parent=1 // pred_check_branch
      %115 = sbr.rel (0) target = $region49
    $region48: #{tpu_custom_call.1} parent=1 // pred_region
      %s117 = ssub.s32 256, 256
      %118 = vsyncadd [#allocation18], %s117
      %s119 = sshll.u32 [#allocation17], 4
      %s120 = int_to_ptr.vmem [resolvable:$true] %s119
      %125 = dma.hbm_to_vmem [thread:$0]  %s11, 256, %s120, [#allocation18], 64, 64, 4
    $region49: #{tpu_custom_call.1} parent=1 // pred_fallthru
      _
    // Predicated region
    $region50: #{tpu_custom_call.1} parent=1 // pred_check
      _
    $region51: #{tpu_custom_call.1} parent=1 // pred_check_branch
      %127 = sbr.rel (0) target = $region53
    $region52: #{tpu_custom_call.1} parent=1 // pred_region
      _
    $region53: #{tpu_custom_call.1} parent=1 // pred_fallthru
      _
    // Predicated region
    $region54: #{tpu_custom_call.1} parent=1 // pred_check
      _
    $region55: #{tpu_custom_call.1} parent=1 // pred_check_branch
      %129 = sbr.rel (0) target = $region57
    $region56: #{tpu_custom_call.1} parent=1 // pred_region
      %130 = dma.done [#allocation6], 128
    $region57: #{tpu_custom_call.1} parent=1 // pred_fallthru
      _
    // Predicated region
    $region58: #{tpu_custom_call.1} parent=1 // pred_check
      _
    $region59: #{tpu_custom_call.1} parent=1 // pred_check_branch
      %132 = sbr.rel (0) target = $region61
    $region60: #{tpu_custom_call.1} parent=1 // pred_region
      %133 = dma.done [#allocation9], 512
    $region61: #{tpu_custom_call.1} parent=1 // pred_fallthru
      _
    // Predicated region
    $region62: #{tpu_custom_call.1} parent=1 // pred_check
      _
    $region63: #{tpu_custom_call.1} parent=1 // pred_check_branch
      %135 = sbr.rel (0) target = $region65
    $region64: #{tpu_custom_call.1} parent=1 // pred_region
      %136 = dma.done [#allocation9], 512
    $region65: #{tpu_custom_call.1} parent=1 // pred_fallthru
      _
    // Predicated region
    $region66: #{tpu_custom_call.1} parent=1 // pred_check
      _
    $region67: #{tpu_custom_call.1} parent=1 // pred_check_branch
      %138 = sbr.rel (0) target = $region69
    $region68: #{tpu_custom_call.1} parent=1 // pred_region
      %139 = dma.done [#allocation12], 512
    $region69: #{tpu_custom_call.1} parent=1 // pred_fallthru
      _
    // Predicated region
    $region70: #{tpu_custom_call.1} parent=1 // pred_check
      _
    $region71: #{tpu_custom_call.1} parent=1 // pred_check_branch
      %141 = sbr.rel (0) target = $region73
    $region72: #{tpu_custom_call.1} parent=1 // pred_region
      %142 = dma.done [#allocation12], 512
    $region73: #{tpu_custom_call.1} parent=1 // pred_fallthru
      _
    // Predicated region
    $region74: #{tpu_custom_call.1} parent=1 // pred_check
      _
    $region75: #{tpu_custom_call.1} parent=1 // pred_check_branch
      %144 = sbr.rel (0) target = $region77
    $region76: #{tpu_custom_call.1} parent=1 // pred_region
      %145 = dma.done [#allocation15], 512
    $region77: #{tpu_custom_call.1} parent=1 // pred_fallthru
      _
    // Predicated region
    $region78: #{tpu_custom_call.1} parent=1 // pred_check
      _
    $region79: #{tpu_custom_call.1} parent=1 // pred_check_branch
      %147 = sbr.rel (0) target = $region81
    $region80: #{tpu_custom_call.1} parent=1 // pred_region
      %148 = dma.done [#allocation15], 32
    $region81: #{tpu_custom_call.1} parent=1 // pred_fallthru
      _
    // Predicated region
    $region82: #{tpu_custom_call.1} parent=1 // pred_check
      _
    $region83: #{tpu_custom_call.1} parent=1 // pred_check_branch
      %150 = sbr.rel (0) target = $region85
    $region84: #{tpu_custom_call.1} parent=1 // pred_region
      %151 = dma.done [#allocation18], 256
    $region85: #{tpu_custom_call.1} parent=1 // pred_fallthru
      _
    %v153 = vlaneseq
    %v154 = vshrl.u32 %v153, 7
    %vm155 = vcmp.lt.s32.totalorder %v154, 2
    %v156 = vlaneseq
    %v157 = vand.u32 %v156, 127
    %vm158 = vcmp.ge.s32.totalorder %v157, 64
    %vm159 = vcmp.lt.s32.totalorder %v157, 96
    %vm160 = vmand %vm158, %vm159
    %v161 = vsel %vm160, 1.0, 0.5
    %v162 = vld [vmem:[#allocation5] sm:$0xf]
    %v163 = vld [vmem:[#allocation5 + $0x4] sm:$0xf]
    %v164 = vld [vmem:[#allocation8] sm:$0xff]
    %v165 = vld [vmem:[#allocation8 + $0x8] sm:$0xff]
    %v166 = vld [vmem:[#allocation8 + $0x10] sm:$0xff]
    %v167 = vld [vmem:[#allocation8 + $0x18] sm:$0xff]
    %v168 = vld [vmem:[%s3] sm:$0x3]
    %v170 = vlaneseq
    %v171 = vshrl.u32 %v170, 7
    %v172 = vsub.s32 0, %v171
    %v173 = vrot.slane %v168, %v172
    %v174 = vlaneseq
    %v175 = vshrl.u32 %v174, 7
    %v176 = vsub.s32 1, %v175
    %v177 = vrot.slane %v168, %v176
    %v182 = vunpack.c.l.b16 %v162
    %v183 = vunpack.c.l.b16 %v163
    %v184 = vpack.c.b16 %v183, %v182
    %v189 = vunpack.c.l.b16 %v164
    %v190 = vunpack.c.h.b16 %v164
    %v191 = vunpack.c.l.b16 %v165
    %v192 = vunpack.c.h.b16 %v165
    %v193 = vunpack.c.l.b16 %v166
    %v194 = vunpack.c.h.b16 %v166
    %v195 = vunpack.c.l.b16 %v167
    %v196 = vunpack.c.h.b16 %v167
    %v197 = vpack.c.b16 %v191, %v189
    %v198 = vpack.c.b16 %v192, %v190
    %v199 = vpack.c.b16 %v195, %v193
    %v200 = vpack.c.b16 %v196, %v194
    %vm205 = vcmask 261120
    %v207 = vsel %vm205, %v184, 0
    %209 = vmatprep.subr.bf16.mxu0 %v198
    %210 = vmatpush1.bf16.msra.mxu0 %v197
    %211 = vmatprep.subr.bf16.mxu0 %v200
    %212 = vmatpush1.bf16.msra.mxu0 %v199
    %213 = vmatprep.subr.bf16.mxu0 0
    %214 = vmatpush1.bf16.msra.mxu0 0
    %215 = vmatprep.subr.bf16.mxu0 0
    %216 = vmatpush1.bf16.msra.mxu0 0
    %217 = vmatprep.subr.bf16.mxu0 0
    %218 = vmatpush1.bf16.msra.mxu0 0
    %219 = vmatprep.subr.bf16.mxu0 0
    %220 = vmatpush1.bf16.msra.mxu0 0
    %221 = vmatprep.subr.bf16.mxu0 0
    %222 = vmatpush1.bf16.msra.mxu0 0
    %223 = vmatprep.subr.bf16.mxu0 0
    %224 = vmatpush1.bf16.msra.mxu0 0
    %225 = vmatprep.subr.bf16.mxu0 0
    %226 = vmatpush1.bf16.msra.mxu0 0
    %227 = vmatprep.subr.bf16.mxu0 0
    %228 = vmatpush1.bf16.msra.mxu0 0
    %229 = vmatprep.subr.bf16.mxu0 0
    %230 = vmatpush1.bf16.msra.mxu0 0
    %231 = vmatprep.subr.bf16.mxu0 0
    %232 = vmatpush1.bf16.msra.mxu0 0
    %233 = vmatprep.subr.bf16.mxu0 0
    %234 = vmatpush1.bf16.msra.mxu0 0
    %235 = vmatprep.subr.bf16.mxu0 0
    %236 = vmatpush1.bf16.msra.mxu0 0
    %237 = vmatprep.subr.bf16.mxu0 0
    %238 = vmatpush1.bf16.msra.mxu0 0
    %239 = vmatprep.subr.bf16.mxu0 0
    %240 = vmatpush1.bf16.msra.mxu0 0
    %241 = vmatprep.mubr.bf16.mxu0 0
    %242 = vmatmul.mubr.bf16.gmra.mrb[0].mxu0 %v207
    %v243 = vpop.f32.mrb[0].mxu0
    %v244 = vadd.f32 %v173, %v243
    %v245 = vpop.f32.mrb[0].mxu0
    %v246 = vadd.f32 %v177, %v245
    %v247 = vpop.f32.mrb[0].mxu0
    %v248 = vadd.f32 %v173, %v247
    %v249 = vpop.f32.mrb[0].mxu0
    %v250 = vadd.f32 %v177, %v249
    %251 = vdwg.mxu0
    %252 = vst [vmem:[#allocation2] sm:$0xff] %v244
    %253 = vst [vmem:[#allocation2 + $0x8] sm:$0xff] %v246
    %254 = vst [vmem:[#allocation2 + $0x10] sm:$0xff] %v248
    %255 = vst [vmem:[#allocation2 + $0x18] sm:$0xff] %v250
    %v256 = vld [vmem:[#allocation10] sm:$0xff]
    %v257 = vld [vmem:[#allocation10 + $0x8] sm:$0xff]
    %v258 = vld [vmem:[#allocation10 + $0x10] sm:$0xff]
    %v259 = vld [vmem:[#allocation10 + $0x18] sm:$0xff]
    %v260 = vld [vmem:[#allocation2] sm:$0x3]
    %v261 = vld [vmem:[#allocation2 + $0x18] sm:$0xc0]
    %v263 = vrot.slane %v261, 4
    %vm265 = vcmask 1041408
    %v266 = vsel %vm265, %v260, %v263
    %v271 = vunpack.c.l.b16 %v256
    %v272 = vunpack.c.h.b16 %v256
    %v273 = vunpack.c.l.b16 %v257
    %v274 = vunpack.c.h.b16 %v257
    %v275 = vunpack.c.l.b16 %v258
    %v276 = vunpack.c.h.b16 %v258
    %v277 = vunpack.c.l.b16 %v259
    %v278 = vunpack.c.h.b16 %v259
    %v279 = vpack.c.b16 %v273, %v271
    %v280 = vpack.c.b16 %v274, %v272
    %v281 = vpack.c.b16 %v277, %v275
    %v282 = vpack.c.b16 %v278, %v276
    %v288 = vsel %vm205, 0, 0
    %290 = vmatprep.subr.bf16.mxu0 %v280
    %291 = vmatpush1.bf16.msra.mxu0 %v279
    %292 = vmatprep.subr.bf16.mxu0 %v282
    %293 = vmatpush1.bf16.msra.mxu0 %v281
    %294 = vmatprep.subr.bf16.mxu0 0
    %295 = vmatpush1.bf16.msra.mxu0 0
    %296 = vmatprep.subr.bf16.mxu0 0
    %297 = vmatpush1.bf16.msra.mxu0 0
    %298 = vmatprep.subr.bf16.mxu0 0
    %299 = vmatpush1.bf16.msra.mxu0 0
    %300 = vmatprep.subr.bf16.mxu0 0
    %301 = vmatpush1.bf16.msra.mxu0 0
    %302 = vmatprep.subr.bf16.mxu0 0
    %303 = vmatpush1.bf16.msra.mxu0 0
    %304 = vmatprep.subr.bf16.mxu0 0
    %305 = vmatpush1.bf16.msra.mxu0 0
    %306 = vmatprep.subr.bf16.mxu0 0
    %307 = vmatpush1.bf16.msra.mxu0 0
    %308 = vmatprep.subr.bf16.mxu0 0
    %309 = vmatpush1.bf16.msra.mxu0 0
    %310 = vmatprep.subr.bf16.mxu0 0
    %311 = vmatpush1.bf16.msra.mxu0 0
    %312 = vmatprep.subr.bf16.mxu0 0
    %313 = vmatpush1.bf16.msra.mxu0 0
    %314 = vmatprep.subr.bf16.mxu0 0
    %315 = vmatpush1.bf16.msra.mxu0 0
    %316 = vmatprep.subr.bf16.mxu0 0
    %317 = vmatpush1.bf16.msra.mxu0 0
    %318 = vmatprep.subr.bf16.mxu0 0
    %319 = vmatpush1.bf16.msra.mxu0 0
    %320 = vmatprep.subr.bf16.mxu0 0
    %321 = vmatpush1.bf16.msra.mxu0 0
    %322 = vmatprep.mubr.bf16.mxu0 0
    %323 = vmatmul.mubr.bf16.gmra.mrb[0].mxu0 %v288
    %v324 = vpop.f32.mrb[0].mxu0
    %v325 = vadd.f32 0.0, %v324
    %v326 = vpop.f32.mrb[0].mxu0
    %v327 = vadd.f32 0.0, %v326
    %v328 = vpop.f32.mrb[0].mxu0
    %v329 = vpop.f32.mrb[0].mxu0
    %330 = vdwg.mxu0
    %v331 = vsel %vm155, %v325, %v327
    %v332 = vadd.f32 %v266, %v331
    %v333 = vmul.f32 %v332, %v161
    %v334 = vtanh.pop %v333
    %v335 = vmul.f32 %v334, 0.5
    %v336 = vadd.f32 %v335, 0.5
    %v337 = vsel %vm160, %v334, %v336
    %v338 = vmul.f32 %v337, 0.0
    %340 = vrot.lane.b32.xlu0 %v337, 64
    %v341 = vpop.permute.xlu0 %340
    %v343 = vmul.f32 %v337, %v341
    %345 = vrot.lane.b32.xlu0 %v343, 32
    %v346 = vpop.permute.xlu0 %345
    %v348 = vadd.f32 %v338, %v346
    %v349 = vtanh.pop %v348
    %351 = vrot.lane.b32.xlu0 %v349, 64
    %v352 = vpop.permute.xlu0 %351
    %v354 = vmul.f32 %v337, %v352
    %356 = vrot.lane.b32.xlu0 %v354, 32
    %v357 = vpop.permute.xlu0 %356
    %vm359 = vcmask 254976
    %360 = vst.msk [vmem:[#allocation3] sm:$0x3] %vm359, %v357
    %vm361 = vcmask 257026
    %362 = vst.msk [vmem:[#allocation4 + $0xc] sm:$0xc] %vm361, %v357
    %v363 = vld [vmem:[#allocation2] sm:$0xc]
    %v364 = vld [vmem:[#allocation2 + $0x18] sm:$0x30]
    %v366 = vrot.slane %v363, 2
    %v369 = vrot.slane %v364, 2
    %v371 = vsel %vm265, %v366, %v369
    %v372 = vpack.c.bf16 %v354, %v354
    %374 = vrot.lane.b32.xlu0 %v372, 32
    %v375 = vpop.permute.xlu0 %374
    %v377 = vsel %vm205, %v375, 0
    %379 = vmatprep.subr.bf16.mxu0 %v280
    %380 = vmatpush1.bf16.msra.mxu0 %v279
    %381 = vmatprep.subr.bf16.mxu0 %v282
    %382 = vmatpush1.bf16.msra.mxu0 %v281
    %383 = vmatprep.subr.bf16.mxu0 0
    %384 = vmatpush1.bf16.msra.mxu0 0
    %385 = vmatprep.subr.bf16.mxu0 0
    %386 = vmatpush1.bf16.msra.mxu0 0
    %387 = vmatprep.subr.bf16.mxu0 0
    %388 = vmatpush1.bf16.msra.mxu0 0
    %389 = vmatprep.subr.bf16.mxu0 0
    %390 = vmatpush1.bf16.msra.mxu0 0
    %391 = vmatprep.subr.bf16.mxu0 0
    %392 = vmatpush1.bf16.msra.mxu0 0
    %393 = vmatprep.subr.bf16.mxu0 0
    %394 = vmatpush1.bf16.msra.mxu0 0
    %395 = vmatprep.subr.bf16.mxu0 0
    %396 = vmatpush1.bf16.msra.mxu0 0
    %397 = vmatprep.subr.bf16.mxu0 0
    %398 = vmatpush1.bf16.msra.mxu0 0
    %399 = vmatprep.subr.bf16.mxu0 0
    %400 = vmatpush1.bf16.msra.mxu0 0
    %401 = vmatprep.subr.bf16.mxu0 0
    %402 = vmatpush1.bf16.msra.mxu0 0
    %403 = vmatprep.subr.bf16.mxu0 0
    %404 = vmatpush1.bf16.msra.mxu0 0
    %405 = vmatprep.subr.bf16.mxu0 0
    %406 = vmatpush1.bf16.msra.mxu0 0
    %407 = vmatprep.subr.bf16.mxu0 0
    %408 = vmatpush1.bf16.msra.mxu0 0
    %409 = vmatprep.subr.bf16.mxu0 0
    %410 = vmatpush1.bf16.msra.mxu0 0
    %411 = vmatprep.mubr.bf16.mxu0 0
    %412 = vmatmul.mubr.bf16.gmra.mrb[0].mxu0 %v377
    %v413 = vpop.f32.mrb[0].mxu0
    %v414 = vadd.f32 0.0, %v413
    %v415 = vpop.f32.mrb[0].mxu0
    %v416 = vadd.f32 0.0, %v415
    %v417 = vpop.f32.mrb[0].mxu0
    %v418 = vpop.f32.mrb[0].mxu0
    %419 = vdwg.mxu0
    %v420 = vsel %vm155, %v414, %v416
    %v421 = vadd.f32 %v371, %v420
    %v422 = vmul.f32 %v421, %v161
    %v423 = vtanh.pop %v422
    %v424 = vmul.f32 %v423, 0.5
    %v425 = vadd.f32 %v424, 0.5
    %v426 = vsel %vm160, %v423, %v425
    %v427 = vmul.f32 %v426, %v348
    %429 = vrot.lane.b32.xlu0 %v426, 64
    %v430 = vpop.permute.xlu0 %429
    %v432 = vmul.f32 %v426, %v430
    %434 = vrot.lane.b32.xlu0 %v432, 32
    %v435 = vpop.permute.xlu0 %434
    %v437 = vadd.f32 %v427, %v435
    %v438 = vtanh.pop %v437
    %440 = vrot.lane.b32.xlu0 %v438, 64
    %v441 = vpop.permute.xlu0 %440
    %v443 = vmul.f32 %v426, %v441
    %445 = vrot.lane.b32.xlu0 %v443, 32
    %v446 = vpop.permute.xlu0 %445
    %448 = vst.msk [vmem:[#allocation3 + $0x2] sm:$0x3] %vm359, %v446
    %449 = vst.msk [vmem:[#allocation4 + $0xa] sm:$0xc] %vm361, %v446
    %v450 = vld [vmem:[#allocation2] sm:$0x30]
    %v451 = vld [vmem:[#allocation2 + $0x18] sm:$0xc]
    %v453 = vrot.slane %v450, 4
    %v455 = vsel %vm265, %v453, %v451
    %v456 = vpack.c.bf16 %v443, %v443
    %458 = vrot.lane.b32.xlu0 %v456, 32
    %v459 = vpop.permute.xlu0 %458
    %v461 = vsel %vm205, %v459, 0
    %463 = vmatprep.subr.bf16.mxu0 %v280
    %464 = vmatpush1.bf16.msra.mxu0 %v279
    %465 = vmatprep.subr.bf16.mxu0 %v282
    %466 = vmatpush1.bf16.msra.mxu0 %v281
    %467 = vmatprep.subr.bf16.mxu0 0
    %468 = vmatpush1.bf16.msra.mxu0 0
    %469 = vmatprep.subr.bf16.mxu0 0
    %470 = vmatpush1.bf16.msra.mxu0 0
    %471 = vmatprep.subr.bf16.mxu0 0
    %472 = vmatpush1.bf16.msra.mxu0 0
    %473 = vmatprep.subr.bf16.mxu0 0
    %474 = vmatpush1.bf16.msra.mxu0 0
    %475 = vmatprep.subr.bf16.mxu0 0
    %476 = vmatpush1.bf16.msra.mxu0 0
    %477 = vmatprep.subr.bf16.mxu0 0
    %478 = vmatpush1.bf16.msra.mxu0 0
    %479 = vmatprep.subr.bf16.mxu0 0
    %480 = vmatpush1.bf16.msra.mxu0 0
    %481 = vmatprep.subr.bf16.mxu0 0
    %482 = vmatpush1.bf16.msra.mxu0 0
    %483 = vmatprep.subr.bf16.mxu0 0
    %484 = vmatpush1.bf16.msra.mxu0 0
    %485 = vmatprep.subr.bf16.mxu0 0
    %486 = vmatpush1.bf16.msra.mxu0 0
    %487 = vmatprep.subr.bf16.mxu0 0
    %488 = vmatpush1.bf16.msra.mxu0 0
    %489 = vmatprep.subr.bf16.mxu0 0
    %490 = vmatpush1.bf16.msra.mxu0 0
    %491 = vmatprep.subr.bf16.mxu0 0
    %492 = vmatpush1.bf16.msra.mxu0 0
    %493 = vmatprep.subr.bf16.mxu0 0
    %494 = vmatpush1.bf16.msra.mxu0 0
    %495 = vmatprep.mubr.bf16.mxu0 0
    %496 = vmatmul.mubr.bf16.gmra.mrb[0].mxu0 %v461
    %v497 = vpop.f32.mrb[0].mxu0
    %v498 = vadd.f32 0.0, %v497
    %v499 = vpop.f32.mrb[0].mxu0
    %v500 = vadd.f32 0.0, %v499
    %v501 = vpop.f32.mrb[0].mxu0
    %v502 = vpop.f32.mrb[0].mxu0
    %503 = vdwg.mxu0
    %v504 = vsel %vm155, %v498, %v500
    %v505 = vadd.f32 %v455, %v504
    %v506 = vmul.f32 %v505, %v161
    %v507 = vtanh.pop %v506
    %v508 = vmul.f32 %v507, 0.5
    %v509 = vadd.f32 %v508, 0.5
    %v510 = vsel %vm160, %v507, %v509
    %v511 = vmul.f32 %v510, %v437
    %513 = vrot.lane.b32.xlu0 %v510, 64
    %v514 = vpop.permute.xlu0 %513
    %v516 = vmul.f32 %v510, %v514
    %518 = vrot.lane.b32.xlu0 %v516, 32
    %v519 = vpop.permute.xlu0 %518
    %v521 = vadd.f32 %v511, %v519
    %v522 = vtanh.pop %v521
    %524 = vrot.lane.b32.xlu0 %v522, 64
    %v525 = vpop.permute.xlu0 %524
    %v527 = vmul.f32 %v510, %v525
    %529 = vrot.lane.b32.xlu0 %v527, 32
    %v530 = vpop.permute.xlu0 %529
    %532 = vst.msk [vmem:[#allocation3 + $0x4] sm:$0x3] %vm359, %v530
    %533 = vst.msk [vmem:[#allocation4 + $0x8] sm:$0xc] %vm361, %v530
    %v534 = vld [vmem:[#allocation2] sm:$0xc0]
    %v535 = vld [vmem:[#allocation2 + $0x18] sm:$0x3]
    %v537 = vrot.slane %v534, 6
    %v540 = vrot.slane %v535, 6
    %v542 = vsel %vm265, %v537, %v540
    %v543 = vpack.c.bf16 %v527, %v527
    %545 = vrot.lane.b32.xlu0 %v543, 32
    %v546 = vpop.permute.xlu0 %545
    %v548 = vsel %vm205, %v546, 0
    %550 = vmatprep.subr.bf16.mxu0 %v280
    %551 = vmatpush1.bf16.msra.mxu0 %v279
    %552 = vmatprep.subr.bf16.mxu0 %v282
    %553 = vmatpush1.bf16.msra.mxu0 %v281
    %554 = vmatprep.subr.bf16.mxu0 0
    %555 = vmatpush1.bf16.msra.mxu0 0
    %556 = vmatprep.subr.bf16.mxu0 0
    %557 = vmatpush1.bf16.msra.mxu0 0
    %558 = vmatprep.subr.bf16.mxu0 0
    %559 = vmatpush1.bf16.msra.mxu0 0
    %560 = vmatprep.subr.bf16.mxu0 0
    %561 = vmatpush1.bf16.msra.mxu0 0
    %562 = vmatprep.subr.bf16.mxu0 0
    %563 = vmatpush1.bf16.msra.mxu0 0
    %564 = vmatprep.subr.bf16.mxu0 0
    %565 = vmatpush1.bf16.msra.mxu0 0
    %566 = vmatprep.subr.bf16.mxu0 0
    %567 = vmatpush1.bf16.msra.mxu0 0
    %568 = vmatprep.subr.bf16.mxu0 0
    %569 = vmatpush1.bf16.msra.mxu0 0
    %570 = vmatprep.subr.bf16.mxu0 0
    %571 = vmatpush1.bf16.msra.mxu0 0
    %572 = vmatprep.subr.bf16.mxu0 0
    %573 = vmatpush1.bf16.msra.mxu0 0
    %574 = vmatprep.subr.bf16.mxu0 0
    %575 = vmatpush1.bf16.msra.mxu0 0
    %576 = vmatprep.subr.bf16.mxu0 0
    %577 = vmatpush1.bf16.msra.mxu0 0
    %578 = vmatprep.subr.bf16.mxu0 0
    %579 = vmatpush1.bf16.msra.mxu0 0
    %580 = vmatprep.subr.bf16.mxu0 0
    %581 = vmatpush1.bf16.msra.mxu0 0
    %582 = vmatprep.mubr.bf16.mxu0 0
    %583 = vmatmul.mubr.bf16.gmra.mrb[0].mxu0 %v548
    %v584 = vpop.f32.mrb[0].mxu0
    %v585 = vadd.f32 0.0, %v584
    %v586 = vpop.f32.mrb[0].mxu0
    %v587 = vadd.f32 0.0, %v586
    %v588 = vpop.f32.mrb[0].mxu0
    %v589 = vpop.f32.mrb[0].mxu0
    %590 = vdwg.mxu0
    %v591 = vsel %vm155, %v585, %v587
    %v592 = vadd.f32 %v542, %v591
    %v593 = vmul.f32 %v592, %v161
    %v594 = vtanh.pop %v593
    %v595 = vmul.f32 %v594, 0.5
    %v596 = vadd.f32 %v595, 0.5
    %v597 = vsel %vm160, %v594, %v596
    %v598 = vmul.f32 %v597, %v521
    %600 = vrot.lane.b32.xlu0 %v597, 64
    %v601 = vpop.permute.xlu0 %600
    %v603 = vmul.f32 %v597, %v601
    %605 = vrot.lane.b32.xlu0 %v603, 32
    %v606 = vpop.permute.xlu0 %605
    %v608 = vadd.f32 %v598, %v606
    %v609 = vtanh.pop %v608
    %611 = vrot.lane.b32.xlu0 %v609, 64
    %v612 = vpop.permute.xlu0 %611
    %v614 = vmul.f32 %v597, %v612
    %616 = vrot.lane.b32.xlu0 %v614, 32
    %v617 = vpop.permute.xlu0 %616
    %619 = vst.msk [vmem:[#allocation3 + $0x6] sm:$0x3] %vm359, %v617
    %620 = vst.msk [vmem:[#allocation4 + $0x6] sm:$0xc] %vm361, %v617
    %v621 = vld [vmem:[#allocation2 + $0x10] sm:$0x3]
    %v622 = vld [vmem:[#allocation2 + $0x8] sm:$0xc0]
    %v624 = vrot.slane %v622, 4
    %v626 = vsel %vm265, %v621, %v624
    %v627 = vpack.c.bf16 %v614, %v614
    %629 = vrot.lane.b32.xlu0 %v627, 32
    %v630 = vpop.permute.xlu0 %629
    %v632 = vsel %vm205, %v630, 0
    %634 = vmatprep.subr.bf16.mxu0 %v280
    %635 = vmatpush1.bf16.msra.mxu0 %v279
    %636 = vmatprep.subr.bf16.mxu0 %v282
    %637 = vmatpush1.bf16.msra.mxu0 %v281
    %638 = vmatprep.subr.bf16.mxu0 0
    %639 = vmatpush1.bf16.msra.mxu0 0
    %640 = vmatprep.subr.bf16.mxu0 0
    %641 = vmatpush1.bf16.msra.mxu0 0
    %642 = vmatprep.subr.bf16.mxu0 0
    %643 = vmatpush1.bf16.msra.mxu0 0
    %644 = vmatprep.subr.bf16.mxu0 0
    %645 = vmatpush1.bf16.msra.mxu0 0
    %646 = vmatprep.subr.bf16.mxu0 0
    %647 = vmatpush1.bf16.msra.mxu0 0
    %648 = vmatprep.subr.bf16.mxu0 0
    %649 = vmatpush1.bf16.msra.mxu0 0
    %650 = vmatprep.subr.bf16.mxu0 0
    %651 = vmatpush1.bf16.msra.mxu0 0
    %652 = vmatprep.subr.bf16.mxu0 0
    %653 = vmatpush1.bf16.msra.mxu0 0
    %654 = vmatprep.subr.bf16.mxu0 0
    %655 = vmatpush1.bf16.msra.mxu0 0
    %656 = vmatprep.subr.bf16.mxu0 0
    %657 = vmatpush1.bf16.msra.mxu0 0
    %658 = vmatprep.subr.bf16.mxu0 0
    %659 = vmatpush1.bf16.msra.mxu0 0
    %660 = vmatprep.subr.bf16.mxu0 0
    %661 = vmatpush1.bf16.msra.mxu0 0
    %662 = vmatprep.subr.bf16.mxu0 0
    %663 = vmatpush1.bf16.msra.mxu0 0
    %664 = vmatprep.subr.bf16.mxu0 0
    %665 = vmatpush1.bf16.msra.mxu0 0
    %666 = vmatprep.mubr.bf16.mxu0 0
    %667 = vmatmul.mubr.bf16.gmra.mrb[0].mxu0 %v632
    %v668 = vpop.f32.mrb[0].mxu0
    %v669 = vadd.f32 0.0, %v668
    %v670 = vpop.f32.mrb[0].mxu0
    %v671 = vadd.f32 0.0, %v670
    %v672 = vpop.f32.mrb[0].mxu0
    %v673 = vpop.f32.mrb[0].mxu0
    %674 = vdwg.mxu0
    %v675 = vsel %vm155, %v669, %v671
    %v676 = vadd.f32 %v626, %v675
    %v677 = vmul.f32 %v676, %v161
    %v678 = vtanh.pop %v677
    %v679 = vmul.f32 %v678, 0.5
    %v680 = vadd.f32 %v679, 0.5
    %v681 = vsel %vm160, %v678, %v680
    %v682 = vmul.f32 %v681, %v608
    %684 = vrot.lane.b32.xlu0 %v681, 64
    %v685 = vpop.permute.xlu0 %684
    %v687 = vmul.f32 %v681, %v685
    %689 = vrot.lane.b32.xlu0 %v687, 32
    %v690 = vpop.permute.xlu0 %689
    %v692 = vadd.f32 %v682, %v690
    %v693 = vtanh.pop %v692
    %695 = vrot.lane.b32.xlu0 %v693, 64
    %v696 = vpop.permute.xlu0 %695
    %v698 = vmul.f32 %v681, %v696
    %700 = vrot.lane.b32.xlu0 %v698, 32
    %v701 = vpop.permute.xlu0 %700
    %703 = vst.msk [vmem:[#allocation3 + $0x8] sm:$0x3] %vm359, %v701
    %704 = vst.msk [vmem:[#allocation4 + $0x4] sm:$0xc] %vm361, %v701
    %v705 = vld [vmem:[#allocation2 + $0x10] sm:$0xc]
    %v706 = vld [vmem:[#allocation2 + $0x8] sm:$0x30]
    %v708 = vrot.slane %v705, 2
    %v711 = vrot.slane %v706, 2
    %v713 = vsel %vm265, %v708, %v711
    %v714 = vpack.c.bf16 %v698, %v698
    %716 = vrot.lane.b32.xlu0 %v714, 32
    %v717 = vpop.permute.xlu0 %716
    %v719 = vsel %vm205, %v717, 0
    %721 = vmatprep.subr.bf16.mxu0 %v280
    %722 = vmatpush1.bf16.msra.mxu0 %v279
    %723 = vmatprep.subr.bf16.mxu0 %v282
    %724 = vmatpush1.bf16.msra.mxu0 %v281
    %725 = vmatprep.subr.bf16.mxu0 0
    %726 = vmatpush1.bf16.msra.mxu0 0
    %727 = vmatprep.subr.bf16.mxu0 0
    %728 = vmatpush1.bf16.msra.mxu0 0
    %729 = vmatprep.subr.bf16.mxu0 0
    %730 = vmatpush1.bf16.msra.mxu0 0
    %731 = vmatprep.subr.bf16.mxu0 0
    %732 = vmatpush1.bf16.msra.mxu0 0
    %733 = vmatprep.subr.bf16.mxu0 0
    %734 = vmatpush1.bf16.msra.mxu0 0
    %735 = vmatprep.subr.bf16.mxu0 0
    %736 = vmatpush1.bf16.msra.mxu0 0
    %737 = vmatprep.subr.bf16.mxu0 0
    %738 = vmatpush1.bf16.msra.mxu0 0
    %739 = vmatprep.subr.bf16.mxu0 0
    %740 = vmatpush1.bf16.msra.mxu0 0
    %741 = vmatprep.subr.bf16.mxu0 0
    %742 = vmatpush1.bf16.msra.mxu0 0
    %743 = vmatprep.subr.bf16.mxu0 0
    %744 = vmatpush1.bf16.msra.mxu0 0
    %745 = vmatprep.subr.bf16.mxu0 0
    %746 = vmatpush1.bf16.msra.mxu0 0
    %747 = vmatprep.subr.bf16.mxu0 0
    %748 = vmatpush1.bf16.msra.mxu0 0
    %749 = vmatprep.subr.bf16.mxu0 0
    %750 = vmatpush1.bf16.msra.mxu0 0
    %751 = vmatprep.subr.bf16.mxu0 0
    %752 = vmatpush1.bf16.msra.mxu0 0
    %753 = vmatprep.mubr.bf16.mxu0 0
    %754 = vmatmul.mubr.bf16.gmra.mrb[0].mxu0 %v719
    %v755 = vpop.f32.mrb[0].mxu0
    %v756 = vadd.f32 0.0, %v755
    %v757 = vpop.f32.mrb[0].mxu0
    %v758 = vadd.f32 0.0, %v757
    %v759 = vpop.f32.mrb[0].mxu0
    %v760 = vpop.f32.mrb[0].mxu0
    %761 = vdwg.mxu0
    %v762 = vsel %vm155, %v756, %v758
    %v763 = vadd.f32 %v713, %v762
    %v764 = vmul.f32 %v763, %v161
    %v765 = vtanh.pop %v764
    %v766 = vmul.f32 %v765, 0.5
    %v767 = vadd.f32 %v766, 0.5
    %v768 = vsel %vm160, %v765, %v767
    %v769 = vmul.f32 %v768, %v692
    %771 = vrot.lane.b32.xlu0 %v768, 64
    %v772 = vpop.permute.xlu0 %771
    %v774 = vmul.f32 %v768, %v772
    %776 = vrot.lane.b32.xlu0 %v774, 32
    %v777 = vpop.permute.xlu0 %776
    %v779 = vadd.f32 %v769, %v777
    %v780 = vtanh.pop %v779
    %782 = vrot.lane.b32.xlu0 %v780, 64
    %v783 = vpop.permute.xlu0 %782
    %v785 = vmul.f32 %v768, %v783
    %787 = vrot.lane.b32.xlu0 %v785, 32
    %v788 = vpop.permute.xlu0 %787
    %790 = vst.msk [vmem:[#allocation3 + $0xa] sm:$0x3] %vm359, %v788
    %791 = vst.msk [vmem:[#allocation4 + $0x2] sm:$0xc] %vm361, %v788
    %v792 = vld [vmem:[#allocation2 + $0x10] sm:$0x30]
    %v793 = vld [vmem:[#allocation2 + $0x8] sm:$0xc]
    %v795 = vrot.slane %v792, 4
    %v797 = vsel %vm265, %v795, %v793
    %v798 = vpack.c.bf16 %v785, %v785
    %800 = vrot.lane.b32.xlu0 %v798, 32
    %v801 = vpop.permute.xlu0 %800
    %v803 = vsel %vm205, %v801, 0
    %805 = vmatprep.subr.bf16.mxu0 %v280
    %806 = vmatpush1.bf16.msra.mxu0 %v279
    %807 = vmatprep.subr.bf16.mxu0 %v282
    %808 = vmatpush1.bf16.msra.mxu0 %v281
    %809 = vmatprep.subr.bf16.mxu0 0
    %810 = vmatpush1.bf16.msra.mxu0 0
    %811 = vmatprep.subr.bf16.mxu0 0
    %812 = vmatpush1.bf16.msra.mxu0 0
    %813 = vmatprep.subr.bf16.mxu0 0
    %814 = vmatpush1.bf16.msra.mxu0 0
    %815 = vmatprep.subr.bf16.mxu0 0
    %816 = vmatpush1.bf16.msra.mxu0 0
    %817 = vmatprep.subr.bf16.mxu0 0
    %818 = vmatpush1.bf16.msra.mxu0 0
    %819 = vmatprep.subr.bf16.mxu0 0
    %820 = vmatpush1.bf16.msra.mxu0 0
    %821 = vmatprep.subr.bf16.mxu0 0
    %822 = vmatpush1.bf16.msra.mxu0 0
    %823 = vmatprep.subr.bf16.mxu0 0
    %824 = vmatpush1.bf16.msra.mxu0 0
    %825 = vmatprep.subr.bf16.mxu0 0
    %826 = vmatpush1.bf16.msra.mxu0 0
    %827 = vmatprep.subr.bf16.mxu0 0
    %828 = vmatpush1.bf16.msra.mxu0 0
    %829 = vmatprep.subr.bf16.mxu0 0
    %830 = vmatpush1.bf16.msra.mxu0 0
    %831 = vmatprep.subr.bf16.mxu0 0
    %832 = vmatpush1.bf16.msra.mxu0 0
    %833 = vmatprep.subr.bf16.mxu0 0
    %834 = vmatpush1.bf16.msra.mxu0 0
    %835 = vmatprep.subr.bf16.mxu0 0
    %836 = vmatpush1.bf16.msra.mxu0 0
    %837 = vmatprep.mubr.bf16.mxu0 0
    %838 = vmatmul.mubr.bf16.gmra.mrb[0].mxu0 %v803
    %v839 = vpop.f32.mrb[0].mxu0
    %v840 = vadd.f32 0.0, %v839
    %v841 = vpop.f32.mrb[0].mxu0
    %v842 = vadd.f32 0.0, %v841
    %v843 = vpop.f32.mrb[0].mxu0
    %v844 = vpop.f32.mrb[0].mxu0
    %845 = vdwg.mxu0
    %v846 = vsel %vm155, %v840, %v842
    %v847 = vadd.f32 %v797, %v846
    %v848 = vmul.f32 %v847, %v161
    %v849 = vtanh.pop %v848
    %v850 = vmul.f32 %v849, 0.5
    %v851 = vadd.f32 %v850, 0.5
    %v852 = vsel %vm160, %v849, %v851
    %v853 = vmul.f32 %v852, %v779
    %855 = vrot.lane.b32.xlu0 %v852, 64
    %v856 = vpop.permute.xlu0 %855
    %v858 = vmul.f32 %v852, %v856
    %860 = vrot.lane.b32.xlu0 %v858, 32
    %v861 = vpop.permute.xlu0 %860
    %v863 = vadd.f32 %v853, %v861
    %v864 = vtanh.pop %v863
    %866 = vrot.lane.b32.xlu0 %v864, 64
    %v867 = vpop.permute.xlu0 %866
    %v869 = vmul.f32 %v852, %v867
    %871 = vrot.lane.b32.xlu0 %v869, 32
    %v872 = vpop.permute.xlu0 %871
    %874 = vst.msk [vmem:[#allocation3 + $0xc] sm:$0x3] %vm359, %v872
    %875 = vst.msk [vmem:[#allocation4] sm:$0xc] %vm361, %v872
    %v876 = vld [vmem:[#allocation2 + $0x10] sm:$0xc0]
    %v877 = vld [vmem:[#allocation2 + $0x8] sm:$0x3]
    %v879 = vrot.slane %v876, 6
    %v882 = vrot.slane %v877, 6
    %v884 = vsel %vm265, %v879, %v882
    %v885 = vpack.c.bf16 %v869, %v869
    %887 = vrot.lane.b32.xlu0 %v885, 32
    %v888 = vpop.permute.xlu0 %887
    %v890 = vsel %vm205, %v888, 0
    %892 = vmatprep.subr.bf16.mxu0 %v280
    %893 = vmatpush1.bf16.msra.mxu0 %v279
    %894 = vmatprep.subr.bf16.mxu0 %v282
    %895 = vmatpush1.bf16.msra.mxu0 %v281
    %896 = vmatprep.subr.bf16.mxu0 0
    %897 = vmatpush1.bf16.msra.mxu0 0
    %898 = vmatprep.subr.bf16.mxu0 0
    %899 = vmatpush1.bf16.msra.mxu0 0
    %900 = vmatprep.subr.bf16.mxu0 0
    %901 = vmatpush1.bf16.msra.mxu0 0
    %902 = vmatprep.subr.bf16.mxu0 0
    %903 = vmatpush1.bf16.msra.mxu0 0
    %904 = vmatprep.subr.bf16.mxu0 0
    %905 = vmatpush1.bf16.msra.mxu0 0
    %906 = vmatprep.subr.bf16.mxu0 0
    %907 = vmatpush1.bf16.msra.mxu0 0
    %908 = vmatprep.subr.bf16.mxu0 0
    %909 = vmatpush1.bf16.msra.mxu0 0
    %910 = vmatprep.subr.bf16.mxu0 0
    %911 = vmatpush1.bf16.msra.mxu0 0
    %912 = vmatprep.subr.bf16.mxu0 0
    %913 = vmatpush1.bf16.msra.mxu0 0
    %914 = vmatprep.subr.bf16.mxu0 0
    %915 = vmatpush1.bf16.msra.mxu0 0
    %916 = vmatprep.subr.bf16.mxu0 0
    %917 = vmatpush1.bf16.msra.mxu0 0
    %918 = vmatprep.subr.bf16.mxu0 0
    %919 = vmatpush1.bf16.msra.mxu0 0
    %920 = vmatprep.subr.bf16.mxu0 0
    %921 = vmatpush1.bf16.msra.mxu0 0
    %922 = vmatprep.subr.bf16.mxu0 0
    %923 = vmatpush1.bf16.msra.mxu0 0
    %924 = vmatprep.mubr.bf16.mxu0 0
    %925 = vmatmul.mubr.bf16.gmra.mrb[0].mxu0 %v890
    %v926 = vpop.f32.mrb[0].mxu0
    %v927 = vadd.f32 0.0, %v926
    %v928 = vpop.f32.mrb[0].mxu0
    %v929 = vadd.f32 0.0, %v928
    %v930 = vpop.f32.mrb[0].mxu0
    %v931 = vpop.f32.mrb[0].mxu0
    %932 = vdwg.mxu0
    %v933 = vsel %vm155, %v927, %v929
    %v934 = vadd.f32 %v884, %v933
    %v935 = vmul.f32 %v934, %v161
    %v936 = vtanh.pop %v935
    %v937 = vmul.f32 %v936, 0.5
    %v938 = vadd.f32 %v937, 0.5
    %v939 = vsel %vm160, %v936, %v938
    %v940 = vmul.f32 %v939, %v863
    %942 = vrot.lane.b32.xlu0 %v939, 64
    %v943 = vpop.permute.xlu0 %942
    %v945 = vmul.f32 %v939, %v943
    %947 = vrot.lane.b32.xlu0 %v945, 32
    %v948 = vpop.permute.xlu0 %947
    %v950 = vadd.f32 %v940, %v948
    %v951 = vtanh.pop %v950
    %953 = vrot.lane.b32.xlu0 %v951, 64
    %v954 = vpop.permute.xlu0 %953
    %v956 = vmul.f32 %v939, %v954
    %958 = vrot.lane.b32.xlu0 %v956, 32
    %v959 = vpop.permute.xlu0 %958
    %961 = vst.msk [vmem:[#allocation3 + $0xe] sm:$0x3] %vm359, %v959
    %962 = vst.msk [vmem:[#allocation4 - $0x2] sm:$0xc] %vm361, %v959
    %v963 = vld [vmem:[#allocation3] sm:$0xff]
    %v964 = vld [vmem:[#allocation3 + $0x8] sm:$0xff]
    %v965 = vpack.c.bf16 %v964, %v963
    %v966 = vld [vmem:[#allocation11] sm:$0xff]
    %v967 = vld [vmem:[#allocation11 + $0x8] sm:$0xff]
    %v968 = vld [vmem:[#allocation11 + $0x10] sm:$0xff]
    %v969 = vld [vmem:[#allocation11 + $0x18] sm:$0xff]
    %v970 = vld [vmem:[#allocation4] sm:$0xff]
    %v971 = vld [vmem:[#allocation4 + $0x8] sm:$0xff]
    %v972 = vpack.c.bf16 %v971, %v970
    %v973 = vld [vmem:[#allocation13] sm:$0xff]
    %v974 = vld [vmem:[#allocation13 + $0x8] sm:$0xff]
    %v975 = vld [vmem:[#allocation13 + $0x10] sm:$0xff]
    %v976 = vld [vmem:[#allocation13 + $0x18] sm:$0xff]
    %v981 = vunpack.c.l.b16 %v973
    %v982 = vunpack.c.h.b16 %v973
    %v983 = vunpack.c.l.b16 %v974
    %v984 = vunpack.c.h.b16 %v974
    %v985 = vunpack.c.l.b16 %v975
    %v986 = vunpack.c.h.b16 %v975
    %v987 = vunpack.c.l.b16 %v976
    %v988 = vunpack.c.h.b16 %v976
    %v989 = vpack.c.b16 %v983, %v981
    %v990 = vpack.c.b16 %v984, %v982
    %v991 = vpack.c.b16 %v987, %v985
    %v992 = vpack.c.b16 %v988, %v986
    %v998 = vsel %vm205, %v972, 0
    %1000 = vmatprep.subr.bf16.mxu0 %v990
    %1001 = vmatpush1.bf16.msra.mxu0 %v989
    %1002 = vmatprep.subr.bf16.mxu0 %v992
    %1003 = vmatpush1.bf16.msra.mxu0 %v991
    %1004 = vmatprep.subr.bf16.mxu0 0
    %1005 = vmatpush1.bf16.msra.mxu0 0
    %1006 = vmatprep.subr.bf16.mxu0 0
    %1007 = vmatpush1.bf16.msra.mxu0 0
    %1008 = vmatprep.subr.bf16.mxu0 0
    %1009 = vmatpush1.bf16.msra.mxu0 0
    %1010 = vmatprep.subr.bf16.mxu0 0
    %1011 = vmatpush1.bf16.msra.mxu0 0
    %1012 = vmatprep.subr.bf16.mxu0 0
    %1013 = vmatpush1.bf16.msra.mxu0 0
    %1014 = vmatprep.subr.bf16.mxu0 0
    %1015 = vmatpush1.bf16.msra.mxu0 0
    %1016 = vmatprep.subr.bf16.mxu0 0
    %1017 = vmatpush1.bf16.msra.mxu0 0
    %1018 = vmatprep.subr.bf16.mxu0 0
    %1019 = vmatpush1.bf16.msra.mxu0 0
    %1020 = vmatprep.subr.bf16.mxu0 0
    %1021 = vmatpush1.bf16.msra.mxu0 0
    %1022 = vmatprep.subr.bf16.mxu0 0
    %1023 = vmatpush1.bf16.msra.mxu0 0
    %1024 = vmatprep.subr.bf16.mxu0 0
    %1025 = vmatpush1.bf16.msra.mxu0 0
    %1026 = vmatprep.subr.bf16.mxu0 0
    %1027 = vmatpush1.bf16.msra.mxu0 0
    %1028 = vmatprep.subr.bf16.mxu0 0
    %1029 = vmatpush1.bf16.msra.mxu0 0
    %1030 = vmatprep.subr.bf16.mxu0 0
    %1031 = vmatpush1.bf16.msra.mxu0 0
    %1032 = vmatprep.mubr.bf16.mxu0 0
    %1033 = vmatmul.mubr.bf16.gmra.mrb[0].mxu0 %v998
    %v1034 = vpop.f32.mrb[0].mxu0
    %v1035 = vadd.f32 0.0, %v1034
    %v1036 = vpop.f32.mrb[0].mxu0
    %v1037 = vadd.f32 0.0, %v1036
    %v1038 = vpop.f32.mrb[0].mxu0
    %v1039 = vadd.f32 0.0, %v1038
    %v1040 = vpop.f32.mrb[0].mxu0
    %v1041 = vadd.f32 0.0, %v1040
    %1042 = vdwg.mxu0
    %v1047 = vunpack.c.l.b16 %v966
    %v1048 = vunpack.c.h.b16 %v966
    %v1049 = vunpack.c.l.b16 %v967
    %v1050 = vunpack.c.h.b16 %v967
    %v1051 = vunpack.c.l.b16 %v968
    %v1052 = vunpack.c.h.b16 %v968
    %v1053 = vunpack.c.l.b16 %v969
    %v1054 = vunpack.c.h.b16 %v969
    %v1055 = vpack.c.b16 %v1049, %v1047
    %v1056 = vpack.c.b16 %v1050, %v1048
    %v1057 = vpack.c.b16 %v1053, %v1051
    %v1058 = vpack.c.b16 %v1054, %v1052
    %v1064 = vsel %vm205, %v965, 0
    %1066 = vmatprep.subr.bf16.mxu0 %v1056
    %1067 = vmatpush1.bf16.msra.mxu0 %v1055
    %1068 = vmatprep.subr.bf16.mxu0 %v1058
    %1069 = vmatpush1.bf16.msra.mxu0 %v1057
    %1070 = vmatprep.subr.bf16.mxu0 0
    %1071 = vmatpush1.bf16.msra.mxu0 0
    %1072 = vmatprep.subr.bf16.mxu0 0
    %1073 = vmatpush1.bf16.msra.mxu0 0
    %1074 = vmatprep.subr.bf16.mxu0 0
    %1075 = vmatpush1.bf16.msra.mxu0 0
    %1076 = vmatprep.subr.bf16.mxu0 0
    %1077 = vmatpush1.bf16.msra.mxu0 0
    %1078 = vmatprep.subr.bf16.mxu0 0
    %1079 = vmatpush1.bf16.msra.mxu0 0
    %1080 = vmatprep.subr.bf16.mxu0 0
    %1081 = vmatpush1.bf16.msra.mxu0 0
    %1082 = vmatprep.subr.bf16.mxu0 0
    %1083 = vmatpush1.bf16.msra.mxu0 0
    %1084 = vmatprep.subr.bf16.mxu0 0
    %1085 = vmatpush1.bf16.msra.mxu0 0
    %1086 = vmatprep.subr.bf16.mxu0 0
    %1087 = vmatpush1.bf16.msra.mxu0 0
    %1088 = vmatprep.subr.bf16.mxu0 0
    %1089 = vmatpush1.bf16.msra.mxu0 0
    %1090 = vmatprep.subr.bf16.mxu0 0
    %1091 = vmatpush1.bf16.msra.mxu0 0
    %1092 = vmatprep.subr.bf16.mxu0 0
    %1093 = vmatpush1.bf16.msra.mxu0 0
    %1094 = vmatprep.subr.bf16.mxu0 0
    %1095 = vmatpush1.bf16.msra.mxu0 0
    %1096 = vmatprep.subr.bf16.mxu0 0
    %1097 = vmatpush1.bf16.msra.mxu0 0
    %1098 = vmatprep.mubr.bf16.mxu0 0
    %1099 = vmatmul.mubr.bf16.gmra.mrb[0].mxu0 %v1064
    %v1100 = vpop.f32.mrb[0].mxu0
    %v1101 = vadd.f32 %v1035, %v1100
    %v1102 = vpop.f32.mrb[0].mxu0
    %v1103 = vadd.f32 %v1037, %v1102
    %v1104 = vpop.f32.mrb[0].mxu0
    %v1105 = vadd.f32 %v1039, %v1104
    %v1106 = vpop.f32.mrb[0].mxu0
    %v1107 = vadd.f32 %v1041, %v1106
    %1108 = vdwg.mxu0
    %v1109 = vld [vmem:[#allocation16] sm:$0x3]
    %v1111 = vlaneseq
    %v1112 = vshrl.u32 %v1111, 7
    %v1113 = vsub.s32 0, %v1112
    %v1114 = vrot.slane %v1109, %v1113
    %v1115 = vlaneseq
    %v1116 = vshrl.u32 %v1115, 7
    %v1117 = vsub.s32 1, %v1116
    %v1118 = vrot.slane %v1109, %v1117
    %v1121 = vadd.f32 %v1101, %v1114
    %v1122 = vadd.f32 %v1103, %v1118
    %v1123 = vadd.f32 %v1105, %v1114
    %v1124 = vadd.f32 %v1107, %v1118
    %1125 = vst [vmem:[#allocation2] sm:$0xff] %v1121
    %1126 = vst [vmem:[#allocation2 + $0x8] sm:$0xff] %v1122
    %1127 = vst [vmem:[#allocation2 + $0x10] sm:$0xff] %v1123
    %1128 = vst [vmem:[#allocation2 + $0x18] sm:$0xff] %v1124
    %v1129 = vld [vmem:[#allocation14] sm:$0xff]
    %v1130 = vld [vmem:[#allocation14 + $0x8] sm:$0xff]
    %v1131 = vld [vmem:[#allocation14 + $0x10] sm:$0xff]
    %v1132 = vld [vmem:[#allocation14 + $0x18] sm:$0xff]
    %v1133 = vld [vmem:[#allocation2] sm:$0x3]
    %v1134 = vld [vmem:[#allocation2 + $0x18] sm:$0xc0]
    %v1136 = vrot.slane %v1134, 4
    %v1138 = vsel %vm265, %v1133, %v1136
    %v1143 = vunpack.c.l.b16 %v1129
    %v1144 = vunpack.c.h.b16 %v1129
    %v1145 = vunpack.c.l.b16 %v1130
    %v1146 = vunpack.c.h.b16 %v1130
    %v1147 = vunpack.c.l.b16 %v1131
    %v1148 = vunpack.c.h.b16 %v1131
    %v1149 = vunpack.c.l.b16 %v1132
    %v1150 = vunpack.c.h.b16 %v1132
    %v1151 = vpack.c.b16 %v1145, %v1143
    %v1152 = vpack.c.b16 %v1146, %v1144
    %v1153 = vpack.c.b16 %v1149, %v1147
    %v1154 = vpack.c.b16 %v1150, %v1148
    %1159 = vmatprep.subr.bf16.mxu0 %v1152
    %1160 = vmatpush1.bf16.msra.mxu0 %v1151
    %1161 = vmatprep.subr.bf16.mxu0 %v1154
    %1162 = vmatpush1.bf16.msra.mxu0 %v1153
    %1163 = vmatprep.subr.bf16.mxu0 0
    %1164 = vmatpush1.bf16.msra.mxu0 0
    %1165 = vmatprep.subr.bf16.mxu0 0
    %1166 = vmatpush1.bf16.msra.mxu0 0
    %1167 = vmatprep.subr.bf16.mxu0 0
    %1168 = vmatpush1.bf16.msra.mxu0 0
    %1169 = vmatprep.subr.bf16.mxu0 0
    %1170 = vmatpush1.bf16.msra.mxu0 0
    %1171 = vmatprep.subr.bf16.mxu0 0
    %1172 = vmatpush1.bf16.msra.mxu0 0
    %1173 = vmatprep.subr.bf16.mxu0 0
    %1174 = vmatpush1.bf16.msra.mxu0 0
    %1175 = vmatprep.subr.bf16.mxu0 0
    %1176 = vmatpush1.bf16.msra.mxu0 0
    %1177 = vmatprep.subr.bf16.mxu0 0
    %1178 = vmatpush1.bf16.msra.mxu0 0
    %1179 = vmatprep.subr.bf16.mxu0 0
    %1180 = vmatpush1.bf16.msra.mxu0 0
    %1181 = vmatprep.subr.bf16.mxu0 0
    %1182 = vmatpush1.bf16.msra.mxu0 0
    %1183 = vmatprep.subr.bf16.mxu0 0
    %1184 = vmatpush1.bf16.msra.mxu0 0
    %1185 = vmatprep.subr.bf16.mxu0 0
    %1186 = vmatpush1.bf16.msra.mxu0 0
    %1187 = vmatprep.subr.bf16.mxu0 0
    %1188 = vmatpush1.bf16.msra.mxu0 0
    %1189 = vmatprep.subr.bf16.mxu0 0
    %1190 = vmatpush1.bf16.msra.mxu0 0
    %1191 = vmatprep.mubr.bf16.mxu0 0
    %1192 = vmatmul.mubr.bf16.gmra.mrb[0].mxu0 %v288
    %v1193 = vpop.f32.mrb[0].mxu0
    %v1194 = vadd.f32 0.0, %v1193
    %v1195 = vpop.f32.mrb[0].mxu0
    %v1196 = vadd.f32 0.0, %v1195
    %v1197 = vpop.f32.mrb[0].mxu0
    %v1198 = vpop.f32.mrb[0].mxu0
    %1199 = vdwg.mxu0
    %v1200 = vsel %vm155, %v1194, %v1196
    %v1201 = vadd.f32 %v1138, %v1200
    %v1202 = vmul.f32 %v1201, %v161
    %v1203 = vtanh.pop %v1202
    %v1204 = vmul.f32 %v1203, 0.5
    %v1205 = vadd.f32 %v1204, 0.5
    %v1206 = vsel %vm160, %v1203, %v1205
    %v1207 = vmul.f32 %v1206, 0.0
    %1209 = vrot.lane.b32.xlu0 %v1206, 64
    %v1210 = vpop.permute.xlu0 %1209
    %v1212 = vmul.f32 %v1206, %v1210
    %1214 = vrot.lane.b32.xlu0 %v1212, 32
    %v1215 = vpop.permute.xlu0 %1214
    %v1217 = vadd.f32 %v1207, %v1215
    %v1218 = vtanh.pop %v1217
    %1220 = vrot.lane.b32.xlu0 %v1218, 64
    %v1221 = vpop.permute.xlu0 %1220
    %v1223 = vmul.f32 %v1206, %v1221
    %1225 = vrot.lane.b32.xlu0 %v1223, 32
    %v1226 = vpop.permute.xlu0 %1225
    %1228 = vst.msk [vmem:[#allocation3] sm:$0x3] %vm359, %v1226
    %1229 = vst.msk [vmem:[#allocation4 + $0xc] sm:$0xc] %vm361, %v1226
    %v1230 = vld [vmem:[#allocation2] sm:$0xc]
    %v1231 = vld [vmem:[#allocation2 + $0x18] sm:$0x30]
    %v1233 = vrot.slane %v1230, 2
    %v1236 = vrot.slane %v1231, 2
    %v1238 = vsel %vm265, %v1233, %v1236
    %v1239 = vpack.c.bf16 %v1223, %v1223
    %1241 = vrot.lane.b32.xlu0 %v1239, 32
    %v1242 = vpop.permute.xlu0 %1241
    %v1244 = vsel %vm205, %v1242, 0
    %1246 = vmatprep.subr.bf16.mxu0 %v1152
    %1247 = vmatpush1.bf16.msra.mxu0 %v1151
    %1248 = vmatprep.subr.bf16.mxu0 %v1154
    %1249 = vmatpush1.bf16.msra.mxu0 %v1153
    %1250 = vmatprep.subr.bf16.mxu0 0
    %1251 = vmatpush1.bf16.msra.mxu0 0
    %1252 = vmatprep.subr.bf16.mxu0 0
    %1253 = vmatpush1.bf16.msra.mxu0 0
    %1254 = vmatprep.subr.bf16.mxu0 0
    %1255 = vmatpush1.bf16.msra.mxu0 0
    %1256 = vmatprep.subr.bf16.mxu0 0
    %1257 = vmatpush1.bf16.msra.mxu0 0
    %1258 = vmatprep.subr.bf16.mxu0 0
    %1259 = vmatpush1.bf16.msra.mxu0 0
    %1260 = vmatprep.subr.bf16.mxu0 0
    %1261 = vmatpush1.bf16.msra.mxu0 0
    %1262 = vmatprep.subr.bf16.mxu0 0
    %1263 = vmatpush1.bf16.msra.mxu0 0
    %1264 = vmatprep.subr.bf16.mxu0 0
    %1265 = vmatpush1.bf16.msra.mxu0 0
    %1266 = vmatprep.subr.bf16.mxu0 0
    %1267 = vmatpush1.bf16.msra.mxu0 0
    %1268 = vmatprep.subr.bf16.mxu0 0
    %1269 = vmatpush1.bf16.msra.mxu0 0
    %1270 = vmatprep.subr.bf16.mxu0 0
    %1271 = vmatpush1.bf16.msra.mxu0 0
    %1272 = vmatprep.subr.bf16.mxu0 0
    %1273 = vmatpush1.bf16.msra.mxu0 0
    %1274 = vmatprep.subr.bf16.mxu0 0
    %1275 = vmatpush1.bf16.msra.mxu0 0
    %1276 = vmatprep.subr.bf16.mxu0 0
    %1277 = vmatpush1.bf16.msra.mxu0 0
    %1278 = vmatprep.mubr.bf16.mxu0 0
    %1279 = vmatmul.mubr.bf16.gmra.mrb[0].mxu0 %v1244
    %v1280 = vpop.f32.mrb[0].mxu0
    %v1281 = vadd.f32 0.0, %v1280
    %v1282 = vpop.f32.mrb[0].mxu0
    %v1283 = vadd.f32 0.0, %v1282
    %v1284 = vpop.f32.mrb[0].mxu0
    %v1285 = vpop.f32.mrb[0].mxu0
    %1286 = vdwg.mxu0
    %v1287 = vsel %vm155, %v1281, %v1283
    %v1288 = vadd.f32 %v1238, %v1287
    %v1289 = vmul.f32 %v1288, %v161
    %v1290 = vtanh.pop %v1289
    %v1291 = vmul.f32 %v1290, 0.5
    %v1292 = vadd.f32 %v1291, 0.5
    %v1293 = vsel %vm160, %v1290, %v1292
    %v1294 = vmul.f32 %v1293, %v1217
    %1296 = vrot.lane.b32.xlu0 %v1293, 64
    %v1297 = vpop.permute.xlu0 %1296
    %v1299 = vmul.f32 %v1293, %v1297
    %1301 = vrot.lane.b32.xlu0 %v1299, 32
    %v1302 = vpop.permute.xlu0 %1301
    %v1304 = vadd.f32 %v1294, %v1302
    %v1305 = vtanh.pop %v1304
    %1307 = vrot.lane.b32.xlu0 %v1305, 64
    %v1308 = vpop.permute.xlu0 %1307
    %v1310 = vmul.f32 %v1293, %v1308
    %1312 = vrot.lane.b32.xlu0 %v1310, 32
    %v1313 = vpop.permute.xlu0 %1312
    %1315 = vst.msk [vmem:[#allocation3 + $0x2] sm:$0x3] %vm359, %v1313
    %1316 = vst.msk [vmem:[#allocation4 + $0xa] sm:$0xc] %vm361, %v1313
    %v1317 = vld [vmem:[#allocation2] sm:$0x30]
    %v1318 = vld [vmem:[#allocation2 + $0x18] sm:$0xc]
    %v1320 = vrot.slane %v1317, 4
    %v1322 = vsel %vm265, %v1320, %v1318
    %v1323 = vpack.c.bf16 %v1310, %v1310
    %1325 = vrot.lane.b32.xlu0 %v1323, 32
    %v1326 = vpop.permute.xlu0 %1325
    %v1328 = vsel %vm205, %v1326, 0
    %1330 = vmatprep.subr.bf16.mxu0 %v1152
    %1331 = vmatpush1.bf16.msra.mxu0 %v1151
    %1332 = vmatprep.subr.bf16.mxu0 %v1154
    %1333 = vmatpush1.bf16.msra.mxu0 %v1153
    %1334 = vmatprep.subr.bf16.mxu0 0
    %1335 = vmatpush1.bf16.msra.mxu0 0
    %1336 = vmatprep.subr.bf16.mxu0 0
    %1337 = vmatpush1.bf16.msra.mxu0 0
    %1338 = vmatprep.subr.bf16.mxu0 0
    %1339 = vmatpush1.bf16.msra.mxu0 0
    %1340 = vmatprep.subr.bf16.mxu0 0
    %1341 = vmatpush1.bf16.msra.mxu0 0
    %1342 = vmatprep.subr.bf16.mxu0 0
    %1343 = vmatpush1.bf16.msra.mxu0 0
    %1344 = vmatprep.subr.bf16.mxu0 0
    %1345 = vmatpush1.bf16.msra.mxu0 0
    %1346 = vmatprep.subr.bf16.mxu0 0
    %1347 = vmatpush1.bf16.msra.mxu0 0
    %1348 = vmatprep.subr.bf16.mxu0 0
    %1349 = vmatpush1.bf16.msra.mxu0 0
    %1350 = vmatprep.subr.bf16.mxu0 0
    %1351 = vmatpush1.bf16.msra.mxu0 0
    %1352 = vmatprep.subr.bf16.mxu0 0
    %1353 = vmatpush1.bf16.msra.mxu0 0
    %1354 = vmatprep.subr.bf16.mxu0 0
    %1355 = vmatpush1.bf16.msra.mxu0 0
    %1356 = vmatprep.subr.bf16.mxu0 0
    %1357 = vmatpush1.bf16.msra.mxu0 0
    %1358 = vmatprep.subr.bf16.mxu0 0
    %1359 = vmatpush1.bf16.msra.mxu0 0
    %1360 = vmatprep.subr.bf16.mxu0 0
    %1361 = vmatpush1.bf16.msra.mxu0 0
    %1362 = vmatprep.mubr.bf16.mxu0 0
    %1363 = vmatmul.mubr.bf16.gmra.mrb[0].mxu0 %v1328
    %v1364 = vpop.f32.mrb[0].mxu0
    %v1365 = vadd.f32 0.0, %v1364
    %v1366 = vpop.f32.mrb[0].mxu0
    %v1367 = vadd.f32 0.0, %v1366
    %v1368 = vpop.f32.mrb[0].mxu0
    %v1369 = vpop.f32.mrb[0].mxu0
    %1370 = vdwg.mxu0
    %v1371 = vsel %vm155, %v1365, %v1367
    %v1372 = vadd.f32 %v1322, %v1371
    %v1373 = vmul.f32 %v1372, %v161
    %v1374 = vtanh.pop %v1373
    %v1375 = vmul.f32 %v1374, 0.5
    %v1376 = vadd.f32 %v1375, 0.5
    %v1377 = vsel %vm160, %v1374, %v1376
    %v1378 = vmul.f32 %v1377, %v1304
    %1380 = vrot.lane.b32.xlu0 %v1377, 64
    %v1381 = vpop.permute.xlu0 %1380
    %v1383 = vmul.f32 %v1377, %v1381
    %1385 = vrot.lane.b32.xlu0 %v1383, 32
    %v1386 = vpop.permute.xlu0 %1385
    %v1388 = vadd.f32 %v1378, %v1386
    %v1389 = vtanh.pop %v1388
    %1391 = vrot.lane.b32.xlu0 %v1389, 64
    %v1392 = vpop.permute.xlu0 %1391
    %v1394 = vmul.f32 %v1377, %v1392
    %1396 = vrot.lane.b32.xlu0 %v1394, 32
    %v1397 = vpop.permute.xlu0 %1396
    %1399 = vst.msk [vmem:[#allocation3 + $0x4] sm:$0x3] %vm359, %v1397
    %1400 = vst.msk [vmem:[#allocation4 + $0x8] sm:$0xc] %vm361, %v1397
    %v1401 = vld [vmem:[#allocation2] sm:$0xc0]
    %v1402 = vld [vmem:[#allocation2 + $0x18] sm:$0x3]
    %v1404 = vrot.slane %v1401, 6
    %v1407 = vrot.slane %v1402, 6
    %v1409 = vsel %vm265, %v1404, %v1407
    %v1410 = vpack.c.bf16 %v1394, %v1394
    %1412 = vrot.lane.b32.xlu0 %v1410, 32
    %v1413 = vpop.permute.xlu0 %1412
    %v1415 = vsel %vm205, %v1413, 0
    %1417 = vmatprep.subr.bf16.mxu0 %v1152
    %1418 = vmatpush1.bf16.msra.mxu0 %v1151
    %1419 = vmatprep.subr.bf16.mxu0 %v1154
    %1420 = vmatpush1.bf16.msra.mxu0 %v1153
    %1421 = vmatprep.subr.bf16.mxu0 0
    %1422 = vmatpush1.bf16.msra.mxu0 0
    %1423 = vmatprep.subr.bf16.mxu0 0
    %1424 = vmatpush1.bf16.msra.mxu0 0
    %1425 = vmatprep.subr.bf16.mxu0 0
    %1426 = vmatpush1.bf16.msra.mxu0 0
    %1427 = vmatprep.subr.bf16.mxu0 0
    %1428 = vmatpush1.bf16.msra.mxu0 0
    %1429 = vmatprep.subr.bf16.mxu0 0
    %1430 = vmatpush1.bf16.msra.mxu0 0
    %1431 = vmatprep.subr.bf16.mxu0 0
    %1432 = vmatpush1.bf16.msra.mxu0 0
    %1433 = vmatprep.subr.bf16.mxu0 0
    %1434 = vmatpush1.bf16.msra.mxu0 0
    %1435 = vmatprep.subr.bf16.mxu0 0
    %1436 = vmatpush1.bf16.msra.mxu0 0
    %1437 = vmatprep.subr.bf16.mxu0 0
    %1438 = vmatpush1.bf16.msra.mxu0 0
    %1439 = vmatprep.subr.bf16.mxu0 0
    %1440 = vmatpush1.bf16.msra.mxu0 0
    %1441 = vmatprep.subr.bf16.mxu0 0
    %1442 = vmatpush1.bf16.msra.mxu0 0
    %1443 = vmatprep.subr.bf16.mxu0 0
    %1444 = vmatpush1.bf16.msra.mxu0 0
    %1445 = vmatprep.subr.bf16.mxu0 0
    %1446 = vmatpush1.bf16.msra.mxu0 0
    %1447 = vmatprep.subr.bf16.mxu0 0
    %1448 = vmatpush1.bf16.msra.mxu0 0
    %1449 = vmatprep.mubr.bf16.mxu0 0
    %1450 = vmatmul.mubr.bf16.gmra.mrb[0].mxu0 %v1415
    %v1451 = vpop.f32.mrb[0].mxu0
    %v1452 = vadd.f32 0.0, %v1451
    %v1453 = vpop.f32.mrb[0].mxu0
    %v1454 = vadd.f32 0.0, %v1453
    %v1455 = vpop.f32.mrb[0].mxu0
    %v1456 = vpop.f32.mrb[0].mxu0
    %1457 = vdwg.mxu0
    %v1458 = vsel %vm155, %v1452, %v1454
    %v1459 = vadd.f32 %v1409, %v1458
    %v1460 = vmul.f32 %v1459, %v161
    %v1461 = vtanh.pop %v1460
    %v1462 = vmul.f32 %v1461, 0.5
    %v1463 = vadd.f32 %v1462, 0.5
    %v1464 = vsel %vm160, %v1461, %v1463
    %v1465 = vmul.f32 %v1464, %v1388
    %1467 = vrot.lane.b32.xlu0 %v1464, 64
    %v1468 = vpop.permute.xlu0 %1467
    %v1470 = vmul.f32 %v1464, %v1468
    %1472 = vrot.lane.b32.xlu0 %v1470, 32
    %v1473 = vpop.permute.xlu0 %1472
    %v1475 = vadd.f32 %v1465, %v1473
    %v1476 = vtanh.pop %v1475
    %1478 = vrot.lane.b32.xlu0 %v1476, 64
    %v1479 = vpop.permute.xlu0 %1478
    %v1481 = vmul.f32 %v1464, %v1479
    %1483 = vrot.lane.b32.xlu0 %v1481, 32
    %v1484 = vpop.permute.xlu0 %1483
    %1486 = vst.msk [vmem:[#allocation3 + $0x6] sm:$0x3] %vm359, %v1484
    %1487 = vst.msk [vmem:[#allocation4 + $0x6] sm:$0xc] %vm361, %v1484
    %v1488 = vld [vmem:[#allocation2 + $0x10] sm:$0x3]
    %v1489 = vld [vmem:[#allocation2 + $0x8] sm:$0xc0]
    %v1491 = vrot.slane %v1489, 4
    %v1493 = vsel %vm265, %v1488, %v1491
    %v1494 = vpack.c.bf16 %v1481, %v1481
    %1496 = vrot.lane.b32.xlu0 %v1494, 32
    %v1497 = vpop.permute.xlu0 %1496
    %v1499 = vsel %vm205, %v1497, 0
    %1501 = vmatprep.subr.bf16.mxu0 %v1152
    %1502 = vmatpush1.bf16.msra.mxu0 %v1151
    %1503 = vmatprep.subr.bf16.mxu0 %v1154
    %1504 = vmatpush1.bf16.msra.mxu0 %v1153
    %1505 = vmatprep.subr.bf16.mxu0 0
    %1506 = vmatpush1.bf16.msra.mxu0 0
    %1507 = vmatprep.subr.bf16.mxu0 0
    %1508 = vmatpush1.bf16.msra.mxu0 0
    %1509 = vmatprep.subr.bf16.mxu0 0
    %1510 = vmatpush1.bf16.msra.mxu0 0
    %1511 = vmatprep.subr.bf16.mxu0 0
    %1512 = vmatpush1.bf16.msra.mxu0 0
    %1513 = vmatprep.subr.bf16.mxu0 0
    %1514 = vmatpush1.bf16.msra.mxu0 0
    %1515 = vmatprep.subr.bf16.mxu0 0
    %1516 = vmatpush1.bf16.msra.mxu0 0
    %1517 = vmatprep.subr.bf16.mxu0 0
    %1518 = vmatpush1.bf16.msra.mxu0 0
    %1519 = vmatprep.subr.bf16.mxu0 0
    %1520 = vmatpush1.bf16.msra.mxu0 0
    %1521 = vmatprep.subr.bf16.mxu0 0
    %1522 = vmatpush1.bf16.msra.mxu0 0
    %1523 = vmatprep.subr.bf16.mxu0 0
    %1524 = vmatpush1.bf16.msra.mxu0 0
    %1525 = vmatprep.subr.bf16.mxu0 0
    %1526 = vmatpush1.bf16.msra.mxu0 0
    %1527 = vmatprep.subr.bf16.mxu0 0
    %1528 = vmatpush1.bf16.msra.mxu0 0
    %1529 = vmatprep.subr.bf16.mxu0 0
    %1530 = vmatpush1.bf16.msra.mxu0 0
    %1531 = vmatprep.subr.bf16.mxu0 0
    %1532 = vmatpush1.bf16.msra.mxu0 0
    %1533 = vmatprep.mubr.bf16.mxu0 0
    %1534 = vmatmul.mubr.bf16.gmra.mrb[0].mxu0 %v1499
    %v1535 = vpop.f32.mrb[0].mxu0
    %v1536 = vadd.f32 0.0, %v1535
    %v1537 = vpop.f32.mrb[0].mxu0
    %v1538 = vadd.f32 0.0, %v1537
    %v1539 = vpop.f32.mrb[0].mxu0
    %v1540 = vpop.f32.mrb[0].mxu0
    %1541 = vdwg.mxu0
    %v1542 = vsel %vm155, %v1536, %v1538
    %v1543 = vadd.f32 %v1493, %v1542
    %v1544 = vmul.f32 %v1543, %v161
    %v1545 = vtanh.pop %v1544
    %v1546 = vmul.f32 %v1545, 0.5
    %v1547 = vadd.f32 %v1546, 0.5
    %v1548 = vsel %vm160, %v1545, %v1547
    %v1549 = vmul.f32 %v1548, %v1475
    %1551 = vrot.lane.b32.xlu0 %v1548, 64
    %v1552 = vpop.permute.xlu0 %1551
    %v1554 = vmul.f32 %v1548, %v1552
    %1556 = vrot.lane.b32.xlu0 %v1554, 32
    %v1557 = vpop.permute.xlu0 %1556
    %v1559 = vadd.f32 %v1549, %v1557
    %v1560 = vtanh.pop %v1559
    %1562 = vrot.lane.b32.xlu0 %v1560, 64
    %v1563 = vpop.permute.xlu0 %1562
    %v1565 = vmul.f32 %v1548, %v1563
    %1567 = vrot.lane.b32.xlu0 %v1565, 32
    %v1568 = vpop.permute.xlu0 %1567
    %1570 = vst.msk [vmem:[#allocation3 + $0x8] sm:$0x3] %vm359, %v1568
    %1571 = vst.msk [vmem:[#allocation4 + $0x4] sm:$0xc] %vm361, %v1568
    %v1572 = vld [vmem:[#allocation2 + $0x10] sm:$0xc]
    %v1573 = vld [vmem:[#allocation2 + $0x8] sm:$0x30]
    %v1575 = vrot.slane %v1572, 2
    %v1578 = vrot.slane %v1573, 2
    %v1580 = vsel %vm265, %v1575, %v1578
    %v1581 = vpack.c.bf16 %v1565, %v1565
    %1583 = vrot.lane.b32.xlu0 %v1581, 32
    %v1584 = vpop.permute.xlu0 %1583
    %v1586 = vsel %vm205, %v1584, 0
    %1588 = vmatprep.subr.bf16.mxu0 %v1152
    %1589 = vmatpush1.bf16.msra.mxu0 %v1151
    %1590 = vmatprep.subr.bf16.mxu0 %v1154
    %1591 = vmatpush1.bf16.msra.mxu0 %v1153
    %1592 = vmatprep.subr.bf16.mxu0 0
    %1593 = vmatpush1.bf16.msra.mxu0 0
    %1594 = vmatprep.subr.bf16.mxu0 0
    %1595 = vmatpush1.bf16.msra.mxu0 0
    %1596 = vmatprep.subr.bf16.mxu0 0
    %1597 = vmatpush1.bf16.msra.mxu0 0
    %1598 = vmatprep.subr.bf16.mxu0 0
    %1599 = vmatpush1.bf16.msra.mxu0 0
    %1600 = vmatprep.subr.bf16.mxu0 0
    %1601 = vmatpush1.bf16.msra.mxu0 0
    %1602 = vmatprep.subr.bf16.mxu0 0
    %1603 = vmatpush1.bf16.msra.mxu0 0
    %1604 = vmatprep.subr.bf16.mxu0 0
    %1605 = vmatpush1.bf16.msra.mxu0 0
    %1606 = vmatprep.subr.bf16.mxu0 0
    %1607 = vmatpush1.bf16.msra.mxu0 0
    %1608 = vmatprep.subr.bf16.mxu0 0
    %1609 = vmatpush1.bf16.msra.mxu0 0
    %1610 = vmatprep.subr.bf16.mxu0 0
    %1611 = vmatpush1.bf16.msra.mxu0 0
    %1612 = vmatprep.subr.bf16.mxu0 0
    %1613 = vmatpush1.bf16.msra.mxu0 0
    %1614 = vmatprep.subr.bf16.mxu0 0
    %1615 = vmatpush1.bf16.msra.mxu0 0
    %1616 = vmatprep.subr.bf16.mxu0 0
    %1617 = vmatpush1.bf16.msra.mxu0 0
    %1618 = vmatprep.subr.bf16.mxu0 0
    %1619 = vmatpush1.bf16.msra.mxu0 0
    %1620 = vmatprep.mubr.bf16.mxu0 0
    %1621 = vmatmul.mubr.bf16.gmra.mrb[0].mxu0 %v1586
    %v1622 = vpop.f32.mrb[0].mxu0
    %v1623 = vadd.f32 0.0, %v1622
    %v1624 = vpop.f32.mrb[0].mxu0
    %v1625 = vadd.f32 0.0, %v1624
    %v1626 = vpop.f32.mrb[0].mxu0
    %v1627 = vpop.f32.mrb[0].mxu0
    %1628 = vdwg.mxu0
    %v1629 = vsel %vm155, %v1623, %v1625
    %v1630 = vadd.f32 %v1580, %v1629
    %v1631 = vmul.f32 %v1630, %v161
    %v1632 = vtanh.pop %v1631
    %v1633 = vmul.f32 %v1632, 0.5
    %v1634 = vadd.f32 %v1633, 0.5
    %v1635 = vsel %vm160, %v1632, %v1634
    %v1636 = vmul.f32 %v1635, %v1559
    %1638 = vrot.lane.b32.xlu0 %v1635, 64
    %v1639 = vpop.permute.xlu0 %1638
    %v1641 = vmul.f32 %v1635, %v1639
    %1643 = vrot.lane.b32.xlu0 %v1641, 32
    %v1644 = vpop.permute.xlu0 %1643
    %v1646 = vadd.f32 %v1636, %v1644
    %v1647 = vtanh.pop %v1646
    %1649 = vrot.lane.b32.xlu0 %v1647, 64
    %v1650 = vpop.permute.xlu0 %1649
    %v1652 = vmul.f32 %v1635, %v1650
    %1654 = vrot.lane.b32.xlu0 %v1652, 32
    %v1655 = vpop.permute.xlu0 %1654
    %1657 = vst.msk [vmem:[#allocation3 + $0xa] sm:$0x3] %vm359, %v1655
    %1658 = vst.msk [vmem:[#allocation4 + $0x2] sm:$0xc] %vm361, %v1655
    %v1659 = vld [vmem:[#allocation2 + $0x10] sm:$0x30]
    %v1660 = vld [vmem:[#allocation2 + $0x8] sm:$0xc]
    %v1662 = vrot.slane %v1659, 4
    %v1664 = vsel %vm265, %v1662, %v1660
    %v1665 = vpack.c.bf16 %v1652, %v1652
    %1667 = vrot.lane.b32.xlu0 %v1665, 32
    %v1668 = vpop.permute.xlu0 %1667
    %v1670 = vsel %vm205, %v1668, 0
    %1672 = vmatprep.subr.bf16.mxu0 %v1152
    %1673 = vmatpush1.bf16.msra.mxu0 %v1151
    %1674 = vmatprep.subr.bf16.mxu0 %v1154
    %1675 = vmatpush1.bf16.msra.mxu0 %v1153
    %1676 = vmatprep.subr.bf16.mxu0 0
    %1677 = vmatpush1.bf16.msra.mxu0 0
    %1678 = vmatprep.subr.bf16.mxu0 0
    %1679 = vmatpush1.bf16.msra.mxu0 0
    %1680 = vmatprep.subr.bf16.mxu0 0
    %1681 = vmatpush1.bf16.msra.mxu0 0
    %1682 = vmatprep.subr.bf16.mxu0 0
    %1683 = vmatpush1.bf16.msra.mxu0 0
    %1684 = vmatprep.subr.bf16.mxu0 0
    %1685 = vmatpush1.bf16.msra.mxu0 0
    %1686 = vmatprep.subr.bf16.mxu0 0
    %1687 = vmatpush1.bf16.msra.mxu0 0
    %1688 = vmatprep.subr.bf16.mxu0 0
    %1689 = vmatpush1.bf16.msra.mxu0 0
    %1690 = vmatprep.subr.bf16.mxu0 0
    %1691 = vmatpush1.bf16.msra.mxu0 0
    %1692 = vmatprep.subr.bf16.mxu0 0
    %1693 = vmatpush1.bf16.msra.mxu0 0
    %1694 = vmatprep.subr.bf16.mxu0 0
    %1695 = vmatpush1.bf16.msra.mxu0 0
    %1696 = vmatprep.subr.bf16.mxu0 0
    %1697 = vmatpush1.bf16.msra.mxu0 0
    %1698 = vmatprep.subr.bf16.mxu0 0
    %1699 = vmatpush1.bf16.msra.mxu0 0
    %1700 = vmatprep.subr.bf16.mxu0 0
    %1701 = vmatpush1.bf16.msra.mxu0 0
    %1702 = vmatprep.subr.bf16.mxu0 0
    %1703 = vmatpush1.bf16.msra.mxu0 0
    %1704 = vmatprep.mubr.bf16.mxu0 0
    %1705 = vmatmul.mubr.bf16.gmra.mrb[0].mxu0 %v1670
    %v1706 = vpop.f32.mrb[0].mxu0
    %v1707 = vadd.f32 0.0, %v1706
    %v1708 = vpop.f32.mrb[0].mxu0
    %v1709 = vadd.f32 0.0, %v1708
    %v1710 = vpop.f32.mrb[0].mxu0
    %v1711 = vpop.f32.mrb[0].mxu0
    %1712 = vdwg.mxu0
    %v1713 = vsel %vm155, %v1707, %v1709
    %v1714 = vadd.f32 %v1664, %v1713
    %v1715 = vmul.f32 %v1714, %v161
    %v1716 = vtanh.pop %v1715
    %v1717 = vmul.f32 %v1716, 0.5
    %v1718 = vadd.f32 %v1717, 0.5
    %v1719 = vsel %vm160, %v1716, %v1718
    %v1720 = vmul.f32 %v1719, %v1646
    %1722 = vrot.lane.b32.xlu0 %v1719, 64
    %v1723 = vpop.permute.xlu0 %1722
    %v1725 = vmul.f32 %v1719, %v1723
    %1727 = vrot.lane.b32.xlu0 %v1725, 32
    %v1728 = vpop.permute.xlu0 %1727
    %v1730 = vadd.f32 %v1720, %v1728
    %v1731 = vtanh.pop %v1730
    %1733 = vrot.lane.b32.xlu0 %v1731, 64
    %v1734 = vpop.permute.xlu0 %1733
    %v1736 = vmul.f32 %v1719, %v1734
    %1738 = vrot.lane.b32.xlu0 %v1736, 32
    %v1739 = vpop.permute.xlu0 %1738
    %1741 = vst.msk [vmem:[#allocation3 + $0xc] sm:$0x3] %vm359, %v1739
    %1742 = vst.msk [vmem:[#allocation4] sm:$0xc] %vm361, %v1739
    %v1743 = vld [vmem:[#allocation2 + $0x10] sm:$0xc0]
    %v1744 = vld [vmem:[#allocation2 + $0x8] sm:$0x3]
    %v1746 = vrot.slane %v1743, 6
    %v1749 = vrot.slane %v1744, 6
    %v1751 = vsel %vm265, %v1746, %v1749
    %v1752 = vpack.c.bf16 %v1736, %v1736
    %1754 = vrot.lane.b32.xlu0 %v1752, 32
    %v1755 = vpop.permute.xlu0 %1754
    %v1757 = vsel %vm205, %v1755, 0
    %1759 = vmatprep.subr.bf16.mxu0 %v1152
    %1760 = vmatpush1.bf16.msra.mxu0 %v1151
    %1761 = vmatprep.subr.bf16.mxu0 %v1154
    %1762 = vmatpush1.bf16.msra.mxu0 %v1153
    %1763 = vmatprep.subr.bf16.mxu0 0
    %1764 = vmatpush1.bf16.msra.mxu0 0
    %1765 = vmatprep.subr.bf16.mxu0 0
    %1766 = vmatpush1.bf16.msra.mxu0 0
    %1767 = vmatprep.subr.bf16.mxu0 0
    %1768 = vmatpush1.bf16.msra.mxu0 0
    %1769 = vmatprep.subr.bf16.mxu0 0
    %1770 = vmatpush1.bf16.msra.mxu0 0
    %1771 = vmatprep.subr.bf16.mxu0 0
    %1772 = vmatpush1.bf16.msra.mxu0 0
    %1773 = vmatprep.subr.bf16.mxu0 0
    %1774 = vmatpush1.bf16.msra.mxu0 0
    %1775 = vmatprep.subr.bf16.mxu0 0
    %1776 = vmatpush1.bf16.msra.mxu0 0
    %1777 = vmatprep.subr.bf16.mxu0 0
    %1778 = vmatpush1.bf16.msra.mxu0 0
    %1779 = vmatprep.subr.bf16.mxu0 0
    %1780 = vmatpush1.bf16.msra.mxu0 0
    %1781 = vmatprep.subr.bf16.mxu0 0
    %1782 = vmatpush1.bf16.msra.mxu0 0
    %1783 = vmatprep.subr.bf16.mxu0 0
    %1784 = vmatpush1.bf16.msra.mxu0 0
    %1785 = vmatprep.subr.bf16.mxu0 0
    %1786 = vmatpush1.bf16.msra.mxu0 0
    %1787 = vmatprep.subr.bf16.mxu0 0
    %1788 = vmatpush1.bf16.msra.mxu0 0
    %1789 = vmatprep.subr.bf16.mxu0 0
    %1790 = vmatpush1.bf16.msra.mxu0 0
    %1791 = vmatprep.mubr.bf16.mxu0 0
    %1792 = vmatmul.mubr.bf16.gmra.mrb[0].mxu0 %v1757
    %v1793 = vpop.f32.mrb[0].mxu0
    %v1794 = vadd.f32 0.0, %v1793
    %v1795 = vpop.f32.mrb[0].mxu0
    %v1796 = vadd.f32 0.0, %v1795
    %v1797 = vpop.f32.mrb[0].mxu0
    %v1798 = vpop.f32.mrb[0].mxu0
    %1799 = vdwg.mxu0
    %v1800 = vsel %vm155, %v1794, %v1796
    %v1801 = vadd.f32 %v1751, %v1800
    %v1802 = vmul.f32 %v1801, %v161
    %v1803 = vtanh.pop %v1802
    %v1804 = vmul.f32 %v1803, 0.5
    %v1805 = vadd.f32 %v1804, 0.5
    %v1806 = vsel %vm160, %v1803, %v1805
    %v1807 = vmul.f32 %v1806, %v1730
    %1809 = vrot.lane.b32.xlu0 %v1806, 64
    %v1810 = vpop.permute.xlu0 %1809
    %v1812 = vmul.f32 %v1806, %v1810
    %1814 = vrot.lane.b32.xlu0 %v1812, 32
    %v1815 = vpop.permute.xlu0 %1814
    %v1817 = vadd.f32 %v1807, %v1815
    %v1818 = vtanh.pop %v1817
    %1820 = vrot.lane.b32.xlu0 %v1818, 64
    %v1821 = vpop.permute.xlu0 %1820
    %v1823 = vmul.f32 %v1806, %v1821
    %1825 = vrot.lane.b32.xlu0 %v1823, 32
    %v1826 = vpop.permute.xlu0 %1825
    %1828 = vst.msk [vmem:[#allocation3 + $0xe] sm:$0x3] %vm359, %v1826
    %1829 = vst.msk [vmem:[#allocation4 - $0x2] sm:$0xc] %vm361, %v1826
    %v1830 = vld [vmem:[#allocation3] sm:$0xff]
    %v1831 = vld [vmem:[#allocation3 + $0x8] sm:$0xff]
    %v1832 = vpack.c.bf16 %v1831, %v1830
    %v1833 = vld [vmem:[%s8] sm:$0xf]
    %v1834 = vld [vmem:[%s8 + $0x4] sm:$0xf]
    %v1835 = vld [vmem:[%s8 + $0x8] sm:$0xf]
    %v1836 = vld [vmem:[%s8 + $0xc] sm:$0xf]
    %v1837 = vld [vmem:[#allocation4] sm:$0xff]
    %v1838 = vld [vmem:[#allocation4 + $0x8] sm:$0xff]
    %v1839 = vpack.c.bf16 %v1838, %v1837
    %v1840 = vld [vmem:[%s9] sm:$0xf]
    %v1841 = vld [vmem:[%s9 + $0x4] sm:$0xf]
    %v1842 = vld [vmem:[%s9 + $0x8] sm:$0xf]
    %v1843 = vld [vmem:[%s9 + $0xc] sm:$0xf]
    %v1848 = vunpack.c.l.b16 %v1840
    %v1849 = vunpack.c.l.b16 %v1841
    %v1850 = vunpack.c.l.b16 %v1842
    %v1851 = vunpack.c.l.b16 %v1843
    %v1852 = vpack.c.b16 %v1849, %v1848
    %v1853 = vpack.c.b16 %v1851, %v1850
    %v1857 = vsel %vm205, %v1839, 0
    %1859 = vmatprep.subr.bf16.mxu0 0
    %1860 = vmatpush1.bf16.msra.mxu0 %v1852
    %1861 = vmatprep.subr.bf16.mxu0 0
    %1862 = vmatpush1.bf16.msra.mxu0 %v1853
    %1863 = vmatprep.subr.bf16.mxu0 0
    %1864 = vmatpush1.bf16.msra.mxu0 0
    %1865 = vmatprep.subr.bf16.mxu0 0
    %1866 = vmatpush1.bf16.msra.mxu0 0
    %1867 = vmatprep.subr.bf16.mxu0 0
    %1868 = vmatpush1.bf16.msra.mxu0 0
    %1869 = vmatprep.subr.bf16.mxu0 0
    %1870 = vmatpush1.bf16.msra.mxu0 0
    %1871 = vmatprep.subr.bf16.mxu0 0
    %1872 = vmatpush1.bf16.msra.mxu0 0
    %1873 = vmatprep.subr.bf16.mxu0 0
    %1874 = vmatpush1.bf16.msra.mxu0 0
    %1875 = vmatprep.subr.bf16.mxu0 0
    %1876 = vmatpush1.bf16.msra.mxu0 0
    %1877 = vmatprep.subr.bf16.mxu0 0
    %1878 = vmatpush1.bf16.msra.mxu0 0
    %1879 = vmatprep.subr.bf16.mxu0 0
    %1880 = vmatpush1.bf16.msra.mxu0 0
    %1881 = vmatprep.subr.bf16.mxu0 0
    %1882 = vmatpush1.bf16.msra.mxu0 0
    %1883 = vmatprep.subr.bf16.mxu0 0
    %1884 = vmatpush1.bf16.msra.mxu0 0
    %1885 = vmatprep.subr.bf16.mxu0 0
    %1886 = vmatpush1.bf16.msra.mxu0 0
    %1887 = vmatprep.subr.bf16.mxu0 0
    %1888 = vmatpush1.bf16.msra.mxu0 0
    %1889 = vmatprep.subr.bf16.mxu0 0
    %1890 = vmatpush1.bf16.msra.mxu0 0
    %1891 = vmatprep.mubr.bf16.mxu0 0
    %1892 = vmatmul.mubr.bf16.gmra.mrb[0].mxu0 %v1857
    %v1893 = vpop.f32.mrb[0].mxu0
    %v1894 = vadd.f32 0.0, %v1893
    %v1895 = vpop.f32.mrb[0].mxu0
    %v1896 = vpop.f32.mrb[0].mxu0
    %v1897 = vadd.f32 0.0, %v1896
    %v1898 = vpop.f32.mrb[0].mxu0
    %1899 = vdwg.mxu0
    %v1904 = vunpack.c.l.b16 %v1833
    %v1905 = vunpack.c.l.b16 %v1834
    %v1906 = vunpack.c.l.b16 %v1835
    %v1907 = vunpack.c.l.b16 %v1836
    %v1908 = vpack.c.b16 %v1905, %v1904
    %v1909 = vpack.c.b16 %v1907, %v1906
    %v1913 = vsel %vm205, %v1832, 0
    %1915 = vmatprep.subr.bf16.mxu0 0
    %1916 = vmatpush1.bf16.msra.mxu0 %v1908
    %1917 = vmatprep.subr.bf16.mxu0 0
    %1918 = vmatpush1.bf16.msra.mxu0 %v1909
    %1919 = vmatprep.subr.bf16.mxu0 0
    %1920 = vmatpush1.bf16.msra.mxu0 0
    %1921 = vmatprep.subr.bf16.mxu0 0
    %1922 = vmatpush1.bf16.msra.mxu0 0
    %1923 = vmatprep.subr.bf16.mxu0 0
    %1924 = vmatpush1.bf16.msra.mxu0 0
    %1925 = vmatprep.subr.bf16.mxu0 0
    %1926 = vmatpush1.bf16.msra.mxu0 0
    %1927 = vmatprep.subr.bf16.mxu0 0
    %1928 = vmatpush1.bf16.msra.mxu0 0
    %1929 = vmatprep.subr.bf16.mxu0 0
    %1930 = vmatpush1.bf16.msra.mxu0 0
    %1931 = vmatprep.subr.bf16.mxu0 0
    %1932 = vmatpush1.bf16.msra.mxu0 0
    %1933 = vmatprep.subr.bf16.mxu0 0
    %1934 = vmatpush1.bf16.msra.mxu0 0
    %1935 = vmatprep.subr.bf16.mxu0 0
    %1936 = vmatpush1.bf16.msra.mxu0 0
    %1937 = vmatprep.subr.bf16.mxu0 0
    %1938 = vmatpush1.bf16.msra.mxu0 0
    %1939 = vmatprep.subr.bf16.mxu0 0
    %1940 = vmatpush1.bf16.msra.mxu0 0
    %1941 = vmatprep.subr.bf16.mxu0 0
    %1942 = vmatpush1.bf16.msra.mxu0 0
    %1943 = vmatprep.subr.bf16.mxu0 0
    %1944 = vmatpush1.bf16.msra.mxu0 0
    %1945 = vmatprep.subr.bf16.mxu0 0
    %1946 = vmatpush1.bf16.msra.mxu0 0
    %1947 = vmatprep.mubr.bf16.mxu0 0
    %1948 = vmatmul.mubr.bf16.gmra.mrb[0].mxu0 %v1913
    %v1949 = vpop.f32.mrb[0].mxu0
    %v1950 = vadd.f32 %v1894, %v1949
    %v1951 = vpop.f32.mrb[0].mxu0
    %v1952 = vpop.f32.mrb[0].mxu0
    %v1953 = vadd.f32 %v1897, %v1952
    %v1954 = vpop.f32.mrb[0].mxu0
    %1955 = vdwg.mxu0
    %v1956 = vld [vmem:[%s10] sm:$0x1]
    %v1958 = vlaneseq
    %v1959 = vshrl.u32 %v1958, 7
    %v1960 = vsub.s32 0, %v1959
    %v1961 = vrot.slane %v1956, %v1960
    %v1963 = vadd.f32 %v1950, %v1961
    %v1964 = vadd.f32 %v1953, %v1961
    %v1965 = vmax.f32 %v1963, 0.0
    %v1966 = vmax.f32 %v1964, 0.0
    %v1967 = vpack.c.bf16 %v1966, %v1965
    %v1968 = vld [vmem:[#allocation17] sm:$0xf]
    %v1969 = vld [vmem:[#allocation17 + $0x4] sm:$0xf]
    %v1970 = vld [vmem:[#allocation17 + $0x8] sm:$0xf]
    %v1971 = vld [vmem:[#allocation17 + $0xc] sm:$0xf]
    %v1972 = vld [vmem:[%s12] sm:$0x1]
    %v1974 = vlaneseq
    %v1975 = vshrl.u32 %v1974, 7
    %v1976 = vsub.s32 0, %v1975
    %v1977 = vrot.slane %v1972, %v1976
    %v1983 = vunpack.c.l.b16 %v1968
    %v1984 = vunpack.c.l.b16 %v1969
    %v1985 = vunpack.c.l.b16 %v1970
    %v1986 = vunpack.c.l.b16 %v1971
    %v1987 = vpack.c.b16 %v1984, %v1983
    %v1988 = vpack.c.b16 %v1986, %v1985
    %v1992 = vsel %vm205, %v1967, 0
    %1994 = vmatprep.subr.bf16.mxu0 0
    %1995 = vmatpush1.bf16.msra.mxu0 %v1987
    %1996 = vmatprep.subr.bf16.mxu0 0
    %1997 = vmatpush1.bf16.msra.mxu0 %v1988
    %1998 = vmatprep.subr.bf16.mxu0 0
    %1999 = vmatpush1.bf16.msra.mxu0 0
    %2000 = vmatprep.subr.bf16.mxu0 0
    %2001 = vmatpush1.bf16.msra.mxu0 0
    %2002 = vmatprep.subr.bf16.mxu0 0
    %2003 = vmatpush1.bf16.msra.mxu0 0
    %2004 = vmatprep.subr.bf16.mxu0 0
    %2005 = vmatpush1.bf16.msra.mxu0 0
    %2006 = vmatprep.subr.bf16.mxu0 0
    %2007 = vmatpush1.bf16.msra.mxu0 0
    %2008 = vmatprep.subr.bf16.mxu0 0
    %2009 = vmatpush1.bf16.msra.mxu0 0
    %2010 = vmatprep.subr.bf16.mxu0 0
    %2011 = vmatpush1.bf16.msra.mxu0 0
    %2012 = vmatprep.subr.bf16.mxu0 0
    %2013 = vmatpush1.bf16.msra.mxu0 0
    %2014 = vmatprep.subr.bf16.mxu0 0
    %2015 = vmatpush1.bf16.msra.mxu0 0
    %2016 = vmatprep.subr.bf16.mxu0 0
    %2017 = vmatpush1.bf16.msra.mxu0 0
    %2018 = vmatprep.subr.bf16.mxu0 0
    %2019 = vmatpush1.bf16.msra.mxu0 0
    %2020 = vmatprep.subr.bf16.mxu0 0
    %2021 = vmatpush1.bf16.msra.mxu0 0
    %2022 = vmatprep.subr.bf16.mxu0 0
    %2023 = vmatpush1.bf16.msra.mxu0 0
    %2024 = vmatprep.subr.bf16.mxu0 0
    %2025 = vmatpush1.bf16.msra.mxu0 0
    %2026 = vmatprep.mubr.bf16.mxu0 0
    %2027 = vmatmul.mubr.bf16.gmra.mrb[0].mxu0 %v1992
    %v2028 = vpop.f32.mrb[0].mxu0
    %v2029 = vadd.f32 %v1977, %v2028
    %v2030 = vpop.f32.mrb[0].mxu0
    %v2031 = vpop.f32.mrb[0].mxu0
    %v2032 = vadd.f32 %v1977, %v2031
    %v2033 = vpop.f32.mrb[0].mxu0
    %2034 = vdwg.mxu0
    %2035 = vst.msk [vmem:[#allocation19] sm:$0xff] %vm205, %v2029
    %2036 = vst.msk [vmem:[#allocation19 + $0x8] sm:$0xff] %vm205, %v2032
    // Predicated region
    $region86: #{tpu_custom_call.1} parent=1 // pred_check
      _
    $region87: #{tpu_custom_call.1} parent=1 // pred_check_branch
      %2038 = sbr.rel (0) target = $region89
    $region88: #{tpu_custom_call.1} parent=1 // pred_region
      %s2040 = ssub.s32 256, 256
      %2041 = vsyncadd [#allocation7], %s2040
      %s2042 = sshll.u32 [#allocation19], 4
      %s2043 = int_to_ptr.vmem [resolvable:$true] %s2042
      %2048 = dma.vmem_to_hbm [thread:$0]  %s2043, 256, %s13, [#allocation7], 128, 128, 8
    $region89: #{tpu_custom_call.1} parent=1 // pred_fallthru
      _
    // Predicated region
    $region90: #{tpu_custom_call.1} parent=1 // pred_check
      _
    $region91: #{tpu_custom_call.1} parent=1 // pred_check_branch
      %2050 = sbr.rel (0) target = $region93
    $region92: #{tpu_custom_call.1} parent=1 // pred_region
      %2051 = dma.done [#allocation7], 256
    $region93: #{tpu_custom_call.1} parent=1 // pred_fallthru
      _
    %2052 = vsyncpa [#allocation6], 1
    %2053 = vsyncpa [#allocation9], 1
    %2054 = vsyncpa [#allocation12], 1
    %2055 = vsyncpa [#allocation15], 1
    %2056 = vsyncpa [#allocation18], 1
    %2057 = vsyncpa [#allocation7], 1

</llo_original>
